<compile_context>
chip_gen: v6e
topology: v6e:2x2x1
jax: 0.10.0
libtpu: 0.0.40
codegen_flags: <defaults>
</compile_context>

<pallas_src>
import jax
import jax.numpy as jnp
from jax import lax
from jax.experimental import pallas as pl
from jax.experimental.pallas import tpu as pltpu

# ---- small, self-consistent problem sizes ----------------------------------
VOCAB = 32
FRAME_DIM = 64
HIDDEN = 32
V_STEP = 8
C_STEP = 6
BOS_IDX = 0
BATCH = 2
B_PAD = 8                       # pad batch to the f32 sublane tile

T1 = V_STEP + C_STEP - 1        # lstm1 sequence length (video + zero padding)
N_DEC = C_STEP - 1              # number of greedy decode steps


def seq2seq_kernel(video_ref, w1f_ref, b1f_ref,
                   whh1_ref, bl1_ref,
                   w2enc_ref, w2v_ref, w2dec_ref, bl2_ref,
                   w2_ref, b2_ref,
                   caption_ref, capprob_ref):
    B, H, V = B_PAD, HIDDEN, VOCAB
    f32, bf16 = jnp.float32, jnp.bfloat16

    # weights (bf16 where they feed the MXU)
    whh1 = whh1_ref[...]          # (H, 4H)      lstm1 W_hh
    w2enc = w2enc_ref[...]        # (2H, 4H)     [wih2_video ; whh2] stacked
    w2v = w2v_ref[...]            # (H, 4H)      wih2_video alone (phase 2)
    w2dec = w2dec_ref[...]        # (V+H, 4H)    [emb @ wih2_emb ; whh2] stacked
    w2 = w2_ref[...]              # (H, V)       linear2

    # hoisted f32 bias broadcasts (done once, not per unrolled step)
    bl1 = jnp.broadcast_to(bl1_ref[...], (B, 4 * H))
    bl2 = jnp.broadcast_to(bl2_ref[...], (B, 4 * H))
    b2 = jnp.broadcast_to(b2_ref[...], (B, V))

    # ---- fused (dropout-id + linear1 + lstm1 W_ih) projection of all frames
    # in one batched matmul, off the recurrent critical path.
    vid_bf = video_ref[...].astype(bf16)                          # (V_STEP*B, F)
    gates_vid = (jnp.dot(vid_bf, w1f_ref[...],
                         preferred_element_type=f32)
                 + b1f_ref[...])                                  # (V_STEP*B, 4H)

    def lstm_combine(gates, c):
        """Gate nonlinearities + state update from the full (B, 4H=128)
        pre-activation.  Two full-vreg EUP pushes (sigmoid + tanh) instead
        of four sliced ones; the slices afterwards are cheap lane selects."""
        sg = jax.nn.sigmoid(gates)              # whole (B, 128) vreg
        th = jnp.tanh(gates)                    # whole (B, 128) vreg
        i = sg[:, 0 * H:1 * H]
        f = sg[:, 1 * H:2 * H]
        g = th[:, 2 * H:3 * H]
        o = sg[:, 3 * H:4 * H]
        c_new = f * c + i * g
        h_new = o * jnp.tanh(c_new)
        return h_new, c_new

    zeros_bh = jnp.zeros((B, H), f32)
    h1, c1 = zeros_bh, zeros_bh
    h2, c2 = zeros_bh, zeros_bh

    # ---- phase 1: lstm1 over video frames, interleaved with lstm2 encoder.
    # lstm2 encoder input = concat(zeros_embedding, h1_t); its x-projection
    # and h-projection are fused into one 64-deep matmul per step.
    for t in range(V_STEP):
        pre1 = gates_vid[t * B:(t + 1) * B, :]                    # aligned tile
        g1 = pre1 + jnp.dot(h1.astype(bf16), whh1,
                            preferred_element_type=f32)
        h1, c1 = lstm_combine(g1, c1)

        lhs2 = jnp.concatenate([h1, h2], axis=1).astype(bf16)     # (B, 2H)
        g2 = jnp.dot(lhs2, w2enc, preferred_element_type=f32) + bl2
        h2, c2 = lstm_combine(g2, c2)

    # ---- phase 2: lstm1 over zero padding (input projection == bias only).
    # Also precompute the decode-time video-feature projections (bl2 folded
    # in) off the decode critical path.
    vout_proj = []
    for t in range(V_STEP, T1):
        g1 = bl1 + jnp.dot(h1.astype(bf16), whh1,
                           preferred_element_type=f32)
        h1, c1 = lstm_combine(g1, c1)
        vout_proj.append(jnp.dot(h1.astype(bf16), w2v,
                                 preferred_element_type=f32) + bl2)

    # ---- phase 3: greedy decode.  Embedding lookup + x-projection +
    # h-projection fused into a single [one_hot | h2] @ [emb@wih2 ; whh2]
    # matmul per step.
    vocab_iota = lax.broadcasted_iota(jnp.int32, (B, V), 1)
    tok = jnp.full((B, 1), BOS_IDX, jnp.int32)
    logits_all = []
    toks_all = []
    for step in range(N_DEC):
        one_hot = (vocab_iota == tok).astype(f32)                  # (B, V)
        lhs2 = jnp.concatenate([one_hot, h2], axis=1).astype(bf16)  # (B, V+H)
        g2 = (jnp.dot(lhs2, w2dec, preferred_element_type=f32)
              + vout_proj[step])
        h2, c2 = lstm_combine(g2, c2)

        # linear2 (dropout = identity in eval)
        logits = jnp.dot(h2.astype(bf16), w2,
                         preferred_element_type=f32) + b2          # (B, V)
        # first-occurrence argmax over the vocab axis
        max_val = jnp.max(logits, axis=1, keepdims=True)
        cand = jnp.where(logits == max_val, vocab_iota, V)
        tok = jnp.min(cand, axis=1, keepdims=True).astype(jnp.int32)
        logits_all.append(logits)
        toks_all.append(tok[:, 0])

    # single one-shot stores
    capprob_ref[...] = jnp.stack(logits_all, axis=0)               # (N_DEC, B, V)
    caption_ref[...] = jnp.stack(toks_all, axis=0)                 # (N_DEC, B)


def seq2seq_forward(video, params):
    """video: (B, V_STEP, FRAME_DIM) f32, batch-first like PyTorch."""
    (w1, b1, wih1, whh1, bl1, wih2, whh2, bl2, emb, w2, b2) = params
    H = HIDDEN
    bf16 = jnp.bfloat16

    # ---- one-time wrapper-side weight fusion (zero kernel cost) ------------
    w1f = (w1 @ wih1).astype(bf16)                 # linear1 folded into lstm1 W_ih
    b1f = b1 @ wih1 + bl1                          # fused f32 bias (1, 4H)
    # lstm2 input order is [embedding | video]; stack x-projection with
    # h-projection so each lstm2 step is ONE 64-deep matmul.
    wih2_emb = wih2[:H, :]
    wih2_vid = wih2[H:2 * H, :]
    w2enc = jnp.concatenate([wih2_vid, whh2], axis=0).astype(bf16)       # (2H, 4H)
    w2v = wih2_vid.astype(bf16)                                          # (H, 4H)
    w2dec = jnp.concatenate([emb @ wih2_emb, whh2], axis=0).astype(bf16)  # (V+H, 4H)
    whh1_bf = whh1.astype(bf16)
    w2_bf = w2.astype(bf16)

    # time-major video, batch padded to the 8-sublane f32 tile so every
    # per-step gate slab in the kernel is a whole (8, 128) tile.
    B = video.shape[0]
    vid_tm = jnp.transpose(video, (1, 0, 2))                       # (V_STEP, B, F)
    vid_tm = jnp.pad(vid_tm, ((0, 0), (0, B_PAD - B), (0, 0)))
    vid_tm = vid_tm.reshape(V_STEP * B_PAD, FRAME_DIM)

    vmem = lambda: pl.BlockSpec(memory_space=pltpu.MemorySpace.VMEM)
    out_shapes = (
        jax.ShapeDtypeStruct((N_DEC, B_PAD), jnp.int32),           # caption (time-major)
        jax.ShapeDtypeStruct((N_DEC, B_PAD, VOCAB), jnp.float32),  # logits  (time-major)
    )
    caption_tb, cap_prob_tb = pl.pallas_call(
        seq2seq_kernel,
        out_shape=out_shapes,
        in_specs=[vmem() for _ in range(11)],
        out_specs=(vmem(), vmem()),
    )(vid_tm, w1f, b1f, whh1_bf, bl1, w2enc, w2v, w2dec, bl2, w2_bf, b2)

    # drop padded batch rows, back to PyTorch's (B, c_step-1[, vocab]) layout
    caption = jnp.transpose(caption_tb[:, :B], (1, 0))             # (B, N_DEC) int32
    cap_prob = jnp.transpose(cap_prob_tb[:, :B, :], (1, 0, 2))     # (B, N_DEC, VOCAB)
    return caption, cap_prob


def init_params(key):
    """Deterministic synthetic parameters with the module's shapes
    (all weight matrices pre-transposed to (in_features, out_features))."""
    ks = jax.random.split(key, 12)

    def u(k, shape, bound):
        return jax.random.uniform(k, shape, jnp.float32, -bound, bound)

    H = HIDDEN
    b_lin1 = 1.0 / float(FRAME_DIM) ** 0.5
    b_h = 1.0 / float(H) ** 0.5

    w1 = u(ks[0], (FRAME_DIM, H), b_lin1)            # linear1.weight^T
    bb1 = u(ks[1], (1, H), b_lin1)                   # linear1.bias
    wih1 = u(ks[2], (H, 4 * H), b_h)                 # lstm1.weight_ih^T
    whh1 = u(ks[3], (H, 4 * H), b_h)                 # lstm1.weight_hh^T
    bl1 = u(ks[4], (1, 4 * H), b_h) + u(ks[5], (1, 4 * H), b_h)   # b_ih + b_hh
    wih2 = u(ks[6], (2 * H, 4 * H), b_h)             # lstm2.weight_ih^T
    whh2 = u(ks[7], (H, 4 * H), b_h)                 # lstm2.weight_hh^T
    bl2 = u(ks[8], (1, 4 * H), b_h) + u(ks[9], (1, 4 * H), b_h)
    emb = jax.random.normal(ks[10], (VOCAB, H), jnp.float32)      # embedding.weight
    w2 = u(ks[11], (H, VOCAB), b_h)                  # linear2.weight^T
    bb2 = jnp.zeros((1, VOCAB), jnp.float32)         # linear2.bias
    return (w1, bb1, wih1, whh1, bl1, wih2, whh2, bl2, emb, w2, bb2)


if __name__ == "__main__":
    key = jax.random.PRNGKey(0)
    kv, kp = jax.random.split(key)
    video = jax.random.normal(kv, (BATCH, V_STEP, FRAME_DIM), jnp.float32)
    params = init_params(kp)

    caption, cap_prob = jax.jit(seq2seq_forward)(video, params)
    jax.block_until_ready((caption, cap_prob))

    assert caption.shape == (BATCH, C_STEP - 1)
    assert caption.dtype == jnp.int32
    assert cap_prob.shape == (BATCH, C_STEP - 1, VOCAB)
    print("KERNEL_OK")
</pallas_src>

<mosaic_0001>
module attributes {stable_mosaic.version = 11 : i64} {
  func.func @seq2seq_kernel(%arg0: memref<64x64xf32, #tpu.memory_space<vmem>>, %arg1: memref<64x128xbf16, #tpu.memory_space<vmem>>, %arg2: memref<1x128xf32, #tpu.memory_space<vmem>>, %arg3: memref<32x128xbf16, #tpu.memory_space<vmem>>, %arg4: memref<1x128xf32, #tpu.memory_space<vmem>>, %arg5: memref<64x128xbf16, #tpu.memory_space<vmem>>, %arg6: memref<32x128xbf16, #tpu.memory_space<vmem>>, %arg7: memref<64x128xbf16, #tpu.memory_space<vmem>>, %arg8: memref<1x128xf32, #tpu.memory_space<vmem>>, %arg9: memref<32x32xbf16, #tpu.memory_space<vmem>>, %arg10: memref<1x32xf32, #tpu.memory_space<vmem>>, %arg11: memref<5x8xi32, #tpu.memory_space<vmem>>, %arg12: memref<5x8x32xf32, #tpu.memory_space<vmem>>) attributes {dimension_semantics = [], scalar_prefetch = 0 : i64, scratch_operands = 0 : i64, tpu.core_type = #tpu.core_type<tc>} {
    %c0 = arith.constant 0 : index
    %c0_0 = arith.constant 0 : index
    %0 = vector.load %arg3[%c0, %c0_0] : memref<32x128xbf16, #tpu.memory_space<vmem>>, vector<32x128xbf16>
    %c0_1 = arith.constant 0 : index
    %c0_2 = arith.constant 0 : index
    %1 = vector.load %arg5[%c0_1, %c0_2] : memref<64x128xbf16, #tpu.memory_space<vmem>>, vector<64x128xbf16>
    %c0_3 = arith.constant 0 : index
    %c0_4 = arith.constant 0 : index
    %2 = vector.load %arg6[%c0_3, %c0_4] : memref<32x128xbf16, #tpu.memory_space<vmem>>, vector<32x128xbf16>
    %c0_5 = arith.constant 0 : index
    %c0_6 = arith.constant 0 : index
    %3 = vector.load %arg7[%c0_5, %c0_6] : memref<64x128xbf16, #tpu.memory_space<vmem>>, vector<64x128xbf16>
    %c0_7 = arith.constant 0 : index
    %c0_8 = arith.constant 0 : index
    %4 = vector.load %arg9[%c0_7, %c0_8] : memref<32x32xbf16, #tpu.memory_space<vmem>>, vector<32x32xbf16>
    %c0_9 = arith.constant 0 : index
    %c0_10 = arith.constant 0 : index
    %5 = vector.load %arg4[%c0_9, %c0_10] : memref<1x128xf32, #tpu.memory_space<vmem>>, vector<1x128xf32>
    %6 = vector.shape_cast %5 : vector<1x128xf32> to vector<1x128xf32>
    %7 = vector.broadcast %6 : vector<1x128xf32> to vector<8x128xf32>
    %c0_11 = arith.constant 0 : index
    %c0_12 = arith.constant 0 : index
    %8 = vector.load %arg8[%c0_11, %c0_12] : memref<1x128xf32, #tpu.memory_space<vmem>>, vector<1x128xf32>
    %9 = vector.shape_cast %8 : vector<1x128xf32> to vector<1x128xf32>
    %10 = vector.broadcast %9 : vector<1x128xf32> to vector<8x128xf32>
    %c0_13 = arith.constant 0 : index
    %c0_14 = arith.constant 0 : index
    %11 = vector.load %arg10[%c0_13, %c0_14] : memref<1x32xf32, #tpu.memory_space<vmem>>, vector<1x32xf32>
    %12 = vector.shape_cast %11 : vector<1x32xf32> to vector<1x32xf32>
    %13 = vector.broadcast %12 : vector<1x32xf32> to vector<8x32xf32>
    %c0_15 = arith.constant 0 : index
    %c0_16 = arith.constant 0 : index
    %14 = vector.load %arg0[%c0_15, %c0_16] : memref<64x64xf32, #tpu.memory_space<vmem>>, vector<64x64xf32>
    %15 = arith.truncf %14 : vector<64x64xf32> to vector<64x64xbf16>
    %c0_17 = arith.constant 0 : index
    %c0_18 = arith.constant 0 : index
    %16 = vector.load %arg1[%c0_17, %c0_18] : memref<64x128xbf16, #tpu.memory_space<vmem>>, vector<64x128xbf16>
    %cst = arith.constant dense<0.000000e+00> : vector<64x128xf32>
    %17 = tpu.matmul %15, %16, %cst {dimension_numbers = #tpu.dot_dimension_numbers<[1], [0], [0], [1], [0, 0, 1, 1], [], []>} : vector<64x64xbf16>, vector<64x128xbf16>, vector<64x128xf32> -> vector<64x128xf32>
    %c0_19 = arith.constant 0 : index
    %c0_20 = arith.constant 0 : index
    %18 = vector.load %arg2[%c0_19, %c0_20] : memref<1x128xf32, #tpu.memory_space<vmem>>, vector<1x128xf32>
    %19 = vector.broadcast %18 : vector<1x128xf32> to vector<64x128xf32>
    %20 = arith.addf %17, %19 : vector<64x128xf32>
    %cst_21 = arith.constant 0.000000e+00 : f32
    %21 = vector.broadcast %cst_21 : f32 to vector<8x32xf32>
    %22 = vector.extract_strided_slice %20 {offsets = [0, 0], sizes = [8, 128], strides = [1, 1]} : vector<64x128xf32> to vector<8x128xf32>
    %23 = arith.truncf %21 : vector<8x32xf32> to vector<8x32xbf16>
    %cst_22 = arith.constant dense<0.000000e+00> : vector<8x128xf32>
    %24 = tpu.matmul %23, %0, %cst_22 {dimension_numbers = #tpu.dot_dimension_numbers<[1], [0], [0], [1], [0, 0, 1, 1], [], []>} : vector<8x32xbf16>, vector<32x128xbf16>, vector<8x128xf32> -> vector<8x128xf32>
    %25 = arith.addf %22, %24 : vector<8x128xf32>
    %26 = arith.negf %25 : vector<8x128xf32>
    %27 = math.exp %26 : vector<8x128xf32>
    %cst_23 = arith.constant 1.000000e+00 : f32
    %28 = vector.broadcast %cst_23 : f32 to vector<8x128xf32>
    %29 = arith.addf %28, %27 : vector<8x128xf32>
    %30 = arith.divf %28, %29 : vector<8x128xf32>
    %31 = math.tanh %25 : vector<8x128xf32>
    %32 = vector.extract_strided_slice %30 {offsets = [0, 0], sizes = [8, 32], strides = [1, 1]} : vector<8x128xf32> to vector<8x32xf32>
    %33 = vector.extract_strided_slice %30 {offsets = [0, 32], sizes = [8, 32], strides = [1, 1]} : vector<8x128xf32> to vector<8x32xf32>
    %34 = vector.extract_strided_slice %31 {offsets = [0, 64], sizes = [8, 32], strides = [1, 1]} : vector<8x128xf32> to vector<8x32xf32>
    %35 = vector.extract_strided_slice %30 {offsets = [0, 96], sizes = [8, 32], strides = [1, 1]} : vector<8x128xf32> to vector<8x32xf32>
    %36 = arith.mulf %33, %21 : vector<8x32xf32>
    %37 = arith.mulf %32, %34 : vector<8x32xf32>
    %38 = arith.addf %36, %37 : vector<8x32xf32>
    %39 = math.tanh %38 : vector<8x32xf32>
    %40 = arith.mulf %35, %39 : vector<8x32xf32>
    %41 = tpu.concatenate %40, %21 in 1 : vector<8x32xf32>, vector<8x32xf32> -> vector<8x64xf32>
    %42 = arith.truncf %41 : vector<8x64xf32> to vector<8x64xbf16>
    %cst_24 = arith.constant dense<0.000000e+00> : vector<8x128xf32>
    %43 = tpu.matmul %42, %1, %cst_24 {dimension_numbers = #tpu.dot_dimension_numbers<[1], [0], [0], [1], [0, 0, 1, 1], [], []>} : vector<8x64xbf16>, vector<64x128xbf16>, vector<8x128xf32> -> vector<8x128xf32>
    %44 = arith.addf %43, %10 : vector<8x128xf32>
    %45 = arith.negf %44 : vector<8x128xf32>
    %46 = math.exp %45 : vector<8x128xf32>
    %cst_25 = arith.constant 1.000000e+00 : f32
    %47 = vector.broadcast %cst_25 : f32 to vector<8x128xf32>
    %48 = arith.addf %47, %46 : vector<8x128xf32>
    %49 = arith.divf %47, %48 : vector<8x128xf32>
    %50 = math.tanh %44 : vector<8x128xf32>
    %51 = vector.extract_strided_slice %49 {offsets = [0, 0], sizes = [8, 32], strides = [1, 1]} : vector<8x128xf32> to vector<8x32xf32>
    %52 = vector.extract_strided_slice %49 {offsets = [0, 32], sizes = [8, 32], strides = [1, 1]} : vector<8x128xf32> to vector<8x32xf32>
    %53 = vector.extract_strided_slice %50 {offsets = [0, 64], sizes = [8, 32], strides = [1, 1]} : vector<8x128xf32> to vector<8x32xf32>
    %54 = vector.extract_strided_slice %49 {offsets = [0, 96], sizes = [8, 32], strides = [1, 1]} : vector<8x128xf32> to vector<8x32xf32>
    %55 = arith.mulf %52, %21 : vector<8x32xf32>
    %56 = arith.mulf %51, %53 : vector<8x32xf32>
    %57 = arith.addf %55, %56 : vector<8x32xf32>
    %58 = math.tanh %57 : vector<8x32xf32>
    %59 = arith.mulf %54, %58 : vector<8x32xf32>
    %60 = vector.extract_strided_slice %20 {offsets = [8, 0], sizes = [8, 128], strides = [1, 1]} : vector<64x128xf32> to vector<8x128xf32>
    %61 = arith.truncf %40 : vector<8x32xf32> to vector<8x32xbf16>
    %cst_26 = arith.constant dense<0.000000e+00> : vector<8x128xf32>
    %62 = tpu.matmul %61, %0, %cst_26 {dimension_numbers = #tpu.dot_dimension_numbers<[1], [0], [0], [1], [0, 0, 1, 1], [], []>} : vector<8x32xbf16>, vector<32x128xbf16>, vector<8x128xf32> -> vector<8x128xf32>
    %63 = arith.addf %60, %62 : vector<8x128xf32>
    %64 = arith.negf %63 : vector<8x128xf32>
    %65 = math.exp %64 : vector<8x128xf32>
    %cst_27 = arith.constant 1.000000e+00 : f32
    %66 = vector.broadcast %cst_27 : f32 to vector<8x128xf32>
    %67 = arith.addf %66, %65 : vector<8x128xf32>
    %68 = arith.divf %66, %67 : vector<8x128xf32>
    %69 = math.tanh %63 : vector<8x128xf32>
    %70 = vector.extract_strided_slice %68 {offsets = [0, 0], sizes = [8, 32], strides = [1, 1]} : vector<8x128xf32> to vector<8x32xf32>
    %71 = vector.extract_strided_slice %68 {offsets = [0, 32], sizes = [8, 32], strides = [1, 1]} : vector<8x128xf32> to vector<8x32xf32>
    %72 = vector.extract_strided_slice %69 {offsets = [0, 64], sizes = [8, 32], strides = [1, 1]} : vector<8x128xf32> to vector<8x32xf32>
    %73 = vector.extract_strided_slice %68 {offsets = [0, 96], sizes = [8, 32], strides = [1, 1]} : vector<8x128xf32> to vector<8x32xf32>
    %74 = arith.mulf %71, %38 : vector<8x32xf32>
    %75 = arith.mulf %70, %72 : vector<8x32xf32>
    %76 = arith.addf %74, %75 : vector<8x32xf32>
    %77 = math.tanh %76 : vector<8x32xf32>
    %78 = arith.mulf %73, %77 : vector<8x32xf32>
    %79 = tpu.concatenate %78, %59 in 1 : vector<8x32xf32>, vector<8x32xf32> -> vector<8x64xf32>
    %80 = arith.truncf %79 : vector<8x64xf32> to vector<8x64xbf16>
    %cst_28 = arith.constant dense<0.000000e+00> : vector<8x128xf32>
    %81 = tpu.matmul %80, %1, %cst_28 {dimension_numbers = #tpu.dot_dimension_numbers<[1], [0], [0], [1], [0, 0, 1, 1], [], []>} : vector<8x64xbf16>, vector<64x128xbf16>, vector<8x128xf32> -> vector<8x128xf32>
    %82 = arith.addf %81, %10 : vector<8x128xf32>
    %83 = arith.negf %82 : vector<8x128xf32>
    %84 = math.exp %83 : vector<8x128xf32>
    %cst_29 = arith.constant 1.000000e+00 : f32
    %85 = vector.broadcast %cst_29 : f32 to vector<8x128xf32>
    %86 = arith.addf %85, %84 : vector<8x128xf32>
    %87 = arith.divf %85, %86 : vector<8x128xf32>
    %88 = math.tanh %82 : vector<8x128xf32>
    %89 = vector.extract_strided_slice %87 {offsets = [0, 0], sizes = [8, 32], strides = [1, 1]} : vector<8x128xf32> to vector<8x32xf32>
    %90 = vector.extract_strided_slice %87 {offsets = [0, 32], sizes = [8, 32], strides = [1, 1]} : vector<8x128xf32> to vector<8x32xf32>
    %91 = vector.extract_strided_slice %88 {offsets = [0, 64], sizes = [8, 32], strides = [1, 1]} : vector<8x128xf32> to vector<8x32xf32>
    %92 = vector.extract_strided_slice %87 {offsets = [0, 96], sizes = [8, 32], strides = [1, 1]} : vector<8x128xf32> to vector<8x32xf32>
    %93 = arith.mulf %90, %57 : vector<8x32xf32>
    %94 = arith.mulf %89, %91 : vector<8x32xf32>
    %95 = arith.addf %93, %94 : vector<8x32xf32>
    %96 = math.tanh %95 : vector<8x32xf32>
    %97 = arith.mulf %92, %96 : vector<8x32xf32>
    %98 = vector.extract_strided_slice %20 {offsets = [16, 0], sizes = [8, 128], strides = [1, 1]} : vector<64x128xf32> to vector<8x128xf32>
    %99 = arith.truncf %78 : vector<8x32xf32> to vector<8x32xbf16>
    %cst_30 = arith.constant dense<0.000000e+00> : vector<8x128xf32>
    %100 = tpu.matmul %99, %0, %cst_30 {dimension_numbers = #tpu.dot_dimension_numbers<[1], [0], [0], [1], [0, 0, 1, 1], [], []>} : vector<8x32xbf16>, vector<32x128xbf16>, vector<8x128xf32> -> vector<8x128xf32>
    %101 = arith.addf %98, %100 : vector<8x128xf32>
    %102 = arith.negf %101 : vector<8x128xf32>
    %103 = math.exp %102 : vector<8x128xf32>
    %cst_31 = arith.constant 1.000000e+00 : f32
    %104 = vector.broadcast %cst_31 : f32 to vector<8x128xf32>
    %105 = arith.addf %104, %103 : vector<8x128xf32>
    %106 = arith.divf %104, %105 : vector<8x128xf32>
    %107 = math.tanh %101 : vector<8x128xf32>
    %108 = vector.extract_strided_slice %106 {offsets = [0, 0], sizes = [8, 32], strides = [1, 1]} : vector<8x128xf32> to vector<8x32xf32>
    %109 = vector.extract_strided_slice %106 {offsets = [0, 32], sizes = [8, 32], strides = [1, 1]} : vector<8x128xf32> to vector<8x32xf32>
    %110 = vector.extract_strided_slice %107 {offsets = [0, 64], sizes = [8, 32], strides = [1, 1]} : vector<8x128xf32> to vector<8x32xf32>
    %111 = vector.extract_strided_slice %106 {offsets = [0, 96], sizes = [8, 32], strides = [1, 1]} : vector<8x128xf32> to vector<8x32xf32>
    %112 = arith.mulf %109, %76 : vector<8x32xf32>
    %113 = arith.mulf %108, %110 : vector<8x32xf32>
    %114 = arith.addf %112, %113 : vector<8x32xf32>
    %115 = math.tanh %114 : vector<8x32xf32>
    %116 = arith.mulf %111, %115 : vector<8x32xf32>
    %117 = tpu.concatenate %116, %97 in 1 : vector<8x32xf32>, vector<8x32xf32> -> vector<8x64xf32>
    %118 = arith.truncf %117 : vector<8x64xf32> to vector<8x64xbf16>
    %cst_32 = arith.constant dense<0.000000e+00> : vector<8x128xf32>
    %119 = tpu.matmul %118, %1, %cst_32 {dimension_numbers = #tpu.dot_dimension_numbers<[1], [0], [0], [1], [0, 0, 1, 1], [], []>} : vector<8x64xbf16>, vector<64x128xbf16>, vector<8x128xf32> -> vector<8x128xf32>
    %120 = arith.addf %119, %10 : vector<8x128xf32>
    %121 = arith.negf %120 : vector<8x128xf32>
    %122 = math.exp %121 : vector<8x128xf32>
    %cst_33 = arith.constant 1.000000e+00 : f32
    %123 = vector.broadcast %cst_33 : f32 to vector<8x128xf32>
    %124 = arith.addf %123, %122 : vector<8x128xf32>
    %125 = arith.divf %123, %124 : vector<8x128xf32>
    %126 = math.tanh %120 : vector<8x128xf32>
    %127 = vector.extract_strided_slice %125 {offsets = [0, 0], sizes = [8, 32], strides = [1, 1]} : vector<8x128xf32> to vector<8x32xf32>
    %128 = vector.extract_strided_slice %125 {offsets = [0, 32], sizes = [8, 32], strides = [1, 1]} : vector<8x128xf32> to vector<8x32xf32>
    %129 = vector.extract_strided_slice %126 {offsets = [0, 64], sizes = [8, 32], strides = [1, 1]} : vector<8x128xf32> to vector<8x32xf32>
    %130 = vector.extract_strided_slice %125 {offsets = [0, 96], sizes = [8, 32], strides = [1, 1]} : vector<8x128xf32> to vector<8x32xf32>
    %131 = arith.mulf %128, %95 : vector<8x32xf32>
    %132 = arith.mulf %127, %129 : vector<8x32xf32>
    %133 = arith.addf %131, %132 : vector<8x32xf32>
    %134 = math.tanh %133 : vector<8x32xf32>
    %135 = arith.mulf %130, %134 : vector<8x32xf32>
    %136 = vector.extract_strided_slice %20 {offsets = [24, 0], sizes = [8, 128], strides = [1, 1]} : vector<64x128xf32> to vector<8x128xf32>
    %137 = arith.truncf %116 : vector<8x32xf32> to vector<8x32xbf16>
    %cst_34 = arith.constant dense<0.000000e+00> : vector<8x128xf32>
    %138 = tpu.matmul %137, %0, %cst_34 {dimension_numbers = #tpu.dot_dimension_numbers<[1], [0], [0], [1], [0, 0, 1, 1], [], []>} : vector<8x32xbf16>, vector<32x128xbf16>, vector<8x128xf32> -> vector<8x128xf32>
    %139 = arith.addf %136, %138 : vector<8x128xf32>
    %140 = arith.negf %139 : vector<8x128xf32>
    %141 = math.exp %140 : vector<8x128xf32>
    %cst_35 = arith.constant 1.000000e+00 : f32
    %142 = vector.broadcast %cst_35 : f32 to vector<8x128xf32>
    %143 = arith.addf %142, %141 : vector<8x128xf32>
    %144 = arith.divf %142, %143 : vector<8x128xf32>
    %145 = math.tanh %139 : vector<8x128xf32>
    %146 = vector.extract_strided_slice %144 {offsets = [0, 0], sizes = [8, 32], strides = [1, 1]} : vector<8x128xf32> to vector<8x32xf32>
    %147 = vector.extract_strided_slice %144 {offsets = [0, 32], sizes = [8, 32], strides = [1, 1]} : vector<8x128xf32> to vector<8x32xf32>
    %148 = vector.extract_strided_slice %145 {offsets = [0, 64], sizes = [8, 32], strides = [1, 1]} : vector<8x128xf32> to vector<8x32xf32>
    %149 = vector.extract_strided_slice %144 {offsets = [0, 96], sizes = [8, 32], strides = [1, 1]} : vector<8x128xf32> to vector<8x32xf32>
    %150 = arith.mulf %147, %114 : vector<8x32xf32>
    %151 = arith.mulf %146, %148 : vector<8x32xf32>
    %152 = arith.addf %150, %151 : vector<8x32xf32>
    %153 = math.tanh %152 : vector<8x32xf32>
    %154 = arith.mulf %149, %153 : vector<8x32xf32>
    %155 = tpu.concatenate %154, %135 in 1 : vector<8x32xf32>, vector<8x32xf32> -> vector<8x64xf32>
    %156 = arith.truncf %155 : vector<8x64xf32> to vector<8x64xbf16>
    %cst_36 = arith.constant dense<0.000000e+00> : vector<8x128xf32>
    %157 = tpu.matmul %156, %1, %cst_36 {dimension_numbers = #tpu.dot_dimension_numbers<[1], [0], [0], [1], [0, 0, 1, 1], [], []>} : vector<8x64xbf16>, vector<64x128xbf16>, vector<8x128xf32> -> vector<8x128xf32>
    %158 = arith.addf %157, %10 : vector<8x128xf32>
    %159 = arith.negf %158 : vector<8x128xf32>
    %160 = math.exp %159 : vector<8x128xf32>
    %cst_37 = arith.constant 1.000000e+00 : f32
    %161 = vector.broadcast %cst_37 : f32 to vector<8x128xf32>
    %162 = arith.addf %161, %160 : vector<8x128xf32>
    %163 = arith.divf %161, %162 : vector<8x128xf32>
    %164 = math.tanh %158 : vector<8x128xf32>
    %165 = vector.extract_strided_slice %163 {offsets = [0, 0], sizes = [8, 32], strides = [1, 1]} : vector<8x128xf32> to vector<8x32xf32>
    %166 = vector.extract_strided_slice %163 {offsets = [0, 32], sizes = [8, 32], strides = [1, 1]} : vector<8x128xf32> to vector<8x32xf32>
    %167 = vector.extract_strided_slice %164 {offsets = [0, 64], sizes = [8, 32], strides = [1, 1]} : vector<8x128xf32> to vector<8x32xf32>
    %168 = vector.extract_strided_slice %163 {offsets = [0, 96], sizes = [8, 32], strides = [1, 1]} : vector<8x128xf32> to vector<8x32xf32>
    %169 = arith.mulf %166, %133 : vector<8x32xf32>
    %170 = arith.mulf %165, %167 : vector<8x32xf32>
    %171 = arith.addf %169, %170 : vector<8x32xf32>
    %172 = math.tanh %171 : vector<8x32xf32>
    %173 = arith.mulf %168, %172 : vector<8x32xf32>
    %174 = vector.extract_strided_slice %20 {offsets = [32, 0], sizes = [8, 128], strides = [1, 1]} : vector<64x128xf32> to vector<8x128xf32>
    %175 = arith.truncf %154 : vector<8x32xf32> to vector<8x32xbf16>
    %cst_38 = arith.constant dense<0.000000e+00> : vector<8x128xf32>
    %176 = tpu.matmul %175, %0, %cst_38 {dimension_numbers = #tpu.dot_dimension_numbers<[1], [0], [0], [1], [0, 0, 1, 1], [], []>} : vector<8x32xbf16>, vector<32x128xbf16>, vector<8x128xf32> -> vector<8x128xf32>
    %177 = arith.addf %174, %176 : vector<8x128xf32>
    %178 = arith.negf %177 : vector<8x128xf32>
    %179 = math.exp %178 : vector<8x128xf32>
    %cst_39 = arith.constant 1.000000e+00 : f32
    %180 = vector.broadcast %cst_39 : f32 to vector<8x128xf32>
    %181 = arith.addf %180, %179 : vector<8x128xf32>
    %182 = arith.divf %180, %181 : vector<8x128xf32>
    %183 = math.tanh %177 : vector<8x128xf32>
    %184 = vector.extract_strided_slice %182 {offsets = [0, 0], sizes = [8, 32], strides = [1, 1]} : vector<8x128xf32> to vector<8x32xf32>
    %185 = vector.extract_strided_slice %182 {offsets = [0, 32], sizes = [8, 32], strides = [1, 1]} : vector<8x128xf32> to vector<8x32xf32>
    %186 = vector.extract_strided_slice %183 {offsets = [0, 64], sizes = [8, 32], strides = [1, 1]} : vector<8x128xf32> to vector<8x32xf32>
    %187 = vector.extract_strided_slice %182 {offsets = [0, 96], sizes = [8, 32], strides = [1, 1]} : vector<8x128xf32> to vector<8x32xf32>
    %188 = arith.mulf %185, %152 : vector<8x32xf32>
    %189 = arith.mulf %184, %186 : vector<8x32xf32>
    %190 = arith.addf %188, %189 : vector<8x32xf32>
    %191 = math.tanh %190 : vector<8x32xf32>
    %192 = arith.mulf %187, %191 : vector<8x32xf32>
    %193 = tpu.concatenate %192, %173 in 1 : vector<8x32xf32>, vector<8x32xf32> -> vector<8x64xf32>
    %194 = arith.truncf %193 : vector<8x64xf32> to vector<8x64xbf16>
    %cst_40 = arith.constant dense<0.000000e+00> : vector<8x128xf32>
    %195 = tpu.matmul %194, %1, %cst_40 {dimension_numbers = #tpu.dot_dimension_numbers<[1], [0], [0], [1], [0, 0, 1, 1], [], []>} : vector<8x64xbf16>, vector<64x128xbf16>, vector<8x128xf32> -> vector<8x128xf32>
    %196 = arith.addf %195, %10 : vector<8x128xf32>
    %197 = arith.negf %196 : vector<8x128xf32>
    %198 = math.exp %197 : vector<8x128xf32>
    %cst_41 = arith.constant 1.000000e+00 : f32
    %199 = vector.broadcast %cst_41 : f32 to vector<8x128xf32>
    %200 = arith.addf %199, %198 : vector<8x128xf32>
    %201 = arith.divf %199, %200 : vector<8x128xf32>
    %202 = math.tanh %196 : vector<8x128xf32>
    %203 = vector.extract_strided_slice %201 {offsets = [0, 0], sizes = [8, 32], strides = [1, 1]} : vector<8x128xf32> to vector<8x32xf32>
    %204 = vector.extract_strided_slice %201 {offsets = [0, 32], sizes = [8, 32], strides = [1, 1]} : vector<8x128xf32> to vector<8x32xf32>
    %205 = vector.extract_strided_slice %202 {offsets = [0, 64], sizes = [8, 32], strides = [1, 1]} : vector<8x128xf32> to vector<8x32xf32>
    %206 = vector.extract_strided_slice %201 {offsets = [0, 96], sizes = [8, 32], strides = [1, 1]} : vector<8x128xf32> to vector<8x32xf32>
    %207 = arith.mulf %204, %171 : vector<8x32xf32>
    %208 = arith.mulf %203, %205 : vector<8x32xf32>
    %209 = arith.addf %207, %208 : vector<8x32xf32>
    %210 = math.tanh %209 : vector<8x32xf32>
    %211 = arith.mulf %206, %210 : vector<8x32xf32>
    %212 = vector.extract_strided_slice %20 {offsets = [40, 0], sizes = [8, 128], strides = [1, 1]} : vector<64x128xf32> to vector<8x128xf32>
    %213 = arith.truncf %192 : vector<8x32xf32> to vector<8x32xbf16>
    %cst_42 = arith.constant dense<0.000000e+00> : vector<8x128xf32>
    %214 = tpu.matmul %213, %0, %cst_42 {dimension_numbers = #tpu.dot_dimension_numbers<[1], [0], [0], [1], [0, 0, 1, 1], [], []>} : vector<8x32xbf16>, vector<32x128xbf16>, vector<8x128xf32> -> vector<8x128xf32>
    %215 = arith.addf %212, %214 : vector<8x128xf32>
    %216 = arith.negf %215 : vector<8x128xf32>
    %217 = math.exp %216 : vector<8x128xf32>
    %cst_43 = arith.constant 1.000000e+00 : f32
    %218 = vector.broadcast %cst_43 : f32 to vector<8x128xf32>
    %219 = arith.addf %218, %217 : vector<8x128xf32>
    %220 = arith.divf %218, %219 : vector<8x128xf32>
    %221 = math.tanh %215 : vector<8x128xf32>
    %222 = vector.extract_strided_slice %220 {offsets = [0, 0], sizes = [8, 32], strides = [1, 1]} : vector<8x128xf32> to vector<8x32xf32>
    %223 = vector.extract_strided_slice %220 {offsets = [0, 32], sizes = [8, 32], strides = [1, 1]} : vector<8x128xf32> to vector<8x32xf32>
    %224 = vector.extract_strided_slice %221 {offsets = [0, 64], sizes = [8, 32], strides = [1, 1]} : vector<8x128xf32> to vector<8x32xf32>
    %225 = vector.extract_strided_slice %220 {offsets = [0, 96], sizes = [8, 32], strides = [1, 1]} : vector<8x128xf32> to vector<8x32xf32>
    %226 = arith.mulf %223, %190 : vector<8x32xf32>
    %227 = arith.mulf %222, %224 : vector<8x32xf32>
    %228 = arith.addf %226, %227 : vector<8x32xf32>
    %229 = math.tanh %228 : vector<8x32xf32>
    %230 = arith.mulf %225, %229 : vector<8x32xf32>
    %231 = tpu.concatenate %230, %211 in 1 : vector<8x32xf32>, vector<8x32xf32> -> vector<8x64xf32>
    %232 = arith.truncf %231 : vector<8x64xf32> to vector<8x64xbf16>
    %cst_44 = arith.constant dense<0.000000e+00> : vector<8x128xf32>
    %233 = tpu.matmul %232, %1, %cst_44 {dimension_numbers = #tpu.dot_dimension_numbers<[1], [0], [0], [1], [0, 0, 1, 1], [], []>} : vector<8x64xbf16>, vector<64x128xbf16>, vector<8x128xf32> -> vector<8x128xf32>
    %234 = arith.addf %233, %10 : vector<8x128xf32>
    %235 = arith.negf %234 : vector<8x128xf32>
    %236 = math.exp %235 : vector<8x128xf32>
    %cst_45 = arith.constant 1.000000e+00 : f32
    %237 = vector.broadcast %cst_45 : f32 to vector<8x128xf32>
    %238 = arith.addf %237, %236 : vector<8x128xf32>
    %239 = arith.divf %237, %238 : vector<8x128xf32>
    %240 = math.tanh %234 : vector<8x128xf32>
    %241 = vector.extract_strided_slice %239 {offsets = [0, 0], sizes = [8, 32], strides = [1, 1]} : vector<8x128xf32> to vector<8x32xf32>
    %242 = vector.extract_strided_slice %239 {offsets = [0, 32], sizes = [8, 32], strides = [1, 1]} : vector<8x128xf32> to vector<8x32xf32>
    %243 = vector.extract_strided_slice %240 {offsets = [0, 64], sizes = [8, 32], strides = [1, 1]} : vector<8x128xf32> to vector<8x32xf32>
    %244 = vector.extract_strided_slice %239 {offsets = [0, 96], sizes = [8, 32], strides = [1, 1]} : vector<8x128xf32> to vector<8x32xf32>
    %245 = arith.mulf %242, %209 : vector<8x32xf32>
    %246 = arith.mulf %241, %243 : vector<8x32xf32>
    %247 = arith.addf %245, %246 : vector<8x32xf32>
    %248 = math.tanh %247 : vector<8x32xf32>
    %249 = arith.mulf %244, %248 : vector<8x32xf32>
    %250 = vector.extract_strided_slice %20 {offsets = [48, 0], sizes = [8, 128], strides = [1, 1]} : vector<64x128xf32> to vector<8x128xf32>
    %251 = arith.truncf %230 : vector<8x32xf32> to vector<8x32xbf16>
    %cst_46 = arith.constant dense<0.000000e+00> : vector<8x128xf32>
    %252 = tpu.matmul %251, %0, %cst_46 {dimension_numbers = #tpu.dot_dimension_numbers<[1], [0], [0], [1], [0, 0, 1, 1], [], []>} : vector<8x32xbf16>, vector<32x128xbf16>, vector<8x128xf32> -> vector<8x128xf32>
    %253 = arith.addf %250, %252 : vector<8x128xf32>
    %254 = arith.negf %253 : vector<8x128xf32>
    %255 = math.exp %254 : vector<8x128xf32>
    %cst_47 = arith.constant 1.000000e+00 : f32
    %256 = vector.broadcast %cst_47 : f32 to vector<8x128xf32>
    %257 = arith.addf %256, %255 : vector<8x128xf32>
    %258 = arith.divf %256, %257 : vector<8x128xf32>
    %259 = math.tanh %253 : vector<8x128xf32>
    %260 = vector.extract_strided_slice %258 {offsets = [0, 0], sizes = [8, 32], strides = [1, 1]} : vector<8x128xf32> to vector<8x32xf32>
    %261 = vector.extract_strided_slice %258 {offsets = [0, 32], sizes = [8, 32], strides = [1, 1]} : vector<8x128xf32> to vector<8x32xf32>
    %262 = vector.extract_strided_slice %259 {offsets = [0, 64], sizes = [8, 32], strides = [1, 1]} : vector<8x128xf32> to vector<8x32xf32>
    %263 = vector.extract_strided_slice %258 {offsets = [0, 96], sizes = [8, 32], strides = [1, 1]} : vector<8x128xf32> to vector<8x32xf32>
    %264 = arith.mulf %261, %228 : vector<8x32xf32>
    %265 = arith.mulf %260, %262 : vector<8x32xf32>
    %266 = arith.addf %264, %265 : vector<8x32xf32>
    %267 = math.tanh %266 : vector<8x32xf32>
    %268 = arith.mulf %263, %267 : vector<8x32xf32>
    %269 = tpu.concatenate %268, %249 in 1 : vector<8x32xf32>, vector<8x32xf32> -> vector<8x64xf32>
    %270 = arith.truncf %269 : vector<8x64xf32> to vector<8x64xbf16>
    %cst_48 = arith.constant dense<0.000000e+00> : vector<8x128xf32>
    %271 = tpu.matmul %270, %1, %cst_48 {dimension_numbers = #tpu.dot_dimension_numbers<[1], [0], [0], [1], [0, 0, 1, 1], [], []>} : vector<8x64xbf16>, vector<64x128xbf16>, vector<8x128xf32> -> vector<8x128xf32>
    %272 = arith.addf %271, %10 : vector<8x128xf32>
    %273 = arith.negf %272 : vector<8x128xf32>
    %274 = math.exp %273 : vector<8x128xf32>
    %cst_49 = arith.constant 1.000000e+00 : f32
    %275 = vector.broadcast %cst_49 : f32 to vector<8x128xf32>
    %276 = arith.addf %275, %274 : vector<8x128xf32>
    %277 = arith.divf %275, %276 : vector<8x128xf32>
    %278 = math.tanh %272 : vector<8x128xf32>
    %279 = vector.extract_strided_slice %277 {offsets = [0, 0], sizes = [8, 32], strides = [1, 1]} : vector<8x128xf32> to vector<8x32xf32>
    %280 = vector.extract_strided_slice %277 {offsets = [0, 32], sizes = [8, 32], strides = [1, 1]} : vector<8x128xf32> to vector<8x32xf32>
    %281 = vector.extract_strided_slice %278 {offsets = [0, 64], sizes = [8, 32], strides = [1, 1]} : vector<8x128xf32> to vector<8x32xf32>
    %282 = vector.extract_strided_slice %277 {offsets = [0, 96], sizes = [8, 32], strides = [1, 1]} : vector<8x128xf32> to vector<8x32xf32>
    %283 = arith.mulf %280, %247 : vector<8x32xf32>
    %284 = arith.mulf %279, %281 : vector<8x32xf32>
    %285 = arith.addf %283, %284 : vector<8x32xf32>
    %286 = math.tanh %285 : vector<8x32xf32>
    %287 = arith.mulf %282, %286 : vector<8x32xf32>
    %288 = vector.extract_strided_slice %20 {offsets = [56, 0], sizes = [8, 128], strides = [1, 1]} : vector<64x128xf32> to vector<8x128xf32>
    %289 = arith.truncf %268 : vector<8x32xf32> to vector<8x32xbf16>
    %cst_50 = arith.constant dense<0.000000e+00> : vector<8x128xf32>
    %290 = tpu.matmul %289, %0, %cst_50 {dimension_numbers = #tpu.dot_dimension_numbers<[1], [0], [0], [1], [0, 0, 1, 1], [], []>} : vector<8x32xbf16>, vector<32x128xbf16>, vector<8x128xf32> -> vector<8x128xf32>
    %291 = arith.addf %288, %290 : vector<8x128xf32>
    %292 = arith.negf %291 : vector<8x128xf32>
    %293 = math.exp %292 : vector<8x128xf32>
    %cst_51 = arith.constant 1.000000e+00 : f32
    %294 = vector.broadcast %cst_51 : f32 to vector<8x128xf32>
    %295 = arith.addf %294, %293 : vector<8x128xf32>
    %296 = arith.divf %294, %295 : vector<8x128xf32>
    %297 = math.tanh %291 : vector<8x128xf32>
    %298 = vector.extract_strided_slice %296 {offsets = [0, 0], sizes = [8, 32], strides = [1, 1]} : vector<8x128xf32> to vector<8x32xf32>
    %299 = vector.extract_strided_slice %296 {offsets = [0, 32], sizes = [8, 32], strides = [1, 1]} : vector<8x128xf32> to vector<8x32xf32>
    %300 = vector.extract_strided_slice %297 {offsets = [0, 64], sizes = [8, 32], strides = [1, 1]} : vector<8x128xf32> to vector<8x32xf32>
    %301 = vector.extract_strided_slice %296 {offsets = [0, 96], sizes = [8, 32], strides = [1, 1]} : vector<8x128xf32> to vector<8x32xf32>
    %302 = arith.mulf %299, %266 : vector<8x32xf32>
    %303 = arith.mulf %298, %300 : vector<8x32xf32>
    %304 = arith.addf %302, %303 : vector<8x32xf32>
    %305 = math.tanh %304 : vector<8x32xf32>
    %306 = arith.mulf %301, %305 : vector<8x32xf32>
    %307 = tpu.concatenate %306, %287 in 1 : vector<8x32xf32>, vector<8x32xf32> -> vector<8x64xf32>
    %308 = arith.truncf %307 : vector<8x64xf32> to vector<8x64xbf16>
    %cst_52 = arith.constant dense<0.000000e+00> : vector<8x128xf32>
    %309 = tpu.matmul %308, %1, %cst_52 {dimension_numbers = #tpu.dot_dimension_numbers<[1], [0], [0], [1], [0, 0, 1, 1], [], []>} : vector<8x64xbf16>, vector<64x128xbf16>, vector<8x128xf32> -> vector<8x128xf32>
    %310 = arith.addf %309, %10 : vector<8x128xf32>
    %311 = arith.negf %310 : vector<8x128xf32>
    %312 = math.exp %311 : vector<8x128xf32>
    %cst_53 = arith.constant 1.000000e+00 : f32
    %313 = vector.broadcast %cst_53 : f32 to vector<8x128xf32>
    %314 = arith.addf %313, %312 : vector<8x128xf32>
    %315 = arith.divf %313, %314 : vector<8x128xf32>
    %316 = math.tanh %310 : vector<8x128xf32>
    %317 = vector.extract_strided_slice %315 {offsets = [0, 0], sizes = [8, 32], strides = [1, 1]} : vector<8x128xf32> to vector<8x32xf32>
    %318 = vector.extract_strided_slice %315 {offsets = [0, 32], sizes = [8, 32], strides = [1, 1]} : vector<8x128xf32> to vector<8x32xf32>
    %319 = vector.extract_strided_slice %316 {offsets = [0, 64], sizes = [8, 32], strides = [1, 1]} : vector<8x128xf32> to vector<8x32xf32>
    %320 = vector.extract_strided_slice %315 {offsets = [0, 96], sizes = [8, 32], strides = [1, 1]} : vector<8x128xf32> to vector<8x32xf32>
    %321 = arith.mulf %318, %285 : vector<8x32xf32>
    %322 = arith.mulf %317, %319 : vector<8x32xf32>
    %323 = arith.addf %321, %322 : vector<8x32xf32>
    %324 = math.tanh %323 : vector<8x32xf32>
    %325 = arith.mulf %320, %324 : vector<8x32xf32>
    %326 = arith.truncf %306 : vector<8x32xf32> to vector<8x32xbf16>
    %cst_54 = arith.constant dense<0.000000e+00> : vector<8x128xf32>
    %327 = tpu.matmul %326, %0, %cst_54 {dimension_numbers = #tpu.dot_dimension_numbers<[1], [0], [0], [1], [0, 0, 1, 1], [], []>} : vector<8x32xbf16>, vector<32x128xbf16>, vector<8x128xf32> -> vector<8x128xf32>
    %328 = arith.addf %7, %327 : vector<8x128xf32>
    %329 = arith.negf %328 : vector<8x128xf32>
    %330 = math.exp %329 : vector<8x128xf32>
    %cst_55 = arith.constant 1.000000e+00 : f32
    %331 = vector.broadcast %cst_55 : f32 to vector<8x128xf32>
    %332 = arith.addf %331, %330 : vector<8x128xf32>
    %333 = arith.divf %331, %332 : vector<8x128xf32>
    %334 = math.tanh %328 : vector<8x128xf32>
    %335 = vector.extract_strided_slice %333 {offsets = [0, 0], sizes = [8, 32], strides = [1, 1]} : vector<8x128xf32> to vector<8x32xf32>
    %336 = vector.extract_strided_slice %333 {offsets = [0, 32], sizes = [8, 32], strides = [1, 1]} : vector<8x128xf32> to vector<8x32xf32>
    %337 = vector.extract_strided_slice %334 {offsets = [0, 64], sizes = [8, 32], strides = [1, 1]} : vector<8x128xf32> to vector<8x32xf32>
    %338 = vector.extract_strided_slice %333 {offsets = [0, 96], sizes = [8, 32], strides = [1, 1]} : vector<8x128xf32> to vector<8x32xf32>
    %339 = arith.mulf %336, %304 : vector<8x32xf32>
    %340 = arith.mulf %335, %337 : vector<8x32xf32>
    %341 = arith.addf %339, %340 : vector<8x32xf32>
    %342 = math.tanh %341 : vector<8x32xf32>
    %343 = arith.mulf %338, %342 : vector<8x32xf32>
    %344 = arith.truncf %343 : vector<8x32xf32> to vector<8x32xbf16>
    %cst_56 = arith.constant dense<0.000000e+00> : vector<8x128xf32>
    %345 = tpu.matmul %344, %2, %cst_56 {dimension_numbers = #tpu.dot_dimension_numbers<[1], [0], [0], [1], [0, 0, 1, 1], [], []>} : vector<8x32xbf16>, vector<32x128xbf16>, vector<8x128xf32> -> vector<8x128xf32>
    %346 = arith.addf %345, %10 : vector<8x128xf32>
    %347 = arith.truncf %343 : vector<8x32xf32> to vector<8x32xbf16>
    %cst_57 = arith.constant dense<0.000000e+00> : vector<8x128xf32>
    %348 = tpu.matmul %347, %0, %cst_57 {dimension_numbers = #tpu.dot_dimension_numbers<[1], [0], [0], [1], [0, 0, 1, 1], [], []>} : vector<8x32xbf16>, vector<32x128xbf16>, vector<8x128xf32> -> vector<8x128xf32>
    %349 = arith.addf %7, %348 : vector<8x128xf32>
    %350 = arith.negf %349 : vector<8x128xf32>
    %351 = math.exp %350 : vector<8x128xf32>
    %cst_58 = arith.constant 1.000000e+00 : f32
    %352 = vector.broadcast %cst_58 : f32 to vector<8x128xf32>
    %353 = arith.addf %352, %351 : vector<8x128xf32>
    %354 = arith.divf %352, %353 : vector<8x128xf32>
    %355 = math.tanh %349 : vector<8x128xf32>
    %356 = vector.extract_strided_slice %354 {offsets = [0, 0], sizes = [8, 32], strides = [1, 1]} : vector<8x128xf32> to vector<8x32xf32>
    %357 = vector.extract_strided_slice %354 {offsets = [0, 32], sizes = [8, 32], strides = [1, 1]} : vector<8x128xf32> to vector<8x32xf32>
    %358 = vector.extract_strided_slice %355 {offsets = [0, 64], sizes = [8, 32], strides = [1, 1]} : vector<8x128xf32> to vector<8x32xf32>
    %359 = vector.extract_strided_slice %354 {offsets = [0, 96], sizes = [8, 32], strides = [1, 1]} : vector<8x128xf32> to vector<8x32xf32>
    %360 = arith.mulf %357, %341 : vector<8x32xf32>
    %361 = arith.mulf %356, %358 : vector<8x32xf32>
    %362 = arith.addf %360, %361 : vector<8x32xf32>
    %363 = math.tanh %362 : vector<8x32xf32>
    %364 = arith.mulf %359, %363 : vector<8x32xf32>
    %365 = arith.truncf %364 : vector<8x32xf32> to vector<8x32xbf16>
    %cst_59 = arith.constant dense<0.000000e+00> : vector<8x128xf32>
    %366 = tpu.matmul %365, %2, %cst_59 {dimension_numbers = #tpu.dot_dimension_numbers<[1], [0], [0], [1], [0, 0, 1, 1], [], []>} : vector<8x32xbf16>, vector<32x128xbf16>, vector<8x128xf32> -> vector<8x128xf32>
    %367 = arith.addf %366, %10 : vector<8x128xf32>
    %368 = arith.truncf %364 : vector<8x32xf32> to vector<8x32xbf16>
    %cst_60 = arith.constant dense<0.000000e+00> : vector<8x128xf32>
    %369 = tpu.matmul %368, %0, %cst_60 {dimension_numbers = #tpu.dot_dimension_numbers<[1], [0], [0], [1], [0, 0, 1, 1], [], []>} : vector<8x32xbf16>, vector<32x128xbf16>, vector<8x128xf32> -> vector<8x128xf32>
    %370 = arith.addf %7, %369 : vector<8x128xf32>
    %371 = arith.negf %370 : vector<8x128xf32>
    %372 = math.exp %371 : vector<8x128xf32>
    %cst_61 = arith.constant 1.000000e+00 : f32
    %373 = vector.broadcast %cst_61 : f32 to vector<8x128xf32>
    %374 = arith.addf %373, %372 : vector<8x128xf32>
    %375 = arith.divf %373, %374 : vector<8x128xf32>
    %376 = math.tanh %370 : vector<8x128xf32>
    %377 = vector.extract_strided_slice %375 {offsets = [0, 0], sizes = [8, 32], strides = [1, 1]} : vector<8x128xf32> to vector<8x32xf32>
    %378 = vector.extract_strided_slice %375 {offsets = [0, 32], sizes = [8, 32], strides = [1, 1]} : vector<8x128xf32> to vector<8x32xf32>
    %379 = vector.extract_strided_slice %376 {offsets = [0, 64], sizes = [8, 32], strides = [1, 1]} : vector<8x128xf32> to vector<8x32xf32>
    %380 = vector.extract_strided_slice %375 {offsets = [0, 96], sizes = [8, 32], strides = [1, 1]} : vector<8x128xf32> to vector<8x32xf32>
    %381 = arith.mulf %378, %362 : vector<8x32xf32>
    %382 = arith.mulf %377, %379 : vector<8x32xf32>
    %383 = arith.addf %381, %382 : vector<8x32xf32>
    %384 = math.tanh %383 : vector<8x32xf32>
    %385 = arith.mulf %380, %384 : vector<8x32xf32>
    %386 = arith.truncf %385 : vector<8x32xf32> to vector<8x32xbf16>
    %cst_62 = arith.constant dense<0.000000e+00> : vector<8x128xf32>
    %387 = tpu.matmul %386, %2, %cst_62 {dimension_numbers = #tpu.dot_dimension_numbers<[1], [0], [0], [1], [0, 0, 1, 1], [], []>} : vector<8x32xbf16>, vector<32x128xbf16>, vector<8x128xf32> -> vector<8x128xf32>
    %388 = arith.addf %387, %10 : vector<8x128xf32>
    %389 = arith.truncf %385 : vector<8x32xf32> to vector<8x32xbf16>
    %cst_63 = arith.constant dense<0.000000e+00> : vector<8x128xf32>
    %390 = tpu.matmul %389, %0, %cst_63 {dimension_numbers = #tpu.dot_dimension_numbers<[1], [0], [0], [1], [0, 0, 1, 1], [], []>} : vector<8x32xbf16>, vector<32x128xbf16>, vector<8x128xf32> -> vector<8x128xf32>
    %391 = arith.addf %7, %390 : vector<8x128xf32>
    %392 = arith.negf %391 : vector<8x128xf32>
    %393 = math.exp %392 : vector<8x128xf32>
    %cst_64 = arith.constant 1.000000e+00 : f32
    %394 = vector.broadcast %cst_64 : f32 to vector<8x128xf32>
    %395 = arith.addf %394, %393 : vector<8x128xf32>
    %396 = arith.divf %394, %395 : vector<8x128xf32>
    %397 = math.tanh %391 : vector<8x128xf32>
    %398 = vector.extract_strided_slice %396 {offsets = [0, 0], sizes = [8, 32], strides = [1, 1]} : vector<8x128xf32> to vector<8x32xf32>
    %399 = vector.extract_strided_slice %396 {offsets = [0, 32], sizes = [8, 32], strides = [1, 1]} : vector<8x128xf32> to vector<8x32xf32>
    %400 = vector.extract_strided_slice %397 {offsets = [0, 64], sizes = [8, 32], strides = [1, 1]} : vector<8x128xf32> to vector<8x32xf32>
    %401 = vector.extract_strided_slice %396 {offsets = [0, 96], sizes = [8, 32], strides = [1, 1]} : vector<8x128xf32> to vector<8x32xf32>
    %402 = arith.mulf %399, %383 : vector<8x32xf32>
    %403 = arith.mulf %398, %400 : vector<8x32xf32>
    %404 = arith.addf %402, %403 : vector<8x32xf32>
    %405 = math.tanh %404 : vector<8x32xf32>
    %406 = arith.mulf %401, %405 : vector<8x32xf32>
    %407 = arith.truncf %406 : vector<8x32xf32> to vector<8x32xbf16>
    %cst_65 = arith.constant dense<0.000000e+00> : vector<8x128xf32>
    %408 = tpu.matmul %407, %2, %cst_65 {dimension_numbers = #tpu.dot_dimension_numbers<[1], [0], [0], [1], [0, 0, 1, 1], [], []>} : vector<8x32xbf16>, vector<32x128xbf16>, vector<8x128xf32> -> vector<8x128xf32>
    %409 = arith.addf %408, %10 : vector<8x128xf32>
    %410 = arith.truncf %406 : vector<8x32xf32> to vector<8x32xbf16>
    %cst_66 = arith.constant dense<0.000000e+00> : vector<8x128xf32>
    %411 = tpu.matmul %410, %0, %cst_66 {dimension_numbers = #tpu.dot_dimension_numbers<[1], [0], [0], [1], [0, 0, 1, 1], [], []>} : vector<8x32xbf16>, vector<32x128xbf16>, vector<8x128xf32> -> vector<8x128xf32>
    %412 = arith.addf %7, %411 : vector<8x128xf32>
    %413 = arith.negf %412 : vector<8x128xf32>
    %414 = math.exp %413 : vector<8x128xf32>
    %cst_67 = arith.constant 1.000000e+00 : f32
    %415 = vector.broadcast %cst_67 : f32 to vector<8x128xf32>
    %416 = arith.addf %415, %414 : vector<8x128xf32>
    %417 = arith.divf %415, %416 : vector<8x128xf32>
    %418 = math.tanh %412 : vector<8x128xf32>
    %419 = vector.extract_strided_slice %417 {offsets = [0, 0], sizes = [8, 32], strides = [1, 1]} : vector<8x128xf32> to vector<8x32xf32>
    %420 = vector.extract_strided_slice %417 {offsets = [0, 32], sizes = [8, 32], strides = [1, 1]} : vector<8x128xf32> to vector<8x32xf32>
    %421 = vector.extract_strided_slice %418 {offsets = [0, 64], sizes = [8, 32], strides = [1, 1]} : vector<8x128xf32> to vector<8x32xf32>
    %422 = vector.extract_strided_slice %417 {offsets = [0, 96], sizes = [8, 32], strides = [1, 1]} : vector<8x128xf32> to vector<8x32xf32>
    %423 = arith.mulf %420, %404 : vector<8x32xf32>
    %424 = arith.mulf %419, %421 : vector<8x32xf32>
    %425 = arith.addf %423, %424 : vector<8x32xf32>
    %426 = math.tanh %425 : vector<8x32xf32>
    %427 = arith.mulf %422, %426 : vector<8x32xf32>
    %428 = arith.truncf %427 : vector<8x32xf32> to vector<8x32xbf16>
    %cst_68 = arith.constant dense<0.000000e+00> : vector<8x128xf32>
    %429 = tpu.matmul %428, %2, %cst_68 {dimension_numbers = #tpu.dot_dimension_numbers<[1], [0], [0], [1], [0, 0, 1, 1], [], []>} : vector<8x32xbf16>, vector<32x128xbf16>, vector<8x128xf32> -> vector<8x128xf32>
    %430 = arith.addf %429, %10 : vector<8x128xf32>
    %431 = tpu.iota {dimensions = array<i32: 1>} : vector<8x32xi32>
    %c0_i32 = arith.constant 0 : i32
    %432 = vector.broadcast %c0_i32 : i32 to vector<8x1xi32>
    %433 = vector.broadcast %432 : vector<8x1xi32> to vector<8x32xi32>
    %434 = arith.cmpi eq, %431, %433 : vector<8x32xi32>
    %435 = arith.extui %434 : vector<8x32xi1> to vector<8x32xi32>
    %436 = arith.sitofp %435 : vector<8x32xi32> to vector<8x32xf32>
    %437 = tpu.concatenate %436, %325 in 1 : vector<8x32xf32>, vector<8x32xf32> -> vector<8x64xf32>
    %438 = arith.truncf %437 : vector<8x64xf32> to vector<8x64xbf16>
    %cst_69 = arith.constant dense<0.000000e+00> : vector<8x128xf32>
    %439 = tpu.matmul %438, %3, %cst_69 {dimension_numbers = #tpu.dot_dimension_numbers<[1], [0], [0], [1], [0, 0, 1, 1], [], []>} : vector<8x64xbf16>, vector<64x128xbf16>, vector<8x128xf32> -> vector<8x128xf32>
    %440 = arith.addf %439, %346 : vector<8x128xf32>
    %441 = arith.negf %440 : vector<8x128xf32>
    %442 = math.exp %441 : vector<8x128xf32>
    %cst_70 = arith.constant 1.000000e+00 : f32
    %443 = vector.broadcast %cst_70 : f32 to vector<8x128xf32>
    %444 = arith.addf %443, %442 : vector<8x128xf32>
    %445 = arith.divf %443, %444 : vector<8x128xf32>
    %446 = math.tanh %440 : vector<8x128xf32>
    %447 = vector.extract_strided_slice %445 {offsets = [0, 0], sizes = [8, 32], strides = [1, 1]} : vector<8x128xf32> to vector<8x32xf32>
    %448 = vector.extract_strided_slice %445 {offsets = [0, 32], sizes = [8, 32], strides = [1, 1]} : vector<8x128xf32> to vector<8x32xf32>
    %449 = vector.extract_strided_slice %446 {offsets = [0, 64], sizes = [8, 32], strides = [1, 1]} : vector<8x128xf32> to vector<8x32xf32>
    %450 = vector.extract_strided_slice %445 {offsets = [0, 96], sizes = [8, 32], strides = [1, 1]} : vector<8x128xf32> to vector<8x32xf32>
    %451 = arith.mulf %448, %323 : vector<8x32xf32>
    %452 = arith.mulf %447, %449 : vector<8x32xf32>
    %453 = arith.addf %451, %452 : vector<8x32xf32>
    %454 = math.tanh %453 : vector<8x32xf32>
    %455 = arith.mulf %450, %454 : vector<8x32xf32>
    %456 = arith.truncf %455 : vector<8x32xf32> to vector<8x32xbf16>
    %cst_71 = arith.constant dense<0.000000e+00> : vector<8x32xf32>
    %457 = tpu.matmul %456, %4, %cst_71 {dimension_numbers = #tpu.dot_dimension_numbers<[1], [0], [0], [1], [0, 0, 1, 1], [], []>} : vector<8x32xbf16>, vector<32x32xbf16>, vector<8x32xf32> -> vector<8x32xf32>
    %458 = arith.addf %457, %13 : vector<8x32xf32>
    %cst_72 = arith.constant dense<0xFF800000> : vector<8xf32>
    %459 = vector.multi_reduction <maximumf>, %458, %cst_72 [1] : vector<8x32xf32> to vector<8xf32>
    %460 = vector.shape_cast %459 : vector<8xf32> to vector<8x1xf32>
    %461 = vector.broadcast %460 : vector<8x1xf32> to vector<8x32xf32>
    %462 = arith.cmpf oeq, %458, %461 : vector<8x32xf32>
    %c32_i32 = arith.constant 32 : i32
    %463 = vector.broadcast %c32_i32 : i32 to vector<8x32xi32>
    %464 = arith.select %462, %431, %463 : vector<8x32xi1>, vector<8x32xi32>
    %cst_73 = arith.constant dense<2147483647> : vector<8xi32>
    %465 = vector.multi_reduction <minsi>, %464, %cst_73 [1] : vector<8x32xi32> to vector<8xi32>
    %466 = vector.shape_cast %465 : vector<8xi32> to vector<8x1xi32>
    %467 = vector.shape_cast %466 : vector<8x1xi32> to vector<8xi32>
    %468 = vector.broadcast %466 : vector<8x1xi32> to vector<8x32xi32>
    %469 = arith.cmpi eq, %431, %468 : vector<8x32xi32>
    %470 = arith.extui %469 : vector<8x32xi1> to vector<8x32xi32>
    %471 = arith.sitofp %470 : vector<8x32xi32> to vector<8x32xf32>
    %472 = tpu.concatenate %471, %455 in 1 : vector<8x32xf32>, vector<8x32xf32> -> vector<8x64xf32>
    %473 = arith.truncf %472 : vector<8x64xf32> to vector<8x64xbf16>
    %cst_74 = arith.constant dense<0.000000e+00> : vector<8x128xf32>
    %474 = tpu.matmul %473, %3, %cst_74 {dimension_numbers = #tpu.dot_dimension_numbers<[1], [0], [0], [1], [0, 0, 1, 1], [], []>} : vector<8x64xbf16>, vector<64x128xbf16>, vector<8x128xf32> -> vector<8x128xf32>
    %475 = arith.addf %474, %367 : vector<8x128xf32>
    %476 = arith.negf %475 : vector<8x128xf32>
    %477 = math.exp %476 : vector<8x128xf32>
    %cst_75 = arith.constant 1.000000e+00 : f32
    %478 = vector.broadcast %cst_75 : f32 to vector<8x128xf32>
    %479 = arith.addf %478, %477 : vector<8x128xf32>
    %480 = arith.divf %478, %479 : vector<8x128xf32>
    %481 = math.tanh %475 : vector<8x128xf32>
    %482 = vector.extract_strided_slice %480 {offsets = [0, 0], sizes = [8, 32], strides = [1, 1]} : vector<8x128xf32> to vector<8x32xf32>
    %483 = vector.extract_strided_slice %480 {offsets = [0, 32], sizes = [8, 32], strides = [1, 1]} : vector<8x128xf32> to vector<8x32xf32>
    %484 = vector.extract_strided_slice %481 {offsets = [0, 64], sizes = [8, 32], strides = [1, 1]} : vector<8x128xf32> to vector<8x32xf32>
    %485 = vector.extract_strided_slice %480 {offsets = [0, 96], sizes = [8, 32], strides = [1, 1]} : vector<8x128xf32> to vector<8x32xf32>
    %486 = arith.mulf %483, %453 : vector<8x32xf32>
    %487 = arith.mulf %482, %484 : vector<8x32xf32>
    %488 = arith.addf %486, %487 : vector<8x32xf32>
    %489 = math.tanh %488 : vector<8x32xf32>
    %490 = arith.mulf %485, %489 : vector<8x32xf32>
    %491 = arith.truncf %490 : vector<8x32xf32> to vector<8x32xbf16>
    %cst_76 = arith.constant dense<0.000000e+00> : vector<8x32xf32>
    %492 = tpu.matmul %491, %4, %cst_76 {dimension_numbers = #tpu.dot_dimension_numbers<[1], [0], [0], [1], [0, 0, 1, 1], [], []>} : vector<8x32xbf16>, vector<32x32xbf16>, vector<8x32xf32> -> vector<8x32xf32>
    %493 = arith.addf %492, %13 : vector<8x32xf32>
    %cst_77 = arith.constant dense<0xFF800000> : vector<8xf32>
    %494 = vector.multi_reduction <maximumf>, %493, %cst_77 [1] : vector<8x32xf32> to vector<8xf32>
    %495 = vector.shape_cast %494 : vector<8xf32> to vector<8x1xf32>
    %496 = vector.broadcast %495 : vector<8x1xf32> to vector<8x32xf32>
    %497 = arith.cmpf oeq, %493, %496 : vector<8x32xf32>
    %c32_i32_78 = arith.constant 32 : i32
    %498 = vector.broadcast %c32_i32_78 : i32 to vector<8x32xi32>
    %499 = arith.select %497, %431, %498 : vector<8x32xi1>, vector<8x32xi32>
    %cst_79 = arith.constant dense<2147483647> : vector<8xi32>
    %500 = vector.multi_reduction <minsi>, %499, %cst_79 [1] : vector<8x32xi32> to vector<8xi32>
    %501 = vector.shape_cast %500 : vector<8xi32> to vector<8x1xi32>
    %502 = vector.shape_cast %501 : vector<8x1xi32> to vector<8xi32>
    %503 = vector.broadcast %501 : vector<8x1xi32> to vector<8x32xi32>
    %504 = arith.cmpi eq, %431, %503 : vector<8x32xi32>
    %505 = arith.extui %504 : vector<8x32xi1> to vector<8x32xi32>
    %506 = arith.sitofp %505 : vector<8x32xi32> to vector<8x32xf32>
    %507 = tpu.concatenate %506, %490 in 1 : vector<8x32xf32>, vector<8x32xf32> -> vector<8x64xf32>
    %508 = arith.truncf %507 : vector<8x64xf32> to vector<8x64xbf16>
    %cst_80 = arith.constant dense<0.000000e+00> : vector<8x128xf32>
    %509 = tpu.matmul %508, %3, %cst_80 {dimension_numbers = #tpu.dot_dimension_numbers<[1], [0], [0], [1], [0, 0, 1, 1], [], []>} : vector<8x64xbf16>, vector<64x128xbf16>, vector<8x128xf32> -> vector<8x128xf32>
    %510 = arith.addf %509, %388 : vector<8x128xf32>
    %511 = arith.negf %510 : vector<8x128xf32>
    %512 = math.exp %511 : vector<8x128xf32>
    %cst_81 = arith.constant 1.000000e+00 : f32
    %513 = vector.broadcast %cst_81 : f32 to vector<8x128xf32>
    %514 = arith.addf %513, %512 : vector<8x128xf32>
    %515 = arith.divf %513, %514 : vector<8x128xf32>
    %516 = math.tanh %510 : vector<8x128xf32>
    %517 = vector.extract_strided_slice %515 {offsets = [0, 0], sizes = [8, 32], strides = [1, 1]} : vector<8x128xf32> to vector<8x32xf32>
    %518 = vector.extract_strided_slice %515 {offsets = [0, 32], sizes = [8, 32], strides = [1, 1]} : vector<8x128xf32> to vector<8x32xf32>
    %519 = vector.extract_strided_slice %516 {offsets = [0, 64], sizes = [8, 32], strides = [1, 1]} : vector<8x128xf32> to vector<8x32xf32>
    %520 = vector.extract_strided_slice %515 {offsets = [0, 96], sizes = [8, 32], strides = [1, 1]} : vector<8x128xf32> to vector<8x32xf32>
    %521 = arith.mulf %518, %488 : vector<8x32xf32>
    %522 = arith.mulf %517, %519 : vector<8x32xf32>
    %523 = arith.addf %521, %522 : vector<8x32xf32>
    %524 = math.tanh %523 : vector<8x32xf32>
    %525 = arith.mulf %520, %524 : vector<8x32xf32>
    %526 = arith.truncf %525 : vector<8x32xf32> to vector<8x32xbf16>
    %cst_82 = arith.constant dense<0.000000e+00> : vector<8x32xf32>
    %527 = tpu.matmul %526, %4, %cst_82 {dimension_numbers = #tpu.dot_dimension_numbers<[1], [0], [0], [1], [0, 0, 1, 1], [], []>} : vector<8x32xbf16>, vector<32x32xbf16>, vector<8x32xf32> -> vector<8x32xf32>
    %528 = arith.addf %527, %13 : vector<8x32xf32>
    %cst_83 = arith.constant dense<0xFF800000> : vector<8xf32>
    %529 = vector.multi_reduction <maximumf>, %528, %cst_83 [1] : vector<8x32xf32> to vector<8xf32>
    %530 = vector.shape_cast %529 : vector<8xf32> to vector<8x1xf32>
    %531 = vector.broadcast %530 : vector<8x1xf32> to vector<8x32xf32>
    %532 = arith.cmpf oeq, %528, %531 : vector<8x32xf32>
    %c32_i32_84 = arith.constant 32 : i32
    %533 = vector.broadcast %c32_i32_84 : i32 to vector<8x32xi32>
    %534 = arith.select %532, %431, %533 : vector<8x32xi1>, vector<8x32xi32>
    %cst_85 = arith.constant dense<2147483647> : vector<8xi32>
    %535 = vector.multi_reduction <minsi>, %534, %cst_85 [1] : vector<8x32xi32> to vector<8xi32>
    %536 = vector.shape_cast %535 : vector<8xi32> to vector<8x1xi32>
    %537 = vector.shape_cast %536 : vector<8x1xi32> to vector<8xi32>
    %538 = vector.broadcast %536 : vector<8x1xi32> to vector<8x32xi32>
    %539 = arith.cmpi eq, %431, %538 : vector<8x32xi32>
    %540 = arith.extui %539 : vector<8x32xi1> to vector<8x32xi32>
    %541 = arith.sitofp %540 : vector<8x32xi32> to vector<8x32xf32>
    %542 = tpu.concatenate %541, %525 in 1 : vector<8x32xf32>, vector<8x32xf32> -> vector<8x64xf32>
    %543 = arith.truncf %542 : vector<8x64xf32> to vector<8x64xbf16>
    %cst_86 = arith.constant dense<0.000000e+00> : vector<8x128xf32>
    %544 = tpu.matmul %543, %3, %cst_86 {dimension_numbers = #tpu.dot_dimension_numbers<[1], [0], [0], [1], [0, 0, 1, 1], [], []>} : vector<8x64xbf16>, vector<64x128xbf16>, vector<8x128xf32> -> vector<8x128xf32>
    %545 = arith.addf %544, %409 : vector<8x128xf32>
    %546 = arith.negf %545 : vector<8x128xf32>
    %547 = math.exp %546 : vector<8x128xf32>
    %cst_87 = arith.constant 1.000000e+00 : f32
    %548 = vector.broadcast %cst_87 : f32 to vector<8x128xf32>
    %549 = arith.addf %548, %547 : vector<8x128xf32>
    %550 = arith.divf %548, %549 : vector<8x128xf32>
    %551 = math.tanh %545 : vector<8x128xf32>
    %552 = vector.extract_strided_slice %550 {offsets = [0, 0], sizes = [8, 32], strides = [1, 1]} : vector<8x128xf32> to vector<8x32xf32>
    %553 = vector.extract_strided_slice %550 {offsets = [0, 32], sizes = [8, 32], strides = [1, 1]} : vector<8x128xf32> to vector<8x32xf32>
    %554 = vector.extract_strided_slice %551 {offsets = [0, 64], sizes = [8, 32], strides = [1, 1]} : vector<8x128xf32> to vector<8x32xf32>
    %555 = vector.extract_strided_slice %550 {offsets = [0, 96], sizes = [8, 32], strides = [1, 1]} : vector<8x128xf32> to vector<8x32xf32>
    %556 = arith.mulf %553, %523 : vector<8x32xf32>
    %557 = arith.mulf %552, %554 : vector<8x32xf32>
    %558 = arith.addf %556, %557 : vector<8x32xf32>
    %559 = math.tanh %558 : vector<8x32xf32>
    %560 = arith.mulf %555, %559 : vector<8x32xf32>
    %561 = arith.truncf %560 : vector<8x32xf32> to vector<8x32xbf16>
    %cst_88 = arith.constant dense<0.000000e+00> : vector<8x32xf32>
    %562 = tpu.matmul %561, %4, %cst_88 {dimension_numbers = #tpu.dot_dimension_numbers<[1], [0], [0], [1], [0, 0, 1, 1], [], []>} : vector<8x32xbf16>, vector<32x32xbf16>, vector<8x32xf32> -> vector<8x32xf32>
    %563 = arith.addf %562, %13 : vector<8x32xf32>
    %cst_89 = arith.constant dense<0xFF800000> : vector<8xf32>
    %564 = vector.multi_reduction <maximumf>, %563, %cst_89 [1] : vector<8x32xf32> to vector<8xf32>
    %565 = vector.shape_cast %564 : vector<8xf32> to vector<8x1xf32>
    %566 = vector.broadcast %565 : vector<8x1xf32> to vector<8x32xf32>
    %567 = arith.cmpf oeq, %563, %566 : vector<8x32xf32>
    %c32_i32_90 = arith.constant 32 : i32
    %568 = vector.broadcast %c32_i32_90 : i32 to vector<8x32xi32>
    %569 = arith.select %567, %431, %568 : vector<8x32xi1>, vector<8x32xi32>
    %cst_91 = arith.constant dense<2147483647> : vector<8xi32>
    %570 = vector.multi_reduction <minsi>, %569, %cst_91 [1] : vector<8x32xi32> to vector<8xi32>
    %571 = vector.shape_cast %570 : vector<8xi32> to vector<8x1xi32>
    %572 = vector.shape_cast %571 : vector<8x1xi32> to vector<8xi32>
    %573 = vector.broadcast %571 : vector<8x1xi32> to vector<8x32xi32>
    %574 = arith.cmpi eq, %431, %573 : vector<8x32xi32>
    %575 = arith.extui %574 : vector<8x32xi1> to vector<8x32xi32>
    %576 = arith.sitofp %575 : vector<8x32xi32> to vector<8x32xf32>
    %577 = tpu.concatenate %576, %560 in 1 : vector<8x32xf32>, vector<8x32xf32> -> vector<8x64xf32>
    %578 = arith.truncf %577 : vector<8x64xf32> to vector<8x64xbf16>
    %cst_92 = arith.constant dense<0.000000e+00> : vector<8x128xf32>
    %579 = tpu.matmul %578, %3, %cst_92 {dimension_numbers = #tpu.dot_dimension_numbers<[1], [0], [0], [1], [0, 0, 1, 1], [], []>} : vector<8x64xbf16>, vector<64x128xbf16>, vector<8x128xf32> -> vector<8x128xf32>
    %580 = arith.addf %579, %430 : vector<8x128xf32>
    %581 = arith.negf %580 : vector<8x128xf32>
    %582 = math.exp %581 : vector<8x128xf32>
    %cst_93 = arith.constant 1.000000e+00 : f32
    %583 = vector.broadcast %cst_93 : f32 to vector<8x128xf32>
    %584 = arith.addf %583, %582 : vector<8x128xf32>
    %585 = arith.divf %583, %584 : vector<8x128xf32>
    %586 = math.tanh %580 : vector<8x128xf32>
    %587 = vector.extract_strided_slice %585 {offsets = [0, 0], sizes = [8, 32], strides = [1, 1]} : vector<8x128xf32> to vector<8x32xf32>
    %588 = vector.extract_strided_slice %585 {offsets = [0, 32], sizes = [8, 32], strides = [1, 1]} : vector<8x128xf32> to vector<8x32xf32>
    %589 = vector.extract_strided_slice %586 {offsets = [0, 64], sizes = [8, 32], strides = [1, 1]} : vector<8x128xf32> to vector<8x32xf32>
    %590 = vector.extract_strided_slice %585 {offsets = [0, 96], sizes = [8, 32], strides = [1, 1]} : vector<8x128xf32> to vector<8x32xf32>
    %591 = arith.mulf %588, %558 : vector<8x32xf32>
    %592 = arith.mulf %587, %589 : vector<8x32xf32>
    %593 = arith.addf %591, %592 : vector<8x32xf32>
    %594 = math.tanh %593 : vector<8x32xf32>
    %595 = arith.mulf %590, %594 : vector<8x32xf32>
    %596 = arith.truncf %595 : vector<8x32xf32> to vector<8x32xbf16>
    %cst_94 = arith.constant dense<0.000000e+00> : vector<8x32xf32>
    %597 = tpu.matmul %596, %4, %cst_94 {dimension_numbers = #tpu.dot_dimension_numbers<[1], [0], [0], [1], [0, 0, 1, 1], [], []>} : vector<8x32xbf16>, vector<32x32xbf16>, vector<8x32xf32> -> vector<8x32xf32>
    %598 = arith.addf %597, %13 : vector<8x32xf32>
    %cst_95 = arith.constant dense<0xFF800000> : vector<8xf32>
    %599 = vector.multi_reduction <maximumf>, %598, %cst_95 [1] : vector<8x32xf32> to vector<8xf32>
    %600 = vector.shape_cast %599 : vector<8xf32> to vector<8x1xf32>
    %601 = vector.broadcast %600 : vector<8x1xf32> to vector<8x32xf32>
    %602 = arith.cmpf oeq, %598, %601 : vector<8x32xf32>
    %c32_i32_96 = arith.constant 32 : i32
    %603 = vector.broadcast %c32_i32_96 : i32 to vector<8x32xi32>
    %604 = arith.select %602, %431, %603 : vector<8x32xi1>, vector<8x32xi32>
    %cst_97 = arith.constant dense<2147483647> : vector<8xi32>
    %605 = vector.multi_reduction <minsi>, %604, %cst_97 [1] : vector<8x32xi32> to vector<8xi32>
    %606 = vector.shape_cast %605 : vector<8xi32> to vector<8x1xi32>
    %607 = vector.shape_cast %606 : vector<8x1xi32> to vector<8xi32>
    %608 = vector.shape_cast %458 : vector<8x32xf32> to vector<1x8x32xf32>
    %609 = vector.shape_cast %493 : vector<8x32xf32> to vector<1x8x32xf32>
    %610 = vector.shape_cast %528 : vector<8x32xf32> to vector<1x8x32xf32>
    %611 = vector.shape_cast %563 : vector<8x32xf32> to vector<1x8x32xf32>
    %612 = vector.shape_cast %598 : vector<8x32xf32> to vector<1x8x32xf32>
    %613 = tpu.concatenate %608, %609, %610, %611, %612 in 0 : vector<1x8x32xf32>, vector<1x8x32xf32>, vector<1x8x32xf32>, vector<1x8x32xf32>, vector<1x8x32xf32> -> vector<5x8x32xf32>
    %c0_98 = arith.constant 0 : index
    %c0_99 = arith.constant 0 : index
    %c0_100 = arith.constant 0 : index
    %614 = vector.load %arg12[%c0_98, %c0_99, %c0_100] : memref<5x8x32xf32, #tpu.memory_space<vmem>>, vector<5x8x32xf32>
    tpu.vector_store %arg12[%c0_98, %c0_99, %c0_100], %613 {strides = array<i32>} : memref<5x8x32xf32, #tpu.memory_space<vmem>>, vector<5x8x32xf32>,
    %615 = vector.shape_cast %467 : vector<8xi32> to vector<1x8xi32>
    %616 = vector.shape_cast %502 : vector<8xi32> to vector<1x8xi32>
    %617 = vector.shape_cast %537 : vector<8xi32> to vector<1x8xi32>
    %618 = vector.shape_cast %572 : vector<8xi32> to vector<1x8xi32>
    %619 = vector.shape_cast %607 : vector<8xi32> to vector<1x8xi32>
    %620 = tpu.concatenate %615, %616, %617, %618, %619 in 0 : vector<1x8xi32>, vector<1x8xi32>, vector<1x8xi32>, vector<1x8xi32>, vector<1x8xi32> -> vector<5x8xi32>
    %c0_101 = arith.constant 0 : index
    %c0_102 = arith.constant 0 : index
    %621 = vector.load %arg11[%c0_101, %c0_102] : memref<5x8xi32, #tpu.memory_space<vmem>>, vector<5x8xi32>
    tpu.vector_store %arg11[%c0_101, %c0_102], %620 {strides = array<i32>} : memref<5x8xi32, #tpu.memory_space<vmem>>, vector<5x8xi32>,
    return
  }
}

</mosaic_0001>

<llo_original>
// kernel: seq2seq_forward.1
$region0: #{seq2seq_forward.1}
  #allocation0 [shape = 'u32[]', space=smem, size = 0x4, offset = 0x4, fixed_abs, tag = 'smem constant byte address 0x4 - core index']
  #allocation1 [shape = 'u32[144,128]{1,0:T(1,128)}', space=vmem, size = 0x12000, scoped, tag = 'internal scratch']
  %s0 = inlined_call_operand.vmem [shape: f32[64,64], index: 0, kind: input, shape index: {}]
  %s1 = inlined_call_operand.vmem [shape: bf16[64,128], index: 1, kind: input, shape index: {}]
  %s2 = inlined_call_operand.vmem [shape: f32[1,128], index: 2, kind: input, shape index: {}]
  %s3 = inlined_call_operand.vmem [shape: bf16[32,128], index: 3, kind: input, shape index: {}]
  %s4 = inlined_call_operand.vmem [shape: f32[1,128], index: 4, kind: input, shape index: {}]
  %s5 = inlined_call_operand.vmem [shape: bf16[64,128], index: 5, kind: input, shape index: {}]
  %s6 = inlined_call_operand.vmem [shape: bf16[32,128], index: 6, kind: input, shape index: {}]
  %s7 = inlined_call_operand.vmem [shape: bf16[64,128], index: 7, kind: input, shape index: {}]
  %s8 = inlined_call_operand.vmem [shape: f32[1,128], index: 8, kind: input, shape index: {}]
  %s9 = inlined_call_operand.vmem [shape: bf16[32,32], index: 9, kind: input, shape index: {}]
  %s10 = inlined_call_operand.vmem [shape: f32[1,32], index: 10, kind: input, shape index: {}]
  %s11 = inlined_call_operand.vmem [shape: s32[5,8], index: 11, kind: output, shape index: {0}]
  %s12 = inlined_call_operand.vmem [shape: f32[5,8,32], index: 12, kind: output, shape index: {1}]
  %13 = xla_tuple %s11, %s12
  %s14 = sld [smem:[#allocation0]]
  $region62: #{seq2seq_forward.1} parent=0
    _
  %s16 = ssub.s32 1, %s14
  %s17 = scalar_select 0, %s16, %s14
  // Predicated region
  $region2: #{seq2seq_forward.1} parent=0 // pred_check
    _
  $region3: #{seq2seq_forward.1} parent=0 // pred_check_branch
    %19 = sbr.rel (0) target = $region5
  $region4: #{seq2seq_forward.1} parent=0 // pred_region
    _
  $region5: #{seq2seq_forward.1} parent=0 // pred_fallthru
    _
  // Predicated region
  $region6: #{seq2seq_forward.1} parent=0 // pred_check
    _
  $region7: #{seq2seq_forward.1} parent=0 // pred_check_branch
    %21 = sbr.rel (0) target = $region9
  $region8: #{seq2seq_forward.1} parent=0 // pred_region
    _
  $region9: #{seq2seq_forward.1} parent=0 // pred_fallthru
    _
  // Predicated region
  $region10: #{seq2seq_forward.1} parent=0 // pred_check
    _
  $region11: #{seq2seq_forward.1} parent=0 // pred_check_branch
    %23 = sbr.rel (0) target = $region13
  $region12: #{seq2seq_forward.1} parent=0 // pred_region
    _
  $region13: #{seq2seq_forward.1} parent=0 // pred_fallthru
    _
  // Predicated region
  $region14: #{seq2seq_forward.1} parent=0 // pred_check
    _
  $region15: #{seq2seq_forward.1} parent=0 // pred_check_branch
    %25 = sbr.rel (0) target = $region17
  $region16: #{seq2seq_forward.1} parent=0 // pred_region
    _
  $region17: #{seq2seq_forward.1} parent=0 // pred_fallthru
    _
  // Predicated region
  $region18: #{seq2seq_forward.1} parent=0 // pred_check
    _
  $region19: #{seq2seq_forward.1} parent=0 // pred_check_branch
    %27 = sbr.rel (0) target = $region21
  $region20: #{seq2seq_forward.1} parent=0 // pred_region
    _
  $region21: #{seq2seq_forward.1} parent=0 // pred_fallthru
    _
  // Predicated region
  $region22: #{seq2seq_forward.1} parent=0 // pred_check
    _
  $region23: #{seq2seq_forward.1} parent=0 // pred_check_branch
    %29 = sbr.rel (0) target = $region25
  $region24: #{seq2seq_forward.1} parent=0 // pred_region
    _
  $region25: #{seq2seq_forward.1} parent=0 // pred_fallthru
    _
  // Predicated region
  $region26: #{seq2seq_forward.1} parent=0 // pred_check
    _
  $region27: #{seq2seq_forward.1} parent=0 // pred_check_branch
    %31 = sbr.rel (0) target = $region29
  $region28: #{seq2seq_forward.1} parent=0 // pred_region
    _
  $region29: #{seq2seq_forward.1} parent=0 // pred_fallthru
    _
  // Predicated region
  $region30: #{seq2seq_forward.1} parent=0 // pred_check
    _
  $region31: #{seq2seq_forward.1} parent=0 // pred_check_branch
    %33 = sbr.rel (0) target = $region33
  $region32: #{seq2seq_forward.1} parent=0 // pred_region
    _
  $region33: #{seq2seq_forward.1} parent=0 // pred_fallthru
    _
  // Predicated region
  $region34: #{seq2seq_forward.1} parent=0 // pred_check
    _
  $region35: #{seq2seq_forward.1} parent=0 // pred_check_branch
    %35 = sbr.rel (0) target = $region37
  $region36: #{seq2seq_forward.1} parent=0 // pred_region
    _
  $region37: #{seq2seq_forward.1} parent=0 // pred_fallthru
    _
  // Predicated region
  $region38: #{seq2seq_forward.1} parent=0 // pred_check
    _
  $region39: #{seq2seq_forward.1} parent=0 // pred_check_branch
    %37 = sbr.rel (0) target = $region41
  $region40: #{seq2seq_forward.1} parent=0 // pred_region
    _
  $region41: #{seq2seq_forward.1} parent=0 // pred_fallthru
    _
  // Predicated region
  $region42: #{seq2seq_forward.1} parent=0 // pred_check
    _
  $region43: #{seq2seq_forward.1} parent=0 // pred_check_branch
    %39 = sbr.rel (0) target = $region45
  $region44: #{seq2seq_forward.1} parent=0 // pred_region
    _
  $region45: #{seq2seq_forward.1} parent=0 // pred_fallthru
    _
  %v41 = vld [vmem:[%s3] sm:$0xf]
  %v42 = vld [vmem:[%s3 + $0x4] sm:$0xf]
  %v43 = vld [vmem:[%s3 + $0x8] sm:$0xf]
  %v44 = vld [vmem:[%s3 + $0xc] sm:$0xf]
  %v45 = vld [vmem:[%s5] sm:$0xf]
  %v46 = vld [vmem:[%s5 + $0x4] sm:$0xf]
  %v47 = vld [vmem:[%s5 + $0x8] sm:$0xf]
  %v48 = vld [vmem:[%s5 + $0xc] sm:$0xf]
  %v49 = vld [vmem:[%s5 + $0x10] sm:$0xf]
  %v50 = vld [vmem:[%s5 + $0x14] sm:$0xf]
  %v51 = vld [vmem:[%s5 + $0x18] sm:$0xf]
  %v52 = vld [vmem:[%s5 + $0x1c] sm:$0xf]
  %v53 = vld [vmem:[%s6] sm:$0xf]
  %v54 = vld [vmem:[%s6 + $0x4] sm:$0xf]
  %v55 = vld [vmem:[%s6 + $0x8] sm:$0xf]
  %v56 = vld [vmem:[%s6 + $0xc] sm:$0xf]
  %v57 = vld [vmem:[%s7] sm:$0xf]
  %v58 = vld [vmem:[%s7 + $0x4] sm:$0xf]
  %v59 = vld [vmem:[%s7 + $0x8] sm:$0xf]
  %v60 = vld [vmem:[%s7 + $0xc] sm:$0xf]
  %v61 = vld [vmem:[%s7 + $0x10] sm:$0xf]
  %v62 = vld [vmem:[%s7 + $0x14] sm:$0xf]
  %v63 = vld [vmem:[%s7 + $0x18] sm:$0xf]
  %v64 = vld [vmem:[%s7 + $0x1c] sm:$0xf]
  %v65 = vld [vmem:[%s9] sm:$0xf]
  %v66 = vld [vmem:[%s9 + $0x4] sm:$0xf]
  %v67 = vld [vmem:[%s9 + $0x8] sm:$0xf]
  %v68 = vld [vmem:[%s9 + $0xc] sm:$0xf]
  %v69 = vld [vmem:[%s4] sm:$0x1]
  %v71 = vlaneseq
  %v72 = vshrl.u32 %v71, 7
  %v73 = vsub.s32 0, %v72
  %v74 = vrot.slane %v69, %v73
  %v76 = vld [vmem:[%s8] sm:$0x1]
  %v78 = vlaneseq
  %v79 = vshrl.u32 %v78, 7
  %v80 = vsub.s32 0, %v79
  %v81 = vrot.slane %v76, %v80
  %v83 = vld [vmem:[%s10] sm:$0x1]
  %v85 = vlaneseq
  %v86 = vshrl.u32 %v85, 7
  %v87 = vsub.s32 0, %v86
  %v88 = vrot.slane %v83, %v87
  %v90 = vld [vmem:[%s0] sm:$0xff]
  %v91 = vld [vmem:[%s0 + $0x8] sm:$0xff]
  %v92 = vld [vmem:[%s0 + $0x10] sm:$0xff]
  %v93 = vld [vmem:[%s0 + $0x18] sm:$0xff]
  %v94 = vld [vmem:[%s0 + $0x20] sm:$0xff]
  %v95 = vld [vmem:[%s0 + $0x28] sm:$0xff]
  %v96 = vld [vmem:[%s0 + $0x30] sm:$0xff]
  %v97 = vld [vmem:[%s0 + $0x38] sm:$0xff]
  %v98 = vpack.c.bf16 %v91, %v90
  %v99 = vpack.c.bf16 %v93, %v92
  %v100 = vpack.c.bf16 %v95, %v94
  %v101 = vpack.c.bf16 %v97, %v96
  %v102 = vld [vmem:[%s1] sm:$0xf]
  %v103 = vld [vmem:[%s1 + $0x4] sm:$0xf]
  %v104 = vld [vmem:[%s1 + $0x8] sm:$0xf]
  %v105 = vld [vmem:[%s1 + $0xc] sm:$0xf]
  %v106 = vld [vmem:[%s1 + $0x10] sm:$0xf]
  %v107 = vld [vmem:[%s1 + $0x14] sm:$0xf]
  %v108 = vld [vmem:[%s1 + $0x18] sm:$0xf]
  %v109 = vld [vmem:[%s1 + $0x1c] sm:$0xf]
  %v110 = vld [vmem:[%s2] sm:$0x1]
  %v112 = vlaneseq
  %v113 = vshrl.u32 %v112, 7
  %v114 = vsub.s32 0, %v113
  %v115 = vrot.slane %v110, %v114
  %v125 = vunpack.c.l.b16 %v102
  %v126 = vunpack.c.l.b16 %v103
  %v127 = vunpack.c.l.b16 %v104
  %v128 = vunpack.c.l.b16 %v105
  %v129 = vunpack.c.l.b16 %v106
  %v130 = vunpack.c.l.b16 %v107
  %v131 = vunpack.c.l.b16 %v108
  %v132 = vunpack.c.l.b16 %v109
  %v133 = vpack.c.b16 %v126, %v125
  %v134 = vpack.c.b16 %v128, %v127
  %v135 = vpack.c.b16 %v130, %v129
  %v136 = vpack.c.b16 %v132, %v131
  %vm141 = vcmask 523264
  %v143 = vsel %vm141, %v98, 0
  %v146 = vsel %vm141, %v99, 0
  %v149 = vsel %vm141, %v100, 0
  %v152 = vsel %vm141, %v101, 0
  %154 = vmatprep.subr.bf16.mxu0 0
  %155 = vmatpush1.bf16.msra.mxu0 0
  %156 = vmatprep.subr.bf16.mxu0 0
  %157 = vmatpush1.bf16.msra.mxu0 0
  %158 = vmatprep.subr.bf16.mxu0 0
  %159 = vmatpush1.bf16.msra.mxu0 0
  %160 = vmatprep.subr.bf16.mxu0 0
  %161 = vmatpush1.bf16.msra.mxu0 0
  %162 = vmatprep.subr.bf16.mxu0 0
  %163 = vmatpush1.bf16.msra.mxu0 %v136
  %164 = vmatprep.subr.bf16.mxu0 0
  %165 = vmatpush1.bf16.msra.mxu0 %v135
  %166 = vmatprep.subr.bf16.mxu0 0
  %167 = vmatpush1.bf16.msra.mxu0 %v134
  %168 = vmatprep.subr.bf16.mxu0 0
  %169 = vmatpush1.bf16.msra.mxu0 %v133
  %170 = vmatprep.subr.bf16.mxu0 0
  %171 = vmatpush2.bf16.msra.mxu0 0
  %172 = vmatprep.subr.bf16.mxu0 0
  %173 = vmatpush2.bf16.msra.mxu0 0
  %174 = vmatprep.subr.bf16.mxu0 0
  %175 = vmatpush2.bf16.msra.mxu0 0
  %176 = vmatprep.subr.bf16.mxu0 0
  %177 = vmatpush2.bf16.msra.mxu0 0
  %178 = vmatprep.subr.bf16.mxu0 0
  %179 = vmatpush2.bf16.msra.mxu0 0
  %180 = vmatprep.subr.bf16.mxu0 0
  %181 = vmatpush2.bf16.msra.mxu0 0
  %182 = vmatprep.subr.bf16.mxu0 0
  %183 = vmatpush2.bf16.msra.mxu0 0
  %184 = vmatprep.subr.bf16.mxu0 0
  %185 = vmatpush2.bf16.msra.mxu0 0
  %186 = vmatprep.mubr.bf16.mxu0 0
  %187 = vmatmul.mubr.bf16.gmra.mxu0 %v143
  %v188 = vpop.f32.mrf.mxu0
  %v189 = vadd.f32 %v115, %v188
  %v190 = vpop.f32.mrf.mxu0
  %v191 = vpop.f32.mrf.mxu0
  %v192 = vadd.f32 %v115, %v191
  %v193 = vpop.f32.mrf.mxu0
  %194 = vmatprep.mubr.bf16.mxu0 0
  %195 = vmatmul.mubr.bf16.gmra.mxu0 %v146
  %v196 = vpop.f32.mrf.mxu0
  %v197 = vadd.f32 %v115, %v196
  %v198 = vpop.f32.mrf.mxu0
  %v199 = vpop.f32.mrf.mxu0
  %v200 = vadd.f32 %v115, %v199
  %v201 = vpop.f32.mrf.mxu0
  %202 = vmatprep.mubr.bf16.mxu0 0
  %203 = vmatmul.mubr.bf16.gmra.mxu0 %v149
  %v204 = vpop.f32.mrf.mxu0
  %v205 = vadd.f32 %v115, %v204
  %v206 = vpop.f32.mrf.mxu0
  %v207 = vpop.f32.mrf.mxu0
  %v208 = vadd.f32 %v115, %v207
  %v209 = vpop.f32.mrf.mxu0
  %210 = vmatprep.mubr.bf16.mxu0 0
  %211 = vmatmul.mubr.bf16.gmra.mxu0 %v152
  %v212 = vpop.f32.mrf.mxu0
  %v213 = vadd.f32 %v115, %v212
  %v214 = vpop.f32.mrf.mxu0
  %v215 = vpop.f32.mrf.mxu0
  %v216 = vadd.f32 %v115, %v215
  %v217 = vpop.f32.mrf.mxu0
  %218 = vdwg.mxu0
  %v223 = vunpack.c.l.b16 %v41
  %v224 = vunpack.c.l.b16 %v42
  %v225 = vunpack.c.l.b16 %v43
  %v226 = vunpack.c.l.b16 %v44
  %v227 = vpack.c.b16 %v224, %v223
  %v228 = vpack.c.b16 %v226, %v225
  %vm231 = vcmask 261120
  %v233 = vsel %vm231, 0, 0
  %235 = vmatprep.subr.bf16.mxu0 0
  %236 = vmatpush1.bf16.msra.mxu0 0
  %237 = vmatprep.subr.bf16.mxu0 0
  %238 = vmatpush1.bf16.msra.mxu0 0
  %239 = vmatprep.subr.bf16.mxu0 0
  %240 = vmatpush1.bf16.msra.mxu0 0
  %241 = vmatprep.subr.bf16.mxu0 0
  %242 = vmatpush1.bf16.msra.mxu0 0
  %243 = vmatprep.subr.bf16.mxu0 0
  %244 = vmatpush1.bf16.msra.mxu0 0
  %245 = vmatprep.subr.bf16.mxu0 0
  %246 = vmatpush1.bf16.msra.mxu0 0
  %247 = vmatprep.subr.bf16.mxu0 0
  %248 = vmatpush1.bf16.msra.mxu0 %v228
  %249 = vmatprep.subr.bf16.mxu0 0
  %250 = vmatpush1.bf16.msra.mxu0 %v227
  %251 = vmatprep.subr.bf16.mxu0 0
  %252 = vmatpush2.bf16.msra.mxu0 0
  %253 = vmatprep.subr.bf16.mxu0 0
  %254 = vmatpush2.bf16.msra.mxu0 0
  %255 = vmatprep.subr.bf16.mxu0 0
  %256 = vmatpush2.bf16.msra.mxu0 0
  %257 = vmatprep.subr.bf16.mxu0 0
  %258 = vmatpush2.bf16.msra.mxu0 0
  %259 = vmatprep.subr.bf16.mxu0 0
  %260 = vmatpush2.bf16.msra.mxu0 0
  %261 = vmatprep.subr.bf16.mxu0 0
  %262 = vmatpush2.bf16.msra.mxu0 0
  %263 = vmatprep.subr.bf16.mxu0 0
  %264 = vmatpush2.bf16.msra.mxu0 0
  %265 = vmatprep.subr.bf16.mxu0 0
  %266 = vmatpush2.bf16.msra.mxu0 0
  %267 = vmatprep.mubr.bf16.mxu0 0
  %268 = vmatmul.mubr.bf16.gmra.mxu0 %v233
  %v269 = vpop.f32.mrf.mxu0
  %v270 = vadd.f32 0.0, %v269
  %v271 = vpop.f32.mrf.mxu0
  %v272 = vpop.f32.mrf.mxu0
  %v273 = vpop.f32.mrf.mxu0
  %274 = vdwg.mxu0
  %v275 = vadd.f32 %v189, %v270
  %v276 = vxor.u32 %v275, 2147483648
  %v277 = vmul.f32 %v276, 1.442695
  %v278 = vpow.pop %v277
  %v279 = vadd.f32 %v278, 1.0
  %v280 = vrcp.pop %v279
  %v281 = vmul.f32 1.0, %v280
  %v282 = vtanh.pop %v275
  %v283 = vmul.f32 %v281, 0.0
  %285 = vrot.lane.b32.xlu0 %v282, 64
  %v286 = vpop.permute.xlu0 %285
  %v288 = vmul.f32 %v281, %v286
  %290 = vrot.lane.b32.xlu0 %v288, 32
  %v291 = vpop.permute.xlu0 %290
  %v293 = vadd.f32 %v283, %v291
  %v294 = vtanh.pop %v293
  %296 = vrot.lane.b32.xlu0 %v294, 64
  %v297 = vpop.permute.xlu0 %296
  %v299 = vmul.f32 %v281, %v297
  %301 = vrot.lane.b32.xlu0 %v299, 32
  %v302 = vpop.permute.xlu0 %301
  %v304 = vsel %vm231, %v302, 0.0
  %v305 = vpack.c.bf16 %v304, %v304
  %v314 = vunpack.c.l.b16 %v45
  %v315 = vunpack.c.l.b16 %v46
  %v316 = vunpack.c.l.b16 %v47
  %v317 = vunpack.c.l.b16 %v48
  %v318 = vunpack.c.l.b16 %v49
  %v319 = vunpack.c.l.b16 %v50
  %v320 = vunpack.c.l.b16 %v51
  %v321 = vunpack.c.l.b16 %v52
  %v322 = vpack.c.b16 %v315, %v314
  %v323 = vpack.c.b16 %v317, %v316
  %v324 = vpack.c.b16 %v319, %v318
  %v325 = vpack.c.b16 %v321, %v320
  %v331 = vsel %vm141, %v305, 0
  %333 = vmatprep.subr.bf16.mxu0 0
  %334 = vmatpush1.bf16.msra.mxu0 0
  %335 = vmatprep.subr.bf16.mxu0 0
  %336 = vmatpush1.bf16.msra.mxu0 0
  %337 = vmatprep.subr.bf16.mxu0 0
  %338 = vmatpush1.bf16.msra.mxu0 0
  %339 = vmatprep.subr.bf16.mxu0 0
  %340 = vmatpush1.bf16.msra.mxu0 0
  %341 = vmatprep.subr.bf16.mxu0 0
  %342 = vmatpush1.bf16.msra.mxu0 %v325
  %343 = vmatprep.subr.bf16.mxu0 0
  %344 = vmatpush1.bf16.msra.mxu0 %v324
  %345 = vmatprep.subr.bf16.mxu0 0
  %346 = vmatpush1.bf16.msra.mxu0 %v323
  %347 = vmatprep.subr.bf16.mxu0 0
  %348 = vmatpush1.bf16.msra.mxu0 %v322
  %349 = vmatprep.subr.bf16.mxu0 0
  %350 = vmatpush2.bf16.msra.mxu0 0
  %351 = vmatprep.subr.bf16.mxu0 0
  %352 = vmatpush2.bf16.msra.mxu0 0
  %353 = vmatprep.subr.bf16.mxu0 0
  %354 = vmatpush2.bf16.msra.mxu0 0
  %355 = vmatprep.subr.bf16.mxu0 0
  %356 = vmatpush2.bf16.msra.mxu0 0
  %357 = vmatprep.subr.bf16.mxu0 0
  %358 = vmatpush2.bf16.msra.mxu0 0
  %359 = vmatprep.subr.bf16.mxu0 0
  %360 = vmatpush2.bf16.msra.mxu0 0
  %361 = vmatprep.subr.bf16.mxu0 0
  %362 = vmatpush2.bf16.msra.mxu0 0
  %363 = vmatprep.subr.bf16.mxu0 0
  %364 = vmatpush2.bf16.msra.mxu0 0
  %365 = vmatprep.mubr.bf16.mxu0 0
  %366 = vmatmul.mubr.bf16.gmra.mxu0 %v331
  %v367 = vpop.f32.mrf.mxu0
  %v368 = vadd.f32 %v81, %v367
  %v369 = vpop.f32.mrf.mxu0
  %v370 = vpop.f32.mrf.mxu0
  %v371 = vpop.f32.mrf.mxu0
  %372 = vdwg.mxu0
  %v373 = vxor.u32 %v368, 2147483648
  %v374 = vmul.f32 %v373, 1.442695
  %v375 = vpow.pop %v374
  %v376 = vadd.f32 %v375, 1.0
  %v377 = vrcp.pop %v376
  %v378 = vmul.f32 1.0, %v377
  %v379 = vtanh.pop %v368
  %v380 = vmul.f32 %v378, 0.0
  %382 = vrot.lane.b32.xlu0 %v379, 64
  %v383 = vpop.permute.xlu0 %382
  %v385 = vmul.f32 %v378, %v383
  %387 = vrot.lane.b32.xlu0 %v385, 32
  %v388 = vpop.permute.xlu0 %387
  %v390 = vadd.f32 %v380, %v388
  %v391 = vtanh.pop %v390
  %393 = vrot.lane.b32.xlu0 %v391, 64
  %v394 = vpop.permute.xlu0 %393
  %v396 = vmul.f32 %v378, %v394
  %v397 = vpack.c.bf16 %v299, %v299
  %399 = vrot.lane.b32.xlu0 %v397, 32
  %v400 = vpop.permute.xlu0 %399
  %v402 = vsel %vm231, %v400, 0
  %404 = vmatprep.subr.bf16.mxu0 0
  %405 = vmatpush1.bf16.msra.mxu0 0
  %406 = vmatprep.subr.bf16.mxu0 0
  %407 = vmatpush1.bf16.msra.mxu0 0
  %408 = vmatprep.subr.bf16.mxu0 0
  %409 = vmatpush1.bf16.msra.mxu0 0
  %410 = vmatprep.subr.bf16.mxu0 0
  %411 = vmatpush1.bf16.msra.mxu0 0
  %412 = vmatprep.subr.bf16.mxu0 0
  %413 = vmatpush1.bf16.msra.mxu0 0
  %414 = vmatprep.subr.bf16.mxu0 0
  %415 = vmatpush1.bf16.msra.mxu0 0
  %416 = vmatprep.subr.bf16.mxu0 0
  %417 = vmatpush1.bf16.msra.mxu0 %v228
  %418 = vmatprep.subr.bf16.mxu0 0
  %419 = vmatpush1.bf16.msra.mxu0 %v227
  %420 = vmatprep.subr.bf16.mxu0 0
  %421 = vmatpush2.bf16.msra.mxu0 0
  %422 = vmatprep.subr.bf16.mxu0 0
  %423 = vmatpush2.bf16.msra.mxu0 0
  %424 = vmatprep.subr.bf16.mxu0 0
  %425 = vmatpush2.bf16.msra.mxu0 0
  %426 = vmatprep.subr.bf16.mxu0 0
  %427 = vmatpush2.bf16.msra.mxu0 0
  %428 = vmatprep.subr.bf16.mxu0 0
  %429 = vmatpush2.bf16.msra.mxu0 0
  %430 = vmatprep.subr.bf16.mxu0 0
  %431 = vmatpush2.bf16.msra.mxu0 0
  %432 = vmatprep.subr.bf16.mxu0 0
  %433 = vmatpush2.bf16.msra.mxu0 0
  %434 = vmatprep.subr.bf16.mxu0 0
  %435 = vmatpush2.bf16.msra.mxu0 0
  %436 = vmatprep.mubr.bf16.mxu0 0
  %437 = vmatmul.mubr.bf16.gmra.mxu0 %v402
  %v438 = vpop.f32.mrf.mxu0
  %v439 = vadd.f32 0.0, %v438
  %v440 = vpop.f32.mrf.mxu0
  %v441 = vpop.f32.mrf.mxu0
  %v442 = vpop.f32.mrf.mxu0
  %443 = vdwg.mxu0
  %v444 = vadd.f32 %v192, %v439
  %v445 = vxor.u32 %v444, 2147483648
  %v446 = vmul.f32 %v445, 1.442695
  %v447 = vpow.pop %v446
  %v448 = vadd.f32 %v447, 1.0
  %v449 = vrcp.pop %v448
  %v450 = vmul.f32 1.0, %v449
  %v451 = vtanh.pop %v444
  %v452 = vmul.f32 %v450, %v293
  %454 = vrot.lane.b32.xlu0 %v451, 64
  %v455 = vpop.permute.xlu0 %454
  %v457 = vmul.f32 %v450, %v455
  %459 = vrot.lane.b32.xlu0 %v457, 32
  %v460 = vpop.permute.xlu0 %459
  %v462 = vadd.f32 %v452, %v460
  %v463 = vtanh.pop %v462
  %465 = vrot.lane.b32.xlu0 %v463, 64
  %v466 = vpop.permute.xlu0 %465
  %v468 = vmul.f32 %v450, %v466
  %470 = vrot.lane.b32.xlu0 %v468, 32
  %v471 = vpop.permute.xlu0 %470
  %474 = vrot.lane.b32.xlu0 %v396, 64
  %v475 = vpop.permute.xlu0 %474
  %v477 = vsel %vm231, %v471, %v475
  %v478 = vpack.c.bf16 %v477, %v477
  %v480 = vsel %vm141, %v478, 0
  %482 = vmatprep.subr.bf16.mxu0 0
  %483 = vmatpush1.bf16.msra.mxu0 0
  %484 = vmatprep.subr.bf16.mxu0 0
  %485 = vmatpush1.bf16.msra.mxu0 0
  %486 = vmatprep.subr.bf16.mxu0 0
  %487 = vmatpush1.bf16.msra.mxu0 0
  %488 = vmatprep.subr.bf16.mxu0 0
  %489 = vmatpush1.bf16.msra.mxu0 0
  %490 = vmatprep.subr.bf16.mxu0 0
  %491 = vmatpush1.bf16.msra.mxu0 %v325
  %492 = vmatprep.subr.bf16.mxu0 0
  %493 = vmatpush1.bf16.msra.mxu0 %v324
  %494 = vmatprep.subr.bf16.mxu0 0
  %495 = vmatpush1.bf16.msra.mxu0 %v323
  %496 = vmatprep.subr.bf16.mxu0 0
  %497 = vmatpush1.bf16.msra.mxu0 %v322
  %498 = vmatprep.subr.bf16.mxu0 0
  %499 = vmatpush2.bf16.msra.mxu0 0
  %500 = vmatprep.subr.bf16.mxu0 0
  %501 = vmatpush2.bf16.msra.mxu0 0
  %502 = vmatprep.subr.bf16.mxu0 0
  %503 = vmatpush2.bf16.msra.mxu0 0
  %504 = vmatprep.subr.bf16.mxu0 0
  %505 = vmatpush2.bf16.msra.mxu0 0
  %506 = vmatprep.subr.bf16.mxu0 0
  %507 = vmatpush2.bf16.msra.mxu0 0
  %508 = vmatprep.subr.bf16.mxu0 0
  %509 = vmatpush2.bf16.msra.mxu0 0
  %510 = vmatprep.subr.bf16.mxu0 0
  %511 = vmatpush2.bf16.msra.mxu0 0
  %512 = vmatprep.subr.bf16.mxu0 0
  %513 = vmatpush2.bf16.msra.mxu0 0
  %514 = vmatprep.mubr.bf16.mxu0 0
  %515 = vmatmul.mubr.bf16.gmra.mxu0 %v480
  %v516 = vpop.f32.mrf.mxu0
  %v517 = vadd.f32 %v81, %v516
  %v518 = vpop.f32.mrf.mxu0
  %v519 = vpop.f32.mrf.mxu0
  %v520 = vpop.f32.mrf.mxu0
  %521 = vdwg.mxu0
  %v522 = vxor.u32 %v517, 2147483648
  %v523 = vmul.f32 %v522, 1.442695
  %v524 = vpow.pop %v523
  %v525 = vadd.f32 %v524, 1.0
  %v526 = vrcp.pop %v525
  %v527 = vmul.f32 1.0, %v526
  %v528 = vtanh.pop %v517
  %v529 = vmul.f32 %v527, %v390
  %531 = vrot.lane.b32.xlu0 %v528, 64
  %v532 = vpop.permute.xlu0 %531
  %v534 = vmul.f32 %v527, %v532
  %536 = vrot.lane.b32.xlu0 %v534, 32
  %v537 = vpop.permute.xlu0 %536
  %v539 = vadd.f32 %v529, %v537
  %v540 = vtanh.pop %v539
  %542 = vrot.lane.b32.xlu0 %v540, 64
  %v543 = vpop.permute.xlu0 %542
  %v545 = vmul.f32 %v527, %v543
  %v546 = vpack.c.bf16 %v468, %v468
  %548 = vrot.lane.b32.xlu0 %v546, 32
  %v549 = vpop.permute.xlu0 %548
  %v551 = vsel %vm231, %v549, 0
  %553 = vmatprep.subr.bf16.mxu0 0
  %554 = vmatpush1.bf16.msra.mxu0 0
  %555 = vmatprep.subr.bf16.mxu0 0
  %556 = vmatpush1.bf16.msra.mxu0 0
  %557 = vmatprep.subr.bf16.mxu0 0
  %558 = vmatpush1.bf16.msra.mxu0 0
  %559 = vmatprep.subr.bf16.mxu0 0
  %560 = vmatpush1.bf16.msra.mxu0 0
  %561 = vmatprep.subr.bf16.mxu0 0
  %562 = vmatpush1.bf16.msra.mxu0 0
  %563 = vmatprep.subr.bf16.mxu0 0
  %564 = vmatpush1.bf16.msra.mxu0 0
  %565 = vmatprep.subr.bf16.mxu0 0
  %566 = vmatpush1.bf16.msra.mxu0 %v228
  %567 = vmatprep.subr.bf16.mxu0 0
  %568 = vmatpush1.bf16.msra.mxu0 %v227
  %569 = vmatprep.subr.bf16.mxu0 0
  %570 = vmatpush2.bf16.msra.mxu0 0
  %571 = vmatprep.subr.bf16.mxu0 0
  %572 = vmatpush2.bf16.msra.mxu0 0
  %573 = vmatprep.subr.bf16.mxu0 0
  %574 = vmatpush2.bf16.msra.mxu0 0
  %575 = vmatprep.subr.bf16.mxu0 0
  %576 = vmatpush2.bf16.msra.mxu0 0
  %577 = vmatprep.subr.bf16.mxu0 0
  %578 = vmatpush2.bf16.msra.mxu0 0
  %579 = vmatprep.subr.bf16.mxu0 0
  %580 = vmatpush2.bf16.msra.mxu0 0
  %581 = vmatprep.subr.bf16.mxu0 0
  %582 = vmatpush2.bf16.msra.mxu0 0
  %583 = vmatprep.subr.bf16.mxu0 0
  %584 = vmatpush2.bf16.msra.mxu0 0
  %585 = vmatprep.mubr.bf16.mxu0 0
  %586 = vmatmul.mubr.bf16.gmra.mxu0 %v551
  %v587 = vpop.f32.mrf.mxu0
  %v588 = vadd.f32 0.0, %v587
  %v589 = vpop.f32.mrf.mxu0
  %v590 = vpop.f32.mrf.mxu0
  %v591 = vpop.f32.mrf.mxu0
  %592 = vdwg.mxu0
  %v593 = vadd.f32 %v197, %v588
  %v594 = vxor.u32 %v593, 2147483648
  %v595 = vmul.f32 %v594, 1.442695
  %v596 = vpow.pop %v595
  %v597 = vadd.f32 %v596, 1.0
  %v598 = vrcp.pop %v597
  %v599 = vmul.f32 1.0, %v598
  %v600 = vtanh.pop %v593
  %v601 = vmul.f32 %v599, %v462
  %603 = vrot.lane.b32.xlu0 %v600, 64
  %v604 = vpop.permute.xlu0 %603
  %v606 = vmul.f32 %v599, %v604
  %608 = vrot.lane.b32.xlu0 %v606, 32
  %v609 = vpop.permute.xlu0 %608
  %v611 = vadd.f32 %v601, %v609
  %v612 = vtanh.pop %v611
  %614 = vrot.lane.b32.xlu0 %v612, 64
  %v615 = vpop.permute.xlu0 %614
  %v617 = vmul.f32 %v599, %v615
  %619 = vrot.lane.b32.xlu0 %v617, 32
  %v620 = vpop.permute.xlu0 %619
  %623 = vrot.lane.b32.xlu0 %v545, 64
  %v624 = vpop.permute.xlu0 %623
  %v626 = vsel %vm231, %v620, %v624
  %v627 = vpack.c.bf16 %v626, %v626
  %v629 = vsel %vm141, %v627, 0
  %631 = vmatprep.subr.bf16.mxu0 0
  %632 = vmatpush1.bf16.msra.mxu0 0
  %633 = vmatprep.subr.bf16.mxu0 0
  %634 = vmatpush1.bf16.msra.mxu0 0
  %635 = vmatprep.subr.bf16.mxu0 0
  %636 = vmatpush1.bf16.msra.mxu0 0
  %637 = vmatprep.subr.bf16.mxu0 0
  %638 = vmatpush1.bf16.msra.mxu0 0
  %639 = vmatprep.subr.bf16.mxu0 0
  %640 = vmatpush1.bf16.msra.mxu0 %v325
  %641 = vmatprep.subr.bf16.mxu0 0
  %642 = vmatpush1.bf16.msra.mxu0 %v324
  %643 = vmatprep.subr.bf16.mxu0 0
  %644 = vmatpush1.bf16.msra.mxu0 %v323
  %645 = vmatprep.subr.bf16.mxu0 0
  %646 = vmatpush1.bf16.msra.mxu0 %v322
  %647 = vmatprep.subr.bf16.mxu0 0
  %648 = vmatpush2.bf16.msra.mxu0 0
  %649 = vmatprep.subr.bf16.mxu0 0
  %650 = vmatpush2.bf16.msra.mxu0 0
  %651 = vmatprep.subr.bf16.mxu0 0
  %652 = vmatpush2.bf16.msra.mxu0 0
  %653 = vmatprep.subr.bf16.mxu0 0
  %654 = vmatpush2.bf16.msra.mxu0 0
  %655 = vmatprep.subr.bf16.mxu0 0
  %656 = vmatpush2.bf16.msra.mxu0 0
  %657 = vmatprep.subr.bf16.mxu0 0
  %658 = vmatpush2.bf16.msra.mxu0 0
  %659 = vmatprep.subr.bf16.mxu0 0
  %660 = vmatpush2.bf16.msra.mxu0 0
  %661 = vmatprep.subr.bf16.mxu0 0
  %662 = vmatpush2.bf16.msra.mxu0 0
  %663 = vmatprep.mubr.bf16.mxu0 0
  %664 = vmatmul.mubr.bf16.gmra.mxu0 %v629
  %v665 = vpop.f32.mrf.mxu0
  %v666 = vadd.f32 %v81, %v665
  %v667 = vpop.f32.mrf.mxu0
  %v668 = vpop.f32.mrf.mxu0
  %v669 = vpop.f32.mrf.mxu0
  %670 = vdwg.mxu0
  %v671 = vxor.u32 %v666, 2147483648
  %v672 = vmul.f32 %v671, 1.442695
  %v673 = vpow.pop %v672
  %v674 = vadd.f32 %v673, 1.0
  %v675 = vrcp.pop %v674
  %v676 = vmul.f32 1.0, %v675
  %v677 = vtanh.pop %v666
  %v678 = vmul.f32 %v676, %v539
  %680 = vrot.lane.b32.xlu0 %v677, 64
  %v681 = vpop.permute.xlu0 %680
  %v683 = vmul.f32 %v676, %v681
  %685 = vrot.lane.b32.xlu0 %v683, 32
  %v686 = vpop.permute.xlu0 %685
  %v688 = vadd.f32 %v678, %v686
  %v689 = vtanh.pop %v688
  %691 = vrot.lane.b32.xlu0 %v689, 64
  %v692 = vpop.permute.xlu0 %691
  %v694 = vmul.f32 %v676, %v692
  %v695 = vpack.c.bf16 %v617, %v617
  %697 = vrot.lane.b32.xlu0 %v695, 32
  %v698 = vpop.permute.xlu0 %697
  %v700 = vsel %vm231, %v698, 0
  %702 = vmatprep.subr.bf16.mxu0 0
  %703 = vmatpush1.bf16.msra.mxu0 0
  %704 = vmatprep.subr.bf16.mxu0 0
  %705 = vmatpush1.bf16.msra.mxu0 0
  %706 = vmatprep.subr.bf16.mxu0 0
  %707 = vmatpush1.bf16.msra.mxu0 0
  %708 = vmatprep.subr.bf16.mxu0 0
  %709 = vmatpush1.bf16.msra.mxu0 0
  %710 = vmatprep.subr.bf16.mxu0 0
  %711 = vmatpush1.bf16.msra.mxu0 0
  %712 = vmatprep.subr.bf16.mxu0 0
  %713 = vmatpush1.bf16.msra.mxu0 0
  %714 = vmatprep.subr.bf16.mxu0 0
  %715 = vmatpush1.bf16.msra.mxu0 %v228
  %716 = vmatprep.subr.bf16.mxu0 0
  %717 = vmatpush1.bf16.msra.mxu0 %v227
  %718 = vmatprep.subr.bf16.mxu0 0
  %719 = vmatpush2.bf16.msra.mxu0 0
  %720 = vmatprep.subr.bf16.mxu0 0
  %721 = vmatpush2.bf16.msra.mxu0 0
  %722 = vmatprep.subr.bf16.mxu0 0
  %723 = vmatpush2.bf16.msra.mxu0 0
  %724 = vmatprep.subr.bf16.mxu0 0
  %725 = vmatpush2.bf16.msra.mxu0 0
  %726 = vmatprep.subr.bf16.mxu0 0
  %727 = vmatpush2.bf16.msra.mxu0 0
  %728 = vmatprep.subr.bf16.mxu0 0
  %729 = vmatpush2.bf16.msra.mxu0 0
  %730 = vmatprep.subr.bf16.mxu0 0
  %731 = vmatpush2.bf16.msra.mxu0 0
  %732 = vmatprep.subr.bf16.mxu0 0
  %733 = vmatpush2.bf16.msra.mxu0 0
  %734 = vmatprep.mubr.bf16.mxu0 0
  %735 = vmatmul.mubr.bf16.gmra.mxu0 %v700
  %v736 = vpop.f32.mrf.mxu0
  %v737 = vadd.f32 0.0, %v736
  %v738 = vpop.f32.mrf.mxu0
  %v739 = vpop.f32.mrf.mxu0
  %v740 = vpop.f32.mrf.mxu0
  %741 = vdwg.mxu0
  %v742 = vadd.f32 %v200, %v737
  %v743 = vxor.u32 %v742, 2147483648
  %v744 = vmul.f32 %v743, 1.442695
  %v745 = vpow.pop %v744
  %v746 = vadd.f32 %v745, 1.0
  %v747 = vrcp.pop %v746
  %v748 = vmul.f32 1.0, %v747
  %v749 = vtanh.pop %v742
  %v750 = vmul.f32 %v748, %v611
  %752 = vrot.lane.b32.xlu0 %v749, 64
  %v753 = vpop.permute.xlu0 %752
  %v755 = vmul.f32 %v748, %v753
  %757 = vrot.lane.b32.xlu0 %v755, 32
  %v758 = vpop.permute.xlu0 %757
  %v760 = vadd.f32 %v750, %v758
  %v761 = vtanh.pop %v760
  %763 = vrot.lane.b32.xlu0 %v761, 64
  %v764 = vpop.permute.xlu0 %763
  %v766 = vmul.f32 %v748, %v764
  %768 = vrot.lane.b32.xlu0 %v766, 32
  %v769 = vpop.permute.xlu0 %768
  %772 = vrot.lane.b32.xlu0 %v694, 64
  %v773 = vpop.permute.xlu0 %772
  %v775 = vsel %vm231, %v769, %v773
  %v776 = vpack.c.bf16 %v775, %v775
  %v778 = vsel %vm141, %v776, 0
  %780 = vmatprep.subr.bf16.mxu0 0
  %781 = vmatpush1.bf16.msra.mxu0 0
  %782 = vmatprep.subr.bf16.mxu0 0
  %783 = vmatpush1.bf16.msra.mxu0 0
  %784 = vmatprep.subr.bf16.mxu0 0
  %785 = vmatpush1.bf16.msra.mxu0 0
  %786 = vmatprep.subr.bf16.mxu0 0
  %787 = vmatpush1.bf16.msra.mxu0 0
  %788 = vmatprep.subr.bf16.mxu0 0
  %789 = vmatpush1.bf16.msra.mxu0 %v325
  %790 = vmatprep.subr.bf16.mxu0 0
  %791 = vmatpush1.bf16.msra.mxu0 %v324
  %792 = vmatprep.subr.bf16.mxu0 0
  %793 = vmatpush1.bf16.msra.mxu0 %v323
  %794 = vmatprep.subr.bf16.mxu0 0
  %795 = vmatpush1.bf16.msra.mxu0 %v322
  %796 = vmatprep.subr.bf16.mxu0 0
  %797 = vmatpush2.bf16.msra.mxu0 0
  %798 = vmatprep.subr.bf16.mxu0 0
  %799 = vmatpush2.bf16.msra.mxu0 0
  %800 = vmatprep.subr.bf16.mxu0 0
  %801 = vmatpush2.bf16.msra.mxu0 0
  %802 = vmatprep.subr.bf16.mxu0 0
  %803 = vmatpush2.bf16.msra.mxu0 0
  %804 = vmatprep.subr.bf16.mxu0 0
  %805 = vmatpush2.bf16.msra.mxu0 0
  %806 = vmatprep.subr.bf16.mxu0 0
  %807 = vmatpush2.bf16.msra.mxu0 0
  %808 = vmatprep.subr.bf16.mxu0 0
  %809 = vmatpush2.bf16.msra.mxu0 0
  %810 = vmatprep.subr.bf16.mxu0 0
  %811 = vmatpush2.bf16.msra.mxu0 0
  %812 = vmatprep.mubr.bf16.mxu0 0
  %813 = vmatmul.mubr.bf16.gmra.mxu0 %v778
  %v814 = vpop.f32.mrf.mxu0
  %v815 = vadd.f32 %v81, %v814
  %v816 = vpop.f32.mrf.mxu0
  %v817 = vpop.f32.mrf.mxu0
  %v818 = vpop.f32.mrf.mxu0
  %819 = vdwg.mxu0
  %v820 = vxor.u32 %v815, 2147483648
  %v821 = vmul.f32 %v820, 1.442695
  %v822 = vpow.pop %v821
  %v823 = vadd.f32 %v822, 1.0
  %v824 = vrcp.pop %v823
  %v825 = vmul.f32 1.0, %v824
  %v826 = vtanh.pop %v815
  %v827 = vmul.f32 %v825, %v688
  %829 = vrot.lane.b32.xlu0 %v826, 64
  %v830 = vpop.permute.xlu0 %829
  %v832 = vmul.f32 %v825, %v830
  %834 = vrot.lane.b32.xlu0 %v832, 32
  %v835 = vpop.permute.xlu0 %834
  %v837 = vadd.f32 %v827, %v835
  %v838 = vtanh.pop %v837
  %840 = vrot.lane.b32.xlu0 %v838, 64
  %v841 = vpop.permute.xlu0 %840
  %v843 = vmul.f32 %v825, %v841
  %v844 = vpack.c.bf16 %v766, %v766
  %846 = vrot.lane.b32.xlu0 %v844, 32
  %v847 = vpop.permute.xlu0 %846
  %v849 = vsel %vm231, %v847, 0
  %851 = vmatprep.subr.bf16.mxu0 0
  %852 = vmatpush1.bf16.msra.mxu0 0
  %853 = vmatprep.subr.bf16.mxu0 0
  %854 = vmatpush1.bf16.msra.mxu0 0
  %855 = vmatprep.subr.bf16.mxu0 0
  %856 = vmatpush1.bf16.msra.mxu0 0
  %857 = vmatprep.subr.bf16.mxu0 0
  %858 = vmatpush1.bf16.msra.mxu0 0
  %859 = vmatprep.subr.bf16.mxu0 0
  %860 = vmatpush1.bf16.msra.mxu0 0
  %861 = vmatprep.subr.bf16.mxu0 0
  %862 = vmatpush1.bf16.msra.mxu0 0
  %863 = vmatprep.subr.bf16.mxu0 0
  %864 = vmatpush1.bf16.msra.mxu0 %v228
  %865 = vmatprep.subr.bf16.mxu0 0
  %866 = vmatpush1.bf16.msra.mxu0 %v227
  %867 = vmatprep.subr.bf16.mxu0 0
  %868 = vmatpush2.bf16.msra.mxu0 0
  %869 = vmatprep.subr.bf16.mxu0 0
  %870 = vmatpush2.bf16.msra.mxu0 0
  %871 = vmatprep.subr.bf16.mxu0 0
  %872 = vmatpush2.bf16.msra.mxu0 0
  %873 = vmatprep.subr.bf16.mxu0 0
  %874 = vmatpush2.bf16.msra.mxu0 0
  %875 = vmatprep.subr.bf16.mxu0 0
  %876 = vmatpush2.bf16.msra.mxu0 0
  %877 = vmatprep.subr.bf16.mxu0 0
  %878 = vmatpush2.bf16.msra.mxu0 0
  %879 = vmatprep.subr.bf16.mxu0 0
  %880 = vmatpush2.bf16.msra.mxu0 0
  %881 = vmatprep.subr.bf16.mxu0 0
  %882 = vmatpush2.bf16.msra.mxu0 0
  %883 = vmatprep.mubr.bf16.mxu0 0
  %884 = vmatmul.mubr.bf16.gmra.mxu0 %v849
  %v885 = vpop.f32.mrf.mxu0
  %v886 = vadd.f32 0.0, %v885
  %v887 = vpop.f32.mrf.mxu0
  %v888 = vpop.f32.mrf.mxu0
  %v889 = vpop.f32.mrf.mxu0
  %890 = vdwg.mxu0
  %v891 = vadd.f32 %v205, %v886
  %v892 = vxor.u32 %v891, 2147483648
  %v893 = vmul.f32 %v892, 1.442695
  %v894 = vpow.pop %v893
  %v895 = vadd.f32 %v894, 1.0
  %v896 = vrcp.pop %v895
  %v897 = vmul.f32 1.0, %v896
  %v898 = vtanh.pop %v891
  %v899 = vmul.f32 %v897, %v760
  %901 = vrot.lane.b32.xlu0 %v898, 64
  %v902 = vpop.permute.xlu0 %901
  %v904 = vmul.f32 %v897, %v902
  %906 = vrot.lane.b32.xlu0 %v904, 32
  %v907 = vpop.permute.xlu0 %906
  %v909 = vadd.f32 %v899, %v907
  %v910 = vtanh.pop %v909
  %912 = vrot.lane.b32.xlu0 %v910, 64
  %v913 = vpop.permute.xlu0 %912
  %v915 = vmul.f32 %v897, %v913
  %917 = vrot.lane.b32.xlu0 %v915, 32
  %v918 = vpop.permute.xlu0 %917
  %921 = vrot.lane.b32.xlu0 %v843, 64
  %v922 = vpop.permute.xlu0 %921
  %v924 = vsel %vm231, %v918, %v922
  %v925 = vpack.c.bf16 %v924, %v924
  %v927 = vsel %vm141, %v925, 0
  %929 = vmatprep.subr.bf16.mxu0 0
  %930 = vmatpush1.bf16.msra.mxu0 0
  %931 = vmatprep.subr.bf16.mxu0 0
  %932 = vmatpush1.bf16.msra.mxu0 0
  %933 = vmatprep.subr.bf16.mxu0 0
  %934 = vmatpush1.bf16.msra.mxu0 0
  %935 = vmatprep.subr.bf16.mxu0 0
  %936 = vmatpush1.bf16.msra.mxu0 0
  %937 = vmatprep.subr.bf16.mxu0 0
  %938 = vmatpush1.bf16.msra.mxu0 %v325
  %939 = vmatprep.subr.bf16.mxu0 0
  %940 = vmatpush1.bf16.msra.mxu0 %v324
  %941 = vmatprep.subr.bf16.mxu0 0
  %942 = vmatpush1.bf16.msra.mxu0 %v323
  %943 = vmatprep.subr.bf16.mxu0 0
  %944 = vmatpush1.bf16.msra.mxu0 %v322
  %945 = vmatprep.subr.bf16.mxu0 0
  %946 = vmatpush2.bf16.msra.mxu0 0
  %947 = vmatprep.subr.bf16.mxu0 0
  %948 = vmatpush2.bf16.msra.mxu0 0
  %949 = vmatprep.subr.bf16.mxu0 0
  %950 = vmatpush2.bf16.msra.mxu0 0
  %951 = vmatprep.subr.bf16.mxu0 0
  %952 = vmatpush2.bf16.msra.mxu0 0
  %953 = vmatprep.subr.bf16.mxu0 0
  %954 = vmatpush2.bf16.msra.mxu0 0
  %955 = vmatprep.subr.bf16.mxu0 0
  %956 = vmatpush2.bf16.msra.mxu0 0
  %957 = vmatprep.subr.bf16.mxu0 0
  %958 = vmatpush2.bf16.msra.mxu0 0
  %959 = vmatprep.subr.bf16.mxu0 0
  %960 = vmatpush2.bf16.msra.mxu0 0
  %961 = vmatprep.mubr.bf16.mxu0 0
  %962 = vmatmul.mubr.bf16.gmra.mxu0 %v927
  %v963 = vpop.f32.mrf.mxu0
  %v964 = vadd.f32 %v81, %v963
  %v965 = vpop.f32.mrf.mxu0
  %v966 = vpop.f32.mrf.mxu0
  %v967 = vpop.f32.mrf.mxu0
  %968 = vdwg.mxu0
  %v969 = vxor.u32 %v964, 2147483648
  %v970 = vmul.f32 %v969, 1.442695
  %v971 = vpow.pop %v970
  %v972 = vadd.f32 %v971, 1.0
  %v973 = vrcp.pop %v972
  %v974 = vmul.f32 1.0, %v973
  %v975 = vtanh.pop %v964
  %v976 = vmul.f32 %v974, %v837
  %978 = vrot.lane.b32.xlu0 %v975, 64
  %v979 = vpop.permute.xlu0 %978
  %v981 = vmul.f32 %v974, %v979
  %983 = vrot.lane.b32.xlu0 %v981, 32
  %v984 = vpop.permute.xlu0 %983
  %v986 = vadd.f32 %v976, %v984
  %v987 = vtanh.pop %v986
  %989 = vrot.lane.b32.xlu0 %v987, 64
  %v990 = vpop.permute.xlu0 %989
  %v992 = vmul.f32 %v974, %v990
  %v993 = vpack.c.bf16 %v915, %v915
  %995 = vrot.lane.b32.xlu0 %v993, 32
  %v996 = vpop.permute.xlu0 %995
  %v998 = vsel %vm231, %v996, 0
  %1000 = vmatprep.subr.bf16.mxu0 0
  %1001 = vmatpush1.bf16.msra.mxu0 0
  %1002 = vmatprep.subr.bf16.mxu0 0
  %1003 = vmatpush1.bf16.msra.mxu0 0
  %1004 = vmatprep.subr.bf16.mxu0 0
  %1005 = vmatpush1.bf16.msra.mxu0 0
  %1006 = vmatprep.subr.bf16.mxu0 0
  %1007 = vmatpush1.bf16.msra.mxu0 0
  %1008 = vmatprep.subr.bf16.mxu0 0
  %1009 = vmatpush1.bf16.msra.mxu0 0
  %1010 = vmatprep.subr.bf16.mxu0 0
  %1011 = vmatpush1.bf16.msra.mxu0 0
  %1012 = vmatprep.subr.bf16.mxu0 0
  %1013 = vmatpush1.bf16.msra.mxu0 %v228
  %1014 = vmatprep.subr.bf16.mxu0 0
  %1015 = vmatpush1.bf16.msra.mxu0 %v227
  %1016 = vmatprep.subr.bf16.mxu0 0
  %1017 = vmatpush2.bf16.msra.mxu0 0
  %1018 = vmatprep.subr.bf16.mxu0 0
  %1019 = vmatpush2.bf16.msra.mxu0 0
  %1020 = vmatprep.subr.bf16.mxu0 0
  %1021 = vmatpush2.bf16.msra.mxu0 0
  %1022 = vmatprep.subr.bf16.mxu0 0
  %1023 = vmatpush2.bf16.msra.mxu0 0
  %1024 = vmatprep.subr.bf16.mxu0 0
  %1025 = vmatpush2.bf16.msra.mxu0 0
  %1026 = vmatprep.subr.bf16.mxu0 0
  %1027 = vmatpush2.bf16.msra.mxu0 0
  %1028 = vmatprep.subr.bf16.mxu0 0
  %1029 = vmatpush2.bf16.msra.mxu0 0
  %1030 = vmatprep.subr.bf16.mxu0 0
  %1031 = vmatpush2.bf16.msra.mxu0 0
  %1032 = vmatprep.mubr.bf16.mxu0 0
  %1033 = vmatmul.mubr.bf16.gmra.mxu0 %v998
  %v1034 = vpop.f32.mrf.mxu0
  %v1035 = vadd.f32 0.0, %v1034
  %v1036 = vpop.f32.mrf.mxu0
  %v1037 = vpop.f32.mrf.mxu0
  %v1038 = vpop.f32.mrf.mxu0
  %1039 = vdwg.mxu0
  %v1040 = vadd.f32 %v208, %v1035
  %v1041 = vxor.u32 %v1040, 2147483648
  %v1042 = vmul.f32 %v1041, 1.442695
  %v1043 = vpow.pop %v1042
  %v1044 = vadd.f32 %v1043, 1.0
  %v1045 = vrcp.pop %v1044
  %v1046 = vmul.f32 1.0, %v1045
  %v1047 = vtanh.pop %v1040
  %v1048 = vmul.f32 %v1046, %v909
  %1050 = vrot.lane.b32.xlu0 %v1047, 64
  %v1051 = vpop.permute.xlu0 %1050
  %v1053 = vmul.f32 %v1046, %v1051
  %1055 = vrot.lane.b32.xlu0 %v1053, 32
  %v1056 = vpop.permute.xlu0 %1055
  %v1058 = vadd.f32 %v1048, %v1056
  %v1059 = vtanh.pop %v1058
  %1061 = vrot.lane.b32.xlu0 %v1059, 64
  %v1062 = vpop.permute.xlu0 %1061
  %v1064 = vmul.f32 %v1046, %v1062
  %1066 = vrot.lane.b32.xlu0 %v1064, 32
  %v1067 = vpop.permute.xlu0 %1066
  %1070 = vrot.lane.b32.xlu0 %v992, 64
  %v1071 = vpop.permute.xlu0 %1070
  %v1073 = vsel %vm231, %v1067, %v1071
  %v1074 = vpack.c.bf16 %v1073, %v1073
  %v1076 = vsel %vm141, %v1074, 0
  %1078 = vmatprep.subr.bf16.mxu0 0
  %1079 = vmatpush1.bf16.msra.mxu0 0
  %1080 = vmatprep.subr.bf16.mxu0 0
  %1081 = vmatpush1.bf16.msra.mxu0 0
  %1082 = vmatprep.subr.bf16.mxu0 0
  %1083 = vmatpush1.bf16.msra.mxu0 0
  %1084 = vmatprep.subr.bf16.mxu0 0
  %1085 = vmatpush1.bf16.msra.mxu0 0
  %1086 = vmatprep.subr.bf16.mxu0 0
  %1087 = vmatpush1.bf16.msra.mxu0 %v325
  %1088 = vmatprep.subr.bf16.mxu0 0
  %1089 = vmatpush1.bf16.msra.mxu0 %v324
  %1090 = vmatprep.subr.bf16.mxu0 0
  %1091 = vmatpush1.bf16.msra.mxu0 %v323
  %1092 = vmatprep.subr.bf16.mxu0 0
  %1093 = vmatpush1.bf16.msra.mxu0 %v322
  %1094 = vmatprep.subr.bf16.mxu0 0
  %1095 = vmatpush2.bf16.msra.mxu0 0
  %1096 = vmatprep.subr.bf16.mxu0 0
  %1097 = vmatpush2.bf16.msra.mxu0 0
  %1098 = vmatprep.subr.bf16.mxu0 0
  %1099 = vmatpush2.bf16.msra.mxu0 0
  %1100 = vmatprep.subr.bf16.mxu0 0
  %1101 = vmatpush2.bf16.msra.mxu0 0
  %1102 = vmatprep.subr.bf16.mxu0 0
  %1103 = vmatpush2.bf16.msra.mxu0 0
  %1104 = vmatprep.subr.bf16.mxu0 0
  %1105 = vmatpush2.bf16.msra.mxu0 0
  %1106 = vmatprep.subr.bf16.mxu0 0
  %1107 = vmatpush2.bf16.msra.mxu0 0
  %1108 = vmatprep.subr.bf16.mxu0 0
  %1109 = vmatpush2.bf16.msra.mxu0 0
  %1110 = vmatprep.mubr.bf16.mxu0 0
  %1111 = vmatmul.mubr.bf16.gmra.mxu0 %v1076
  %v1112 = vpop.f32.mrf.mxu0
  %v1113 = vadd.f32 %v81, %v1112
  %v1114 = vpop.f32.mrf.mxu0
  %v1115 = vpop.f32.mrf.mxu0
  %v1116 = vpop.f32.mrf.mxu0
  %1117 = vdwg.mxu0
  %v1118 = vxor.u32 %v1113, 2147483648
  %v1119 = vmul.f32 %v1118, 1.442695
  %v1120 = vpow.pop %v1119
  %v1121 = vadd.f32 %v1120, 1.0
  %v1122 = vrcp.pop %v1121
  %v1123 = vmul.f32 1.0, %v1122
  %v1124 = vtanh.pop %v1113
  %v1125 = vmul.f32 %v1123, %v986
  %1127 = vrot.lane.b32.xlu0 %v1124, 64
  %v1128 = vpop.permute.xlu0 %1127
  %v1130 = vmul.f32 %v1123, %v1128
  %1132 = vrot.lane.b32.xlu0 %v1130, 32
  %v1133 = vpop.permute.xlu0 %1132
  %v1135 = vadd.f32 %v1125, %v1133
  %v1136 = vtanh.pop %v1135
  %1138 = vrot.lane.b32.xlu0 %v1136, 64
  %v1139 = vpop.permute.xlu0 %1138
  %v1141 = vmul.f32 %v1123, %v1139
  %v1142 = vpack.c.bf16 %v1064, %v1064
  %1144 = vrot.lane.b32.xlu0 %v1142, 32
  %v1145 = vpop.permute.xlu0 %1144
  %v1147 = vsel %vm231, %v1145, 0
  %1149 = vmatprep.subr.bf16.mxu0 0
  %1150 = vmatpush1.bf16.msra.mxu0 0
  %1151 = vmatprep.subr.bf16.mxu0 0
  %1152 = vmatpush1.bf16.msra.mxu0 0
  %1153 = vmatprep.subr.bf16.mxu0 0
  %1154 = vmatpush1.bf16.msra.mxu0 0
  %1155 = vmatprep.subr.bf16.mxu0 0
  %1156 = vmatpush1.bf16.msra.mxu0 0
  %1157 = vmatprep.subr.bf16.mxu0 0
  %1158 = vmatpush1.bf16.msra.mxu0 0
  %1159 = vmatprep.subr.bf16.mxu0 0
  %1160 = vmatpush1.bf16.msra.mxu0 0
  %1161 = vmatprep.subr.bf16.mxu0 0
  %1162 = vmatpush1.bf16.msra.mxu0 %v228
  %1163 = vmatprep.subr.bf16.mxu0 0
  %1164 = vmatpush1.bf16.msra.mxu0 %v227
  %1165 = vmatprep.subr.bf16.mxu0 0
  %1166 = vmatpush2.bf16.msra.mxu0 0
  %1167 = vmatprep.subr.bf16.mxu0 0
  %1168 = vmatpush2.bf16.msra.mxu0 0
  %1169 = vmatprep.subr.bf16.mxu0 0
  %1170 = vmatpush2.bf16.msra.mxu0 0
  %1171 = vmatprep.subr.bf16.mxu0 0
  %1172 = vmatpush2.bf16.msra.mxu0 0
  %1173 = vmatprep.subr.bf16.mxu0 0
  %1174 = vmatpush2.bf16.msra.mxu0 0
  %1175 = vmatprep.subr.bf16.mxu0 0
  %1176 = vmatpush2.bf16.msra.mxu0 0
  %1177 = vmatprep.subr.bf16.mxu0 0
  %1178 = vmatpush2.bf16.msra.mxu0 0
  %1179 = vmatprep.subr.bf16.mxu0 0
  %1180 = vmatpush2.bf16.msra.mxu0 0
  %1181 = vmatprep.mubr.bf16.mxu0 0
  %1182 = vmatmul.mubr.bf16.gmra.mxu0 %v1147
  %v1183 = vpop.f32.mrf.mxu0
  %v1184 = vadd.f32 0.0, %v1183
  %v1185 = vpop.f32.mrf.mxu0
  %v1186 = vpop.f32.mrf.mxu0
  %v1187 = vpop.f32.mrf.mxu0
  %1188 = vdwg.mxu0
  %v1189 = vadd.f32 %v213, %v1184
  %v1190 = vxor.u32 %v1189, 2147483648
  %v1191 = vmul.f32 %v1190, 1.442695
  %v1192 = vpow.pop %v1191
  %v1193 = vadd.f32 %v1192, 1.0
  %v1194 = vrcp.pop %v1193
  %v1195 = vmul.f32 1.0, %v1194
  %v1196 = vtanh.pop %v1189
  %v1197 = vmul.f32 %v1195, %v1058
  %1199 = vrot.lane.b32.xlu0 %v1196, 64
  %v1200 = vpop.permute.xlu0 %1199
  %v1202 = vmul.f32 %v1195, %v1200
  %1204 = vrot.lane.b32.xlu0 %v1202, 32
  %v1205 = vpop.permute.xlu0 %1204
  %v1207 = vadd.f32 %v1197, %v1205
  %v1208 = vtanh.pop %v1207
  %1210 = vrot.lane.b32.xlu0 %v1208, 64
  %v1211 = vpop.permute.xlu0 %1210
  %v1213 = vmul.f32 %v1195, %v1211
  %1215 = vrot.lane.b32.xlu0 %v1213, 32
  %v1216 = vpop.permute.xlu0 %1215
  %1219 = vrot.lane.b32.xlu0 %v1141, 64
  %v1220 = vpop.permute.xlu0 %1219
  %v1222 = vsel %vm231, %v1216, %v1220
  %v1223 = vpack.c.bf16 %v1222, %v1222
  %v1225 = vsel %vm141, %v1223, 0
  %1227 = vmatprep.subr.bf16.mxu0 0
  %1228 = vmatpush1.bf16.msra.mxu0 0
  %1229 = vmatprep.subr.bf16.mxu0 0
  %1230 = vmatpush1.bf16.msra.mxu0 0
  %1231 = vmatprep.subr.bf16.mxu0 0
  %1232 = vmatpush1.bf16.msra.mxu0 0
  %1233 = vmatprep.subr.bf16.mxu0 0
  %1234 = vmatpush1.bf16.msra.mxu0 0
  %1235 = vmatprep.subr.bf16.mxu0 0
  %1236 = vmatpush1.bf16.msra.mxu0 %v325
  %1237 = vmatprep.subr.bf16.mxu0 0
  %1238 = vmatpush1.bf16.msra.mxu0 %v324
  %1239 = vmatprep.subr.bf16.mxu0 0
  %1240 = vmatpush1.bf16.msra.mxu0 %v323
  %1241 = vmatprep.subr.bf16.mxu0 0
  %1242 = vmatpush1.bf16.msra.mxu0 %v322
  %1243 = vmatprep.subr.bf16.mxu0 0
  %1244 = vmatpush2.bf16.msra.mxu0 0
  %1245 = vmatprep.subr.bf16.mxu0 0
  %1246 = vmatpush2.bf16.msra.mxu0 0
  %1247 = vmatprep.subr.bf16.mxu0 0
  %1248 = vmatpush2.bf16.msra.mxu0 0
  %1249 = vmatprep.subr.bf16.mxu0 0
  %1250 = vmatpush2.bf16.msra.mxu0 0
  %1251 = vmatprep.subr.bf16.mxu0 0
  %1252 = vmatpush2.bf16.msra.mxu0 0
  %1253 = vmatprep.subr.bf16.mxu0 0
  %1254 = vmatpush2.bf16.msra.mxu0 0
  %1255 = vmatprep.subr.bf16.mxu0 0
  %1256 = vmatpush2.bf16.msra.mxu0 0
  %1257 = vmatprep.subr.bf16.mxu0 0
  %1258 = vmatpush2.bf16.msra.mxu0 0
  %1259 = vmatprep.mubr.bf16.mxu0 0
  %1260 = vmatmul.mubr.bf16.gmra.mxu0 %v1225
  %v1261 = vpop.f32.mrf.mxu0
  %v1262 = vadd.f32 %v81, %v1261
  %v1263 = vpop.f32.mrf.mxu0
  %v1264 = vpop.f32.mrf.mxu0
  %v1265 = vpop.f32.mrf.mxu0
  %1266 = vdwg.mxu0
  %v1267 = vxor.u32 %v1262, 2147483648
  %v1268 = vmul.f32 %v1267, 1.442695
  %v1269 = vpow.pop %v1268
  %v1270 = vadd.f32 %v1269, 1.0
  %v1271 = vrcp.pop %v1270
  %v1272 = vmul.f32 1.0, %v1271
  %v1273 = vtanh.pop %v1262
  %v1274 = vmul.f32 %v1272, %v1135
  %1276 = vrot.lane.b32.xlu0 %v1273, 64
  %v1277 = vpop.permute.xlu0 %1276
  %v1279 = vmul.f32 %v1272, %v1277
  %1281 = vrot.lane.b32.xlu0 %v1279, 32
  %v1282 = vpop.permute.xlu0 %1281
  %v1284 = vadd.f32 %v1274, %v1282
  %v1285 = vtanh.pop %v1284
  %1287 = vrot.lane.b32.xlu0 %v1285, 64
  %v1288 = vpop.permute.xlu0 %1287
  %v1290 = vmul.f32 %v1272, %v1288
  %v1291 = vpack.c.bf16 %v1213, %v1213
  %1293 = vrot.lane.b32.xlu0 %v1291, 32
  %v1294 = vpop.permute.xlu0 %1293
  %v1296 = vsel %vm231, %v1294, 0
  %1298 = vmatprep.subr.bf16.mxu0 0
  %1299 = vmatpush1.bf16.msra.mxu0 0
  %1300 = vmatprep.subr.bf16.mxu0 0
  %1301 = vmatpush1.bf16.msra.mxu0 0
  %1302 = vmatprep.subr.bf16.mxu0 0
  %1303 = vmatpush1.bf16.msra.mxu0 0
  %1304 = vmatprep.subr.bf16.mxu0 0
  %1305 = vmatpush1.bf16.msra.mxu0 0
  %1306 = vmatprep.subr.bf16.mxu0 0
  %1307 = vmatpush1.bf16.msra.mxu0 0
  %1308 = vmatprep.subr.bf16.mxu0 0
  %1309 = vmatpush1.bf16.msra.mxu0 0
  %1310 = vmatprep.subr.bf16.mxu0 0
  %1311 = vmatpush1.bf16.msra.mxu0 %v228
  %1312 = vmatprep.subr.bf16.mxu0 0
  %1313 = vmatpush1.bf16.msra.mxu0 %v227
  %1314 = vmatprep.subr.bf16.mxu0 0
  %1315 = vmatpush2.bf16.msra.mxu0 0
  %1316 = vmatprep.subr.bf16.mxu0 0
  %1317 = vmatpush2.bf16.msra.mxu0 0
  %1318 = vmatprep.subr.bf16.mxu0 0
  %1319 = vmatpush2.bf16.msra.mxu0 0
  %1320 = vmatprep.subr.bf16.mxu0 0
  %1321 = vmatpush2.bf16.msra.mxu0 0
  %1322 = vmatprep.subr.bf16.mxu0 0
  %1323 = vmatpush2.bf16.msra.mxu0 0
  %1324 = vmatprep.subr.bf16.mxu0 0
  %1325 = vmatpush2.bf16.msra.mxu0 0
  %1326 = vmatprep.subr.bf16.mxu0 0
  %1327 = vmatpush2.bf16.msra.mxu0 0
  %1328 = vmatprep.subr.bf16.mxu0 0
  %1329 = vmatpush2.bf16.msra.mxu0 0
  %1330 = vmatprep.mubr.bf16.mxu0 0
  %1331 = vmatmul.mubr.bf16.gmra.mxu0 %v1296
  %v1332 = vpop.f32.mrf.mxu0
  %v1333 = vadd.f32 0.0, %v1332
  %v1334 = vpop.f32.mrf.mxu0
  %v1335 = vpop.f32.mrf.mxu0
  %v1336 = vpop.f32.mrf.mxu0
  %1337 = vdwg.mxu0
  %v1338 = vadd.f32 %v216, %v1333
  %v1339 = vxor.u32 %v1338, 2147483648
  %v1340 = vmul.f32 %v1339, 1.442695
  %v1341 = vpow.pop %v1340
  %v1342 = vadd.f32 %v1341, 1.0
  %v1343 = vrcp.pop %v1342
  %v1344 = vmul.f32 1.0, %v1343
  %v1345 = vtanh.pop %v1338
  %v1346 = vmul.f32 %v1344, %v1207
  %1348 = vrot.lane.b32.xlu0 %v1345, 64
  %v1349 = vpop.permute.xlu0 %1348
  %v1351 = vmul.f32 %v1344, %v1349
  %1353 = vrot.lane.b32.xlu0 %v1351, 32
  %v1354 = vpop.permute.xlu0 %1353
  %v1356 = vadd.f32 %v1346, %v1354
  %v1357 = vtanh.pop %v1356
  %1359 = vrot.lane.b32.xlu0 %v1357, 64
  %v1360 = vpop.permute.xlu0 %1359
  %v1362 = vmul.f32 %v1344, %v1360
  %1364 = vrot.lane.b32.xlu0 %v1362, 32
  %v1365 = vpop.permute.xlu0 %1364
  %1368 = vrot.lane.b32.xlu0 %v1290, 64
  %v1369 = vpop.permute.xlu0 %1368
  %v1371 = vsel %vm231, %v1365, %v1369
  %v1372 = vpack.c.bf16 %v1371, %v1371
  %v1374 = vsel %vm141, %v1372, 0
  %1376 = vmatprep.subr.bf16.mxu0 0
  %1377 = vmatpush1.bf16.msra.mxu0 0
  %1378 = vmatprep.subr.bf16.mxu0 0
  %1379 = vmatpush1.bf16.msra.mxu0 0
  %1380 = vmatprep.subr.bf16.mxu0 0
  %1381 = vmatpush1.bf16.msra.mxu0 0
  %1382 = vmatprep.subr.bf16.mxu0 0
  %1383 = vmatpush1.bf16.msra.mxu0 0
  %1384 = vmatprep.subr.bf16.mxu0 0
  %1385 = vmatpush1.bf16.msra.mxu0 %v325
  %1386 = vmatprep.subr.bf16.mxu0 0
  %1387 = vmatpush1.bf16.msra.mxu0 %v324
  %1388 = vmatprep.subr.bf16.mxu0 0
  %1389 = vmatpush1.bf16.msra.mxu0 %v323
  %1390 = vmatprep.subr.bf16.mxu0 0
  %1391 = vmatpush1.bf16.msra.mxu0 %v322
  %1392 = vmatprep.subr.bf16.mxu0 0
  %1393 = vmatpush2.bf16.msra.mxu0 0
  %1394 = vmatprep.subr.bf16.mxu0 0
  %1395 = vmatpush2.bf16.msra.mxu0 0
  %1396 = vmatprep.subr.bf16.mxu0 0
  %1397 = vmatpush2.bf16.msra.mxu0 0
  %1398 = vmatprep.subr.bf16.mxu0 0
  %1399 = vmatpush2.bf16.msra.mxu0 0
  %1400 = vmatprep.subr.bf16.mxu0 0
  %1401 = vmatpush2.bf16.msra.mxu0 0
  %1402 = vmatprep.subr.bf16.mxu0 0
  %1403 = vmatpush2.bf16.msra.mxu0 0
  %1404 = vmatprep.subr.bf16.mxu0 0
  %1405 = vmatpush2.bf16.msra.mxu0 0
  %1406 = vmatprep.subr.bf16.mxu0 0
  %1407 = vmatpush2.bf16.msra.mxu0 0
  %1408 = vmatprep.mubr.bf16.mxu0 0
  %1409 = vmatmul.mubr.bf16.gmra.mxu0 %v1374
  %v1410 = vpop.f32.mrf.mxu0
  %v1411 = vadd.f32 %v81, %v1410
  %v1412 = vpop.f32.mrf.mxu0
  %v1413 = vpop.f32.mrf.mxu0
  %v1414 = vpop.f32.mrf.mxu0
  %1415 = vdwg.mxu0
  %v1416 = vxor.u32 %v1411, 2147483648
  %v1417 = vmul.f32 %v1416, 1.442695
  %v1418 = vpow.pop %v1417
  %v1419 = vadd.f32 %v1418, 1.0
  %v1420 = vrcp.pop %v1419
  %v1421 = vmul.f32 1.0, %v1420
  %v1422 = vtanh.pop %v1411
  %v1423 = vmul.f32 %v1421, %v1284
  %1425 = vrot.lane.b32.xlu0 %v1422, 64
  %v1426 = vpop.permute.xlu0 %1425
  %v1428 = vmul.f32 %v1421, %v1426
  %1430 = vrot.lane.b32.xlu0 %v1428, 32
  %v1431 = vpop.permute.xlu0 %1430
  %v1433 = vadd.f32 %v1423, %v1431
  %v1434 = vtanh.pop %v1433
  %1436 = vrot.lane.b32.xlu0 %v1434, 64
  %v1437 = vpop.permute.xlu0 %1436
  %v1439 = vmul.f32 %v1421, %v1437
  %v1440 = vpack.c.bf16 %v1362, %v1362
  %1442 = vrot.lane.b32.xlu0 %v1440, 32
  %v1443 = vpop.permute.xlu0 %1442
  %v1445 = vsel %vm231, %v1443, 0
  %1447 = vmatprep.subr.bf16.mxu0 0
  %1448 = vmatpush1.bf16.msra.mxu0 0
  %1449 = vmatprep.subr.bf16.mxu0 0
  %1450 = vmatpush1.bf16.msra.mxu0 0
  %1451 = vmatprep.subr.bf16.mxu0 0
  %1452 = vmatpush1.bf16.msra.mxu0 0
  %1453 = vmatprep.subr.bf16.mxu0 0
  %1454 = vmatpush1.bf16.msra.mxu0 0
  %1455 = vmatprep.subr.bf16.mxu0 0
  %1456 = vmatpush1.bf16.msra.mxu0 0
  %1457 = vmatprep.subr.bf16.mxu0 0
  %1458 = vmatpush1.bf16.msra.mxu0 0
  %1459 = vmatprep.subr.bf16.mxu0 0
  %1460 = vmatpush1.bf16.msra.mxu0 %v228
  %1461 = vmatprep.subr.bf16.mxu0 0
  %1462 = vmatpush1.bf16.msra.mxu0 %v227
  %1463 = vmatprep.subr.bf16.mxu0 0
  %1464 = vmatpush2.bf16.msra.mxu0 0
  %1465 = vmatprep.subr.bf16.mxu0 0
  %1466 = vmatpush2.bf16.msra.mxu0 0
  %1467 = vmatprep.subr.bf16.mxu0 0
  %1468 = vmatpush2.bf16.msra.mxu0 0
  %1469 = vmatprep.subr.bf16.mxu0 0
  %1470 = vmatpush2.bf16.msra.mxu0 0
  %1471 = vmatprep.subr.bf16.mxu0 0
  %1472 = vmatpush2.bf16.msra.mxu0 0
  %1473 = vmatprep.subr.bf16.mxu0 0
  %1474 = vmatpush2.bf16.msra.mxu0 0
  %1475 = vmatprep.subr.bf16.mxu0 0
  %1476 = vmatpush2.bf16.msra.mxu0 0
  %1477 = vmatprep.subr.bf16.mxu0 0
  %1478 = vmatpush2.bf16.msra.mxu0 0
  %1479 = vmatprep.mubr.bf16.mxu0 0
  %1480 = vmatmul.mubr.bf16.gmra.mxu0 %v1445
  %v1481 = vpop.f32.mrf.mxu0
  %v1482 = vadd.f32 0.0, %v1481
  %v1483 = vpop.f32.mrf.mxu0
  %v1484 = vpop.f32.mrf.mxu0
  %v1485 = vpop.f32.mrf.mxu0
  %1486 = vdwg.mxu0
  %v1487 = vadd.f32 %v74, %v1482
  %v1488 = vxor.u32 %v1487, 2147483648
  %v1489 = vmul.f32 %v1488, 1.442695
  %v1490 = vpow.pop %v1489
  %v1491 = vadd.f32 %v1490, 1.0
  %v1492 = vrcp.pop %v1491
  %v1493 = vmul.f32 1.0, %v1492
  %v1494 = vtanh.pop %v1487
  %v1495 = vmul.f32 %v1493, %v1356
  %1497 = vrot.lane.b32.xlu0 %v1494, 64
  %v1498 = vpop.permute.xlu0 %1497
  %v1500 = vmul.f32 %v1493, %v1498
  %1502 = vrot.lane.b32.xlu0 %v1500, 32
  %v1503 = vpop.permute.xlu0 %1502
  %v1505 = vadd.f32 %v1495, %v1503
  %v1506 = vtanh.pop %v1505
  %1508 = vrot.lane.b32.xlu0 %v1506, 64
  %v1509 = vpop.permute.xlu0 %1508
  %v1511 = vmul.f32 %v1493, %v1509
  %v1512 = vpack.c.bf16 %v1511, %v1511
  %1514 = vrot.lane.b32.xlu0 %v1512, 32
  %v1515 = vpop.permute.xlu0 %1514
  %v1520 = vunpack.c.l.b16 %v53
  %v1521 = vunpack.c.l.b16 %v54
  %v1522 = vunpack.c.l.b16 %v55
  %v1523 = vunpack.c.l.b16 %v56
  %v1524 = vpack.c.b16 %v1521, %v1520
  %v1525 = vpack.c.b16 %v1523, %v1522
  %v1529 = vsel %vm231, %v1515, 0
  %1531 = vmatprep.subr.bf16.mxu0 0
  %1532 = vmatpush1.bf16.msra.mxu0 0
  %1533 = vmatprep.subr.bf16.mxu0 0
  %1534 = vmatpush1.bf16.msra.mxu0 0
  %1535 = vmatprep.subr.bf16.mxu0 0
  %1536 = vmatpush1.bf16.msra.mxu0 0
  %1537 = vmatprep.subr.bf16.mxu0 0
  %1538 = vmatpush1.bf16.msra.mxu0 0
  %1539 = vmatprep.subr.bf16.mxu0 0
  %1540 = vmatpush1.bf16.msra.mxu0 0
  %1541 = vmatprep.subr.bf16.mxu0 0
  %1542 = vmatpush1.bf16.msra.mxu0 0
  %1543 = vmatprep.subr.bf16.mxu0 0
  %1544 = vmatpush1.bf16.msra.mxu0 %v1525
  %1545 = vmatprep.subr.bf16.mxu0 0
  %1546 = vmatpush1.bf16.msra.mxu0 %v1524
  %1547 = vmatprep.subr.bf16.mxu0 0
  %1548 = vmatpush2.bf16.msra.mxu0 0
  %1549 = vmatprep.subr.bf16.mxu0 0
  %1550 = vmatpush2.bf16.msra.mxu0 0
  %1551 = vmatprep.subr.bf16.mxu0 0
  %1552 = vmatpush2.bf16.msra.mxu0 0
  %1553 = vmatprep.subr.bf16.mxu0 0
  %1554 = vmatpush2.bf16.msra.mxu0 0
  %1555 = vmatprep.subr.bf16.mxu0 0
  %1556 = vmatpush2.bf16.msra.mxu0 0
  %1557 = vmatprep.subr.bf16.mxu0 0
  %1558 = vmatpush2.bf16.msra.mxu0 0
  %1559 = vmatprep.subr.bf16.mxu0 0
  %1560 = vmatpush2.bf16.msra.mxu0 0
  %1561 = vmatprep.subr.bf16.mxu0 0
  %1562 = vmatpush2.bf16.msra.mxu0 0
  %1563 = vmatprep.mubr.bf16.mxu0 0
  %1564 = vmatmul.mubr.bf16.gmra.mxu0 %v1529
  %v1565 = vpop.f32.mrf.mxu0
  %v1566 = vadd.f32 %v81, %v1565
  %v1567 = vpop.f32.mrf.mxu0
  %v1568 = vpop.f32.mrf.mxu0
  %v1569 = vpop.f32.mrf.mxu0
  %1570 = vdwg.mxu0
  %1571 = vmatprep.subr.bf16.mxu0 0
  %1572 = vmatpush1.bf16.msra.mxu0 0
  %1573 = vmatprep.subr.bf16.mxu0 0
  %1574 = vmatpush1.bf16.msra.mxu0 0
  %1575 = vmatprep.subr.bf16.mxu0 0
  %1576 = vmatpush1.bf16.msra.mxu0 0
  %1577 = vmatprep.subr.bf16.mxu0 0
  %1578 = vmatpush1.bf16.msra.mxu0 0
  %1579 = vmatprep.subr.bf16.mxu0 0
  %1580 = vmatpush1.bf16.msra.mxu0 0
  %1581 = vmatprep.subr.bf16.mxu0 0
  %1582 = vmatpush1.bf16.msra.mxu0 0
  %1583 = vmatprep.subr.bf16.mxu0 0
  %1584 = vmatpush1.bf16.msra.mxu0 %v228
  %1585 = vmatprep.subr.bf16.mxu0 0
  %1586 = vmatpush1.bf16.msra.mxu0 %v227
  %1587 = vmatprep.subr.bf16.mxu0 0
  %1588 = vmatpush2.bf16.msra.mxu0 0
  %1589 = vmatprep.subr.bf16.mxu0 0
  %1590 = vmatpush2.bf16.msra.mxu0 0
  %1591 = vmatprep.subr.bf16.mxu0 0
  %1592 = vmatpush2.bf16.msra.mxu0 0
  %1593 = vmatprep.subr.bf16.mxu0 0
  %1594 = vmatpush2.bf16.msra.mxu0 0
  %1595 = vmatprep.subr.bf16.mxu0 0
  %1596 = vmatpush2.bf16.msra.mxu0 0
  %1597 = vmatprep.subr.bf16.mxu0 0
  %1598 = vmatpush2.bf16.msra.mxu0 0
  %1599 = vmatprep.subr.bf16.mxu0 0
  %1600 = vmatpush2.bf16.msra.mxu0 0
  %1601 = vmatprep.subr.bf16.mxu0 0
  %1602 = vmatpush2.bf16.msra.mxu0 0
  %1603 = vmatprep.mubr.bf16.mxu0 0
  %1604 = vmatmul.mubr.bf16.gmra.mxu0 %v1529
  %v1605 = vpop.f32.mrf.mxu0
  %v1606 = vadd.f32 0.0, %v1605
  %v1607 = vpop.f32.mrf.mxu0
  %v1608 = vpop.f32.mrf.mxu0
  %v1609 = vpop.f32.mrf.mxu0
  %1610 = vdwg.mxu0
  %v1611 = vadd.f32 %v74, %v1606
  %v1612 = vxor.u32 %v1611, 2147483648
  %v1613 = vmul.f32 %v1612, 1.442695
  %v1614 = vpow.pop %v1613
  %v1615 = vadd.f32 %v1614, 1.0
  %v1616 = vrcp.pop %v1615
  %v1617 = vmul.f32 1.0, %v1616
  %v1618 = vtanh.pop %v1611
  %v1619 = vmul.f32 %v1617, %v1505
  %1621 = vrot.lane.b32.xlu0 %v1618, 64
  %v1622 = vpop.permute.xlu0 %1621
  %v1624 = vmul.f32 %v1617, %v1622
  %1626 = vrot.lane.b32.xlu0 %v1624, 32
  %v1627 = vpop.permute.xlu0 %1626
  %v1629 = vadd.f32 %v1619, %v1627
  %v1630 = vtanh.pop %v1629
  %1632 = vrot.lane.b32.xlu0 %v1630, 64
  %v1633 = vpop.permute.xlu0 %1632
  %v1635 = vmul.f32 %v1617, %v1633
  %v1636 = vpack.c.bf16 %v1635, %v1635
  %1638 = vrot.lane.b32.xlu0 %v1636, 32
  %v1639 = vpop.permute.xlu0 %1638
  %v1641 = vsel %vm231, %v1639, 0
  %1643 = vmatprep.subr.bf16.mxu0 0
  %1644 = vmatpush1.bf16.msra.mxu0 0
  %1645 = vmatprep.subr.bf16.mxu0 0
  %1646 = vmatpush1.bf16.msra.mxu0 0
  %1647 = vmatprep.subr.bf16.mxu0 0
  %1648 = vmatpush1.bf16.msra.mxu0 0
  %1649 = vmatprep.subr.bf16.mxu0 0
  %1650 = vmatpush1.bf16.msra.mxu0 0
  %1651 = vmatprep.subr.bf16.mxu0 0
  %1652 = vmatpush1.bf16.msra.mxu0 0
  %1653 = vmatprep.subr.bf16.mxu0 0
  %1654 = vmatpush1.bf16.msra.mxu0 0
  %1655 = vmatprep.subr.bf16.mxu0 0
  %1656 = vmatpush1.bf16.msra.mxu0 %v1525
  %1657 = vmatprep.subr.bf16.mxu0 0
  %1658 = vmatpush1.bf16.msra.mxu0 %v1524
  %1659 = vmatprep.subr.bf16.mxu0 0
  %1660 = vmatpush2.bf16.msra.mxu0 0
  %1661 = vmatprep.subr.bf16.mxu0 0
  %1662 = vmatpush2.bf16.msra.mxu0 0
  %1663 = vmatprep.subr.bf16.mxu0 0
  %1664 = vmatpush2.bf16.msra.mxu0 0
  %1665 = vmatprep.subr.bf16.mxu0 0
  %1666 = vmatpush2.bf16.msra.mxu0 0
  %1667 = vmatprep.subr.bf16.mxu0 0
  %1668 = vmatpush2.bf16.msra.mxu0 0
  %1669 = vmatprep.subr.bf16.mxu0 0
  %1670 = vmatpush2.bf16.msra.mxu0 0
  %1671 = vmatprep.subr.bf16.mxu0 0
  %1672 = vmatpush2.bf16.msra.mxu0 0
  %1673 = vmatprep.subr.bf16.mxu0 0
  %1674 = vmatpush2.bf16.msra.mxu0 0
  %1675 = vmatprep.mubr.bf16.mxu0 0
  %1676 = vmatmul.mubr.bf16.gmra.mxu0 %v1641
  %v1677 = vpop.f32.mrf.mxu0
  %v1678 = vadd.f32 %v81, %v1677
  %v1679 = vpop.f32.mrf.mxu0
  %v1680 = vpop.f32.mrf.mxu0
  %v1681 = vpop.f32.mrf.mxu0
  %1682 = vdwg.mxu0
  %1683 = vmatprep.subr.bf16.mxu0 0
  %1684 = vmatpush1.bf16.msra.mxu0 0
  %1685 = vmatprep.subr.bf16.mxu0 0
  %1686 = vmatpush1.bf16.msra.mxu0 0
  %1687 = vmatprep.subr.bf16.mxu0 0
  %1688 = vmatpush1.bf16.msra.mxu0 0
  %1689 = vmatprep.subr.bf16.mxu0 0
  %1690 = vmatpush1.bf16.msra.mxu0 0
  %1691 = vmatprep.subr.bf16.mxu0 0
  %1692 = vmatpush1.bf16.msra.mxu0 0
  %1693 = vmatprep.subr.bf16.mxu0 0
  %1694 = vmatpush1.bf16.msra.mxu0 0
  %1695 = vmatprep.subr.bf16.mxu0 0
  %1696 = vmatpush1.bf16.msra.mxu0 %v228
  %1697 = vmatprep.subr.bf16.mxu0 0
  %1698 = vmatpush1.bf16.msra.mxu0 %v227
  %1699 = vmatprep.subr.bf16.mxu0 0
  %1700 = vmatpush2.bf16.msra.mxu0 0
  %1701 = vmatprep.subr.bf16.mxu0 0
  %1702 = vmatpush2.bf16.msra.mxu0 0
  %1703 = vmatprep.subr.bf16.mxu0 0
  %1704 = vmatpush2.bf16.msra.mxu0 0
  %1705 = vmatprep.subr.bf16.mxu0 0
  %1706 = vmatpush2.bf16.msra.mxu0 0
  %1707 = vmatprep.subr.bf16.mxu0 0
  %1708 = vmatpush2.bf16.msra.mxu0 0
  %1709 = vmatprep.subr.bf16.mxu0 0
  %1710 = vmatpush2.bf16.msra.mxu0 0
  %1711 = vmatprep.subr.bf16.mxu0 0
  %1712 = vmatpush2.bf16.msra.mxu0 0
  %1713 = vmatprep.subr.bf16.mxu0 0
  %1714 = vmatpush2.bf16.msra.mxu0 0
  %1715 = vmatprep.mubr.bf16.mxu0 0
  %1716 = vmatmul.mubr.bf16.gmra.mxu0 %v1641
  %v1717 = vpop.f32.mrf.mxu0
  %v1718 = vadd.f32 0.0, %v1717
  %v1719 = vpop.f32.mrf.mxu0
  %v1720 = vpop.f32.mrf.mxu0
  %v1721 = vpop.f32.mrf.mxu0
  %1722 = vdwg.mxu0
  %v1723 = vadd.f32 %v74, %v1718
  %v1724 = vxor.u32 %v1723, 2147483648
  %v1725 = vmul.f32 %v1724, 1.442695
  %v1726 = vpow.pop %v1725
  %v1727 = vadd.f32 %v1726, 1.0
  %v1728 = vrcp.pop %v1727
  %v1729 = vmul.f32 1.0, %v1728
  %v1730 = vtanh.pop %v1723
  %v1731 = vmul.f32 %v1729, %v1629
  %1733 = vrot.lane.b32.xlu0 %v1730, 64
  %v1734 = vpop.permute.xlu0 %1733
  %v1736 = vmul.f32 %v1729, %v1734
  %1738 = vrot.lane.b32.xlu0 %v1736, 32
  %v1739 = vpop.permute.xlu0 %1738
  %v1741 = vadd.f32 %v1731, %v1739
  %v1742 = vtanh.pop %v1741
  %1744 = vrot.lane.b32.xlu0 %v1742, 64
  %v1745 = vpop.permute.xlu0 %1744
  %v1747 = vmul.f32 %v1729, %v1745
  %v1748 = vpack.c.bf16 %v1747, %v1747
  %1750 = vrot.lane.b32.xlu0 %v1748, 32
  %v1751 = vpop.permute.xlu0 %1750
  %v1753 = vsel %vm231, %v1751, 0
  %1755 = vmatprep.subr.bf16.mxu0 0
  %1756 = vmatpush1.bf16.msra.mxu0 0
  %1757 = vmatprep.subr.bf16.mxu0 0
  %1758 = vmatpush1.bf16.msra.mxu0 0
  %1759 = vmatprep.subr.bf16.mxu0 0
  %1760 = vmatpush1.bf16.msra.mxu0 0
  %1761 = vmatprep.subr.bf16.mxu0 0
  %1762 = vmatpush1.bf16.msra.mxu0 0
  %1763 = vmatprep.subr.bf16.mxu0 0
  %1764 = vmatpush1.bf16.msra.mxu0 0
  %1765 = vmatprep.subr.bf16.mxu0 0
  %1766 = vmatpush1.bf16.msra.mxu0 0
  %1767 = vmatprep.subr.bf16.mxu0 0
  %1768 = vmatpush1.bf16.msra.mxu0 %v1525
  %1769 = vmatprep.subr.bf16.mxu0 0
  %1770 = vmatpush1.bf16.msra.mxu0 %v1524
  %1771 = vmatprep.subr.bf16.mxu0 0
  %1772 = vmatpush2.bf16.msra.mxu0 0
  %1773 = vmatprep.subr.bf16.mxu0 0
  %1774 = vmatpush2.bf16.msra.mxu0 0
  %1775 = vmatprep.subr.bf16.mxu0 0
  %1776 = vmatpush2.bf16.msra.mxu0 0
  %1777 = vmatprep.subr.bf16.mxu0 0
  %1778 = vmatpush2.bf16.msra.mxu0 0
  %1779 = vmatprep.subr.bf16.mxu0 0
  %1780 = vmatpush2.bf16.msra.mxu0 0
  %1781 = vmatprep.subr.bf16.mxu0 0
  %1782 = vmatpush2.bf16.msra.mxu0 0
  %1783 = vmatprep.subr.bf16.mxu0 0
  %1784 = vmatpush2.bf16.msra.mxu0 0
  %1785 = vmatprep.subr.bf16.mxu0 0
  %1786 = vmatpush2.bf16.msra.mxu0 0
  %1787 = vmatprep.mubr.bf16.mxu0 0
  %1788 = vmatmul.mubr.bf16.gmra.mxu0 %v1753
  %v1789 = vpop.f32.mrf.mxu0
  %v1790 = vadd.f32 %v81, %v1789
  %v1791 = vpop.f32.mrf.mxu0
  %v1792 = vpop.f32.mrf.mxu0
  %v1793 = vpop.f32.mrf.mxu0
  %1794 = vdwg.mxu0
  %1795 = vmatprep.subr.bf16.mxu0 0
  %1796 = vmatpush1.bf16.msra.mxu0 0
  %1797 = vmatprep.subr.bf16.mxu0 0
  %1798 = vmatpush1.bf16.msra.mxu0 0
  %1799 = vmatprep.subr.bf16.mxu0 0
  %1800 = vmatpush1.bf16.msra.mxu0 0
  %1801 = vmatprep.subr.bf16.mxu0 0
  %1802 = vmatpush1.bf16.msra.mxu0 0
  %1803 = vmatprep.subr.bf16.mxu0 0
  %1804 = vmatpush1.bf16.msra.mxu0 0
  %1805 = vmatprep.subr.bf16.mxu0 0
  %1806 = vmatpush1.bf16.msra.mxu0 0
  %1807 = vmatprep.subr.bf16.mxu0 0
  %1808 = vmatpush1.bf16.msra.mxu0 %v228
  %1809 = vmatprep.subr.bf16.mxu0 0
  %1810 = vmatpush1.bf16.msra.mxu0 %v227
  %1811 = vmatprep.subr.bf16.mxu0 0
  %1812 = vmatpush2.bf16.msra.mxu0 0
  %1813 = vmatprep.subr.bf16.mxu0 0
  %1814 = vmatpush2.bf16.msra.mxu0 0
  %1815 = vmatprep.subr.bf16.mxu0 0
  %1816 = vmatpush2.bf16.msra.mxu0 0
  %1817 = vmatprep.subr.bf16.mxu0 0
  %1818 = vmatpush2.bf16.msra.mxu0 0
  %1819 = vmatprep.subr.bf16.mxu0 0
  %1820 = vmatpush2.bf16.msra.mxu0 0
  %1821 = vmatprep.subr.bf16.mxu0 0
  %1822 = vmatpush2.bf16.msra.mxu0 0
  %1823 = vmatprep.subr.bf16.mxu0 0
  %1824 = vmatpush2.bf16.msra.mxu0 0
  %1825 = vmatprep.subr.bf16.mxu0 0
  %1826 = vmatpush2.bf16.msra.mxu0 0
  %1827 = vmatprep.mubr.bf16.mxu0 0
  %1828 = vmatmul.mubr.bf16.gmra.mxu0 %v1753
  %v1829 = vpop.f32.mrf.mxu0
  %v1830 = vadd.f32 0.0, %v1829
  %v1831 = vpop.f32.mrf.mxu0
  %v1832 = vpop.f32.mrf.mxu0
  %v1833 = vpop.f32.mrf.mxu0
  %1834 = vdwg.mxu0
  %v1835 = vadd.f32 %v74, %v1830
  %v1836 = vxor.u32 %v1835, 2147483648
  %v1837 = vmul.f32 %v1836, 1.442695
  %v1838 = vpow.pop %v1837
  %v1839 = vadd.f32 %v1838, 1.0
  %v1840 = vrcp.pop %v1839
  %v1841 = vmul.f32 1.0, %v1840
  %v1842 = vtanh.pop %v1835
  %v1843 = vmul.f32 %v1841, %v1741
  %1845 = vrot.lane.b32.xlu0 %v1842, 64
  %v1846 = vpop.permute.xlu0 %1845
  %v1848 = vmul.f32 %v1841, %v1846
  %1850 = vrot.lane.b32.xlu0 %v1848, 32
  %v1851 = vpop.permute.xlu0 %1850
  %v1853 = vadd.f32 %v1843, %v1851
  %v1854 = vtanh.pop %v1853
  %1856 = vrot.lane.b32.xlu0 %v1854, 64
  %v1857 = vpop.permute.xlu0 %1856
  %v1859 = vmul.f32 %v1841, %v1857
  %v1860 = vpack.c.bf16 %v1859, %v1859
  %1862 = vrot.lane.b32.xlu0 %v1860, 32
  %v1863 = vpop.permute.xlu0 %1862
  %v1865 = vsel %vm231, %v1863, 0
  %1867 = vmatprep.subr.bf16.mxu0 0
  %1868 = vmatpush1.bf16.msra.mxu0 0
  %1869 = vmatprep.subr.bf16.mxu0 0
  %1870 = vmatpush1.bf16.msra.mxu0 0
  %1871 = vmatprep.subr.bf16.mxu0 0
  %1872 = vmatpush1.bf16.msra.mxu0 0
  %1873 = vmatprep.subr.bf16.mxu0 0
  %1874 = vmatpush1.bf16.msra.mxu0 0
  %1875 = vmatprep.subr.bf16.mxu0 0
  %1876 = vmatpush1.bf16.msra.mxu0 0
  %1877 = vmatprep.subr.bf16.mxu0 0
  %1878 = vmatpush1.bf16.msra.mxu0 0
  %1879 = vmatprep.subr.bf16.mxu0 0
  %1880 = vmatpush1.bf16.msra.mxu0 %v1525
  %1881 = vmatprep.subr.bf16.mxu0 0
  %1882 = vmatpush1.bf16.msra.mxu0 %v1524
  %1883 = vmatprep.subr.bf16.mxu0 0
  %1884 = vmatpush2.bf16.msra.mxu0 0
  %1885 = vmatprep.subr.bf16.mxu0 0
  %1886 = vmatpush2.bf16.msra.mxu0 0
  %1887 = vmatprep.subr.bf16.mxu0 0
  %1888 = vmatpush2.bf16.msra.mxu0 0
  %1889 = vmatprep.subr.bf16.mxu0 0
  %1890 = vmatpush2.bf16.msra.mxu0 0
  %1891 = vmatprep.subr.bf16.mxu0 0
  %1892 = vmatpush2.bf16.msra.mxu0 0
  %1893 = vmatprep.subr.bf16.mxu0 0
  %1894 = vmatpush2.bf16.msra.mxu0 0
  %1895 = vmatprep.subr.bf16.mxu0 0
  %1896 = vmatpush2.bf16.msra.mxu0 0
  %1897 = vmatprep.subr.bf16.mxu0 0
  %1898 = vmatpush2.bf16.msra.mxu0 0
  %1899 = vmatprep.mubr.bf16.mxu0 0
  %1900 = vmatmul.mubr.bf16.gmra.mxu0 %v1865
  %v1901 = vpop.f32.mrf.mxu0
  %v1902 = vadd.f32 %v81, %v1901
  %v1903 = vpop.f32.mrf.mxu0
  %v1904 = vpop.f32.mrf.mxu0
  %v1905 = vpop.f32.mrf.mxu0
  %1906 = vdwg.mxu0
  %1907 = vmatprep.subr.bf16.mxu0 0
  %1908 = vmatpush1.bf16.msra.mxu0 0
  %1909 = vmatprep.subr.bf16.mxu0 0
  %1910 = vmatpush1.bf16.msra.mxu0 0
  %1911 = vmatprep.subr.bf16.mxu0 0
  %1912 = vmatpush1.bf16.msra.mxu0 0
  %1913 = vmatprep.subr.bf16.mxu0 0
  %1914 = vmatpush1.bf16.msra.mxu0 0
  %1915 = vmatprep.subr.bf16.mxu0 0
  %1916 = vmatpush1.bf16.msra.mxu0 0
  %1917 = vmatprep.subr.bf16.mxu0 0
  %1918 = vmatpush1.bf16.msra.mxu0 0
  %1919 = vmatprep.subr.bf16.mxu0 0
  %1920 = vmatpush1.bf16.msra.mxu0 %v228
  %1921 = vmatprep.subr.bf16.mxu0 0
  %1922 = vmatpush1.bf16.msra.mxu0 %v227
  %1923 = vmatprep.subr.bf16.mxu0 0
  %1924 = vmatpush2.bf16.msra.mxu0 0
  %1925 = vmatprep.subr.bf16.mxu0 0
  %1926 = vmatpush2.bf16.msra.mxu0 0
  %1927 = vmatprep.subr.bf16.mxu0 0
  %1928 = vmatpush2.bf16.msra.mxu0 0
  %1929 = vmatprep.subr.bf16.mxu0 0
  %1930 = vmatpush2.bf16.msra.mxu0 0
  %1931 = vmatprep.subr.bf16.mxu0 0
  %1932 = vmatpush2.bf16.msra.mxu0 0
  %1933 = vmatprep.subr.bf16.mxu0 0
  %1934 = vmatpush2.bf16.msra.mxu0 0
  %1935 = vmatprep.subr.bf16.mxu0 0
  %1936 = vmatpush2.bf16.msra.mxu0 0
  %1937 = vmatprep.subr.bf16.mxu0 0
  %1938 = vmatpush2.bf16.msra.mxu0 0
  %1939 = vmatprep.mubr.bf16.mxu0 0
  %1940 = vmatmul.mubr.bf16.gmra.mxu0 %v1865
  %v1941 = vpop.f32.mrf.mxu0
  %v1942 = vadd.f32 0.0, %v1941
  %v1943 = vpop.f32.mrf.mxu0
  %v1944 = vpop.f32.mrf.mxu0
  %v1945 = vpop.f32.mrf.mxu0
  %1946 = vdwg.mxu0
  %v1947 = vadd.f32 %v74, %v1942
  %v1948 = vxor.u32 %v1947, 2147483648
  %v1949 = vmul.f32 %v1948, 1.442695
  %v1950 = vpow.pop %v1949
  %v1951 = vadd.f32 %v1950, 1.0
  %v1952 = vrcp.pop %v1951
  %v1953 = vmul.f32 1.0, %v1952
  %v1954 = vtanh.pop %v1947
  %v1955 = vmul.f32 %v1953, %v1853
  %1957 = vrot.lane.b32.xlu0 %v1954, 64
  %v1958 = vpop.permute.xlu0 %1957
  %v1960 = vmul.f32 %v1953, %v1958
  %1962 = vrot.lane.b32.xlu0 %v1960, 32
  %v1963 = vpop.permute.xlu0 %1962
  %v1965 = vadd.f32 %v1955, %v1963
  %v1966 = vtanh.pop %v1965
  %1968 = vrot.lane.b32.xlu0 %v1966, 64
  %v1969 = vpop.permute.xlu0 %1968
  %v1971 = vmul.f32 %v1953, %v1969
  %v1972 = vpack.c.bf16 %v1971, %v1971
  %1974 = vrot.lane.b32.xlu0 %v1972, 32
  %v1975 = vpop.permute.xlu0 %1974
  %v1977 = vsel %vm231, %v1975, 0
  %1979 = vmatprep.subr.bf16.mxu0 0
  %1980 = vmatpush1.bf16.msra.mxu0 0
  %1981 = vmatprep.subr.bf16.mxu0 0
  %1982 = vmatpush1.bf16.msra.mxu0 0
  %1983 = vmatprep.subr.bf16.mxu0 0
  %1984 = vmatpush1.bf16.msra.mxu0 0
  %1985 = vmatprep.subr.bf16.mxu0 0
  %1986 = vmatpush1.bf16.msra.mxu0 0
  %1987 = vmatprep.subr.bf16.mxu0 0
  %1988 = vmatpush1.bf16.msra.mxu0 0
  %1989 = vmatprep.subr.bf16.mxu0 0
  %1990 = vmatpush1.bf16.msra.mxu0 0
  %1991 = vmatprep.subr.bf16.mxu0 0
  %1992 = vmatpush1.bf16.msra.mxu0 %v1525
  %1993 = vmatprep.subr.bf16.mxu0 0
  %1994 = vmatpush1.bf16.msra.mxu0 %v1524
  %1995 = vmatprep.subr.bf16.mxu0 0
  %1996 = vmatpush2.bf16.msra.mxu0 0
  %1997 = vmatprep.subr.bf16.mxu0 0
  %1998 = vmatpush2.bf16.msra.mxu0 0
  %1999 = vmatprep.subr.bf16.mxu0 0
  %2000 = vmatpush2.bf16.msra.mxu0 0
  %2001 = vmatprep.subr.bf16.mxu0 0
  %2002 = vmatpush2.bf16.msra.mxu0 0
  %2003 = vmatprep.subr.bf16.mxu0 0
  %2004 = vmatpush2.bf16.msra.mxu0 0
  %2005 = vmatprep.subr.bf16.mxu0 0
  %2006 = vmatpush2.bf16.msra.mxu0 0
  %2007 = vmatprep.subr.bf16.mxu0 0
  %2008 = vmatpush2.bf16.msra.mxu0 0
  %2009 = vmatprep.subr.bf16.mxu0 0
  %2010 = vmatpush2.bf16.msra.mxu0 0
  %2011 = vmatprep.mubr.bf16.mxu0 0
  %2012 = vmatmul.mubr.bf16.gmra.mxu0 %v1977
  %v2013 = vpop.f32.mrf.mxu0
  %v2014 = vadd.f32 %v81, %v2013
  %v2015 = vpop.f32.mrf.mxu0
  %v2016 = vpop.f32.mrf.mxu0
  %v2017 = vpop.f32.mrf.mxu0
  %2018 = vdwg.mxu0
  %v2019 = vlaneseq
  %v2020 = vand.u32 %v2019, 127
  %vm2021 = vcmp.eq.s32.totalorder %v2020, 0
  %v2022 = vsel %vm2021, 1, 0
  %v2023 = vcvt.s32.f32 %v2022
  %2025 = vrot.lane.b32.xlu0 %v1439, 64
  %v2026 = vpop.permute.xlu0 %2025
  %v2028 = vsel %vm231, %v2023, %v2026
  %v2029 = vpack.c.bf16 %v2028, %v2028
  %v2038 = vunpack.c.l.b16 %v57
  %v2039 = vunpack.c.l.b16 %v58
  %v2040 = vunpack.c.l.b16 %v59
  %v2041 = vunpack.c.l.b16 %v60
  %v2042 = vunpack.c.l.b16 %v61
  %v2043 = vunpack.c.l.b16 %v62
  %v2044 = vunpack.c.l.b16 %v63
  %v2045 = vunpack.c.l.b16 %v64
  %v2046 = vpack.c.b16 %v2039, %v2038
  %v2047 = vpack.c.b16 %v2041, %v2040
  %v2048 = vpack.c.b16 %v2043, %v2042
  %v2049 = vpack.c.b16 %v2045, %v2044
  %v2055 = vsel %vm141, %v2029, 0
  %2057 = vmatprep.subr.bf16.mxu0 0
  %2058 = vmatpush1.bf16.msra.mxu0 0
  %2059 = vmatprep.subr.bf16.mxu0 0
  %2060 = vmatpush1.bf16.msra.mxu0 0
  %2061 = vmatprep.subr.bf16.mxu0 0
  %2062 = vmatpush1.bf16.msra.mxu0 0
  %2063 = vmatprep.subr.bf16.mxu0 0
  %2064 = vmatpush1.bf16.msra.mxu0 0
  %2065 = vmatprep.subr.bf16.mxu0 0
  %2066 = vmatpush1.bf16.msra.mxu0 %v2049
  %2067 = vmatprep.subr.bf16.mxu0 0
  %2068 = vmatpush1.bf16.msra.mxu0 %v2048
  %2069 = vmatprep.subr.bf16.mxu0 0
  %2070 = vmatpush1.bf16.msra.mxu0 %v2047
  %2071 = vmatprep.subr.bf16.mxu0 0
  %2072 = vmatpush1.bf16.msra.mxu0 %v2046
  %2073 = vmatprep.subr.bf16.mxu0 0
  %2074 = vmatpush2.bf16.msra.mxu0 0
  %2075 = vmatprep.subr.bf16.mxu0 0
  %2076 = vmatpush2.bf16.msra.mxu0 0
  %2077 = vmatprep.subr.bf16.mxu0 0
  %2078 = vmatpush2.bf16.msra.mxu0 0
  %2079 = vmatprep.subr.bf16.mxu0 0
  %2080 = vmatpush2.bf16.msra.mxu0 0
  %2081 = vmatprep.subr.bf16.mxu0 0
  %2082 = vmatpush2.bf16.msra.mxu0 0
  %2083 = vmatprep.subr.bf16.mxu0 0
  %2084 = vmatpush2.bf16.msra.mxu0 0
  %2085 = vmatprep.subr.bf16.mxu0 0
  %2086 = vmatpush2.bf16.msra.mxu0 0
  %2087 = vmatprep.subr.bf16.mxu0 0
  %2088 = vmatpush2.bf16.msra.mxu0 0
  %2089 = vmatprep.mubr.bf16.mxu0 0
  %2090 = vmatmul.mubr.bf16.gmra.mxu0 %v2055
  %v2091 = vpop.f32.mrf.mxu0
  %v2092 = vadd.f32 %v1566, %v2091
  %v2093 = vpop.f32.mrf.mxu0
  %v2094 = vpop.f32.mrf.mxu0
  %v2095 = vpop.f32.mrf.mxu0
  %2096 = vdwg.mxu0
  %v2097 = vxor.u32 %v2092, 2147483648
  %v2098 = vmul.f32 %v2097, 1.442695
  %v2099 = vpow.pop %v2098
  %v2100 = vadd.f32 %v2099, 1.0
  %v2101 = vrcp.pop %v2100
  %v2102 = vmul.f32 1.0, %v2101
  %v2103 = vtanh.pop %v2092
  %v2104 = vmul.f32 %v2102, %v1433
  %2106 = vrot.lane.b32.xlu0 %v2103, 64
  %v2107 = vpop.permute.xlu0 %2106
  %v2109 = vmul.f32 %v2102, %v2107
  %2111 = vrot.lane.b32.xlu0 %v2109, 32
  %v2112 = vpop.permute.xlu0 %2111
  %v2114 = vadd.f32 %v2104, %v2112
  %v2115 = vtanh.pop %v2114
  %2117 = vrot.lane.b32.xlu0 %v2115, 64
  %v2118 = vpop.permute.xlu0 %2117
  %v2120 = vmul.f32 %v2102, %v2118
  %v2121 = vpack.c.bf16 %v2120, %v2120
  %2123 = vrot.lane.b32.xlu0 %v2121, 32
  %v2124 = vpop.permute.xlu0 %2123
  %v2129 = vunpack.c.l.b16 %v65
  %v2130 = vunpack.c.l.b16 %v66
  %v2131 = vunpack.c.l.b16 %v67
  %v2132 = vunpack.c.l.b16 %v68
  %v2133 = vpack.c.b16 %v2130, %v2129
  %v2134 = vpack.c.b16 %v2132, %v2131
  %v2138 = vsel %vm231, %v2124, 0
  %2140 = vmatprep.subr.bf16.mxu0 0
  %2141 = vmatpush1.bf16.msra.mxu0 0
  %2142 = vmatprep.subr.bf16.mxu0 0
  %2143 = vmatpush1.bf16.msra.mxu0 0
  %2144 = vmatprep.subr.bf16.mxu0 0
  %2145 = vmatpush1.bf16.msra.mxu0 0
  %2146 = vmatprep.subr.bf16.mxu0 0
  %2147 = vmatpush1.bf16.msra.mxu0 0
  %2148 = vmatprep.subr.bf16.mxu0 0
  %2149 = vmatpush1.bf16.msra.mxu0 0
  %2150 = vmatprep.subr.bf16.mxu0 0
  %2151 = vmatpush1.bf16.msra.mxu0 0
  %2152 = vmatprep.subr.bf16.mxu0 0
  %2153 = vmatpush1.bf16.msra.mxu0 %v2134
  %2154 = vmatprep.subr.bf16.mxu0 0
  %2155 = vmatpush1.bf16.msra.mxu0 %v2133
  %2156 = vmatprep.subr.bf16.mxu0 0
  %2157 = vmatpush2.bf16.msra.mxu0 0
  %2158 = vmatprep.subr.bf16.mxu0 0
  %2159 = vmatpush2.bf16.msra.mxu0 0
  %2160 = vmatprep.subr.bf16.mxu0 0
  %2161 = vmatpush2.bf16.msra.mxu0 0
  %2162 = vmatprep.subr.bf16.mxu0 0
  %2163 = vmatpush2.bf16.msra.mxu0 0
  %2164 = vmatprep.subr.bf16.mxu0 0
  %2165 = vmatpush2.bf16.msra.mxu0 0
  %2166 = vmatprep.subr.bf16.mxu0 0
  %2167 = vmatpush2.bf16.msra.mxu0 0
  %2168 = vmatprep.subr.bf16.mxu0 0
  %2169 = vmatpush2.bf16.msra.mxu0 0
  %2170 = vmatprep.subr.bf16.mxu0 0
  %2171 = vmatpush2.bf16.msra.mxu0 0
  %2172 = vmatprep.mubr.bf16.mxu0 0
  %2173 = vmatmul.mubr.bf16.gmra.mxu0 %v2138
  %v2174 = vpop.f32.mrf.mxu0
  %v2175 = vadd.f32 %v88, %v2174
  %v2176 = vpop.f32.mrf.mxu0
  %v2177 = vpop.f32.mrf.mxu0
  %v2178 = vpop.f32.mrf.mxu0
  %2179 = vdwg.mxu0
  %v2180 = vsel %vm231, %v2175, -inf
  %2181 = vmax.xlane.f32.xlu0 %v2180
  %v2182 = vpop.xlane.xlu0 %2181
  %vm2183 = vcmp.eq.f32.partialorder %v2175, %v2182
  %v2184 = vsel %vm2183, %v2020, 32
  %v2185 = vsel %vm231, %v2184, 2147483647
  %v2186 = vand.u32 %v2185, 65535
  %v2187 = vshra.s32 %v2185, 16
  %v2188 = vcvt.s32.f32 %v2186
  %v2189 = vcvt.s32.f32 %v2187
  %2190 = vmin.xlane.f32.xlu0 %v2189
  %v2191 = vpop.xlane.xlu0 %2190
  %vm2192 = vcmp.eq.f32.partialorder %v2189, %v2191
  %v2193 = vsel %vm2192, %v2188, inf
  %2194 = vmin.xlane.f32.xlu0 %v2193
  %v2195 = vpop.xlane.xlu0 %2194
  %v2196 = vcvt.f32.s32 %v2195
  %v2197 = vcvt.f32.s32 %v2191
  %v2198 = vshll.u32 %v2197, 16
  %v2199 = vadd.s32 %v2198, %v2196
  %vm2200 = vcmp.eq.s32.totalorder %v2020, %v2199
  %v2201 = vsel %vm2200, 1, 0
  %v2202 = vcvt.s32.f32 %v2201
  %2204 = vrot.lane.b32.xlu0 %v2120, 64
  %v2205 = vpop.permute.xlu0 %2204
  %v2207 = vsel %vm231, %v2202, %v2205
  %v2208 = vpack.c.bf16 %v2207, %v2207
  %v2210 = vsel %vm141, %v2208, 0
  %2212 = vmatprep.subr.bf16.mxu0 0
  %2213 = vmatpush1.bf16.msra.mxu0 0
  %2214 = vmatprep.subr.bf16.mxu0 0
  %2215 = vmatpush1.bf16.msra.mxu0 0
  %2216 = vmatprep.subr.bf16.mxu0 0
  %2217 = vmatpush1.bf16.msra.mxu0 0
  %2218 = vmatprep.subr.bf16.mxu0 0
  %2219 = vmatpush1.bf16.msra.mxu0 0
  %2220 = vmatprep.subr.bf16.mxu0 0
  %2221 = vmatpush1.bf16.msra.mxu0 %v2049
  %2222 = vmatprep.subr.bf16.mxu0 0
  %2223 = vmatpush1.bf16.msra.mxu0 %v2048
  %2224 = vmatprep.subr.bf16.mxu0 0
  %2225 = vmatpush1.bf16.msra.mxu0 %v2047
  %2226 = vmatprep.subr.bf16.mxu0 0
  %2227 = vmatpush1.bf16.msra.mxu0 %v2046
  %2228 = vmatprep.subr.bf16.mxu0 0
  %2229 = vmatpush2.bf16.msra.mxu0 0
  %2230 = vmatprep.subr.bf16.mxu0 0
  %2231 = vmatpush2.bf16.msra.mxu0 0
  %2232 = vmatprep.subr.bf16.mxu0 0
  %2233 = vmatpush2.bf16.msra.mxu0 0
  %2234 = vmatprep.subr.bf16.mxu0 0
  %2235 = vmatpush2.bf16.msra.mxu0 0
  %2236 = vmatprep.subr.bf16.mxu0 0
  %2237 = vmatpush2.bf16.msra.mxu0 0
  %2238 = vmatprep.subr.bf16.mxu0 0
  %2239 = vmatpush2.bf16.msra.mxu0 0
  %2240 = vmatprep.subr.bf16.mxu0 0
  %2241 = vmatpush2.bf16.msra.mxu0 0
  %2242 = vmatprep.subr.bf16.mxu0 0
  %2243 = vmatpush2.bf16.msra.mxu0 0
  %2244 = vmatprep.mubr.bf16.mxu0 0
  %2245 = vmatmul.mubr.bf16.gmra.mxu0 %v2210
  %v2246 = vpop.f32.mrf.mxu0
  %v2247 = vadd.f32 %v1678, %v2246
  %v2248 = vpop.f32.mrf.mxu0
  %v2249 = vpop.f32.mrf.mxu0
  %v2250 = vpop.f32.mrf.mxu0
  %2251 = vdwg.mxu0
  %v2252 = vxor.u32 %v2247, 2147483648
  %v2253 = vmul.f32 %v2252, 1.442695
  %v2254 = vpow.pop %v2253
  %v2255 = vadd.f32 %v2254, 1.0
  %v2256 = vrcp.pop %v2255
  %v2257 = vmul.f32 1.0, %v2256
  %v2258 = vtanh.pop %v2247
  %v2259 = vmul.f32 %v2257, %v2114
  %2261 = vrot.lane.b32.xlu0 %v2258, 64
  %v2262 = vpop.permute.xlu0 %2261
  %v2264 = vmul.f32 %v2257, %v2262
  %2266 = vrot.lane.b32.xlu0 %v2264, 32
  %v2267 = vpop.permute.xlu0 %2266
  %v2269 = vadd.f32 %v2259, %v2267
  %v2270 = vtanh.pop %v2269
  %2272 = vrot.lane.b32.xlu0 %v2270, 64
  %v2273 = vpop.permute.xlu0 %2272
  %v2275 = vmul.f32 %v2257, %v2273
  %v2276 = vpack.c.bf16 %v2275, %v2275
  %2278 = vrot.lane.b32.xlu0 %v2276, 32
  %v2279 = vpop.permute.xlu0 %2278
  %v2281 = vsel %vm231, %v2279, 0
  %2283 = vmatprep.subr.bf16.mxu0 0
  %2284 = vmatpush1.bf16.msra.mxu0 0
  %2285 = vmatprep.subr.bf16.mxu0 0
  %2286 = vmatpush1.bf16.msra.mxu0 0
  %2287 = vmatprep.subr.bf16.mxu0 0
  %2288 = vmatpush1.bf16.msra.mxu0 0
  %2289 = vmatprep.subr.bf16.mxu0 0
  %2290 = vmatpush1.bf16.msra.mxu0 0
  %2291 = vmatprep.subr.bf16.mxu0 0
  %2292 = vmatpush1.bf16.msra.mxu0 0
  %2293 = vmatprep.subr.bf16.mxu0 0
  %2294 = vmatpush1.bf16.msra.mxu0 0
  %2295 = vmatprep.subr.bf16.mxu0 0
  %2296 = vmatpush1.bf16.msra.mxu0 %v2134
  %2297 = vmatprep.subr.bf16.mxu0 0
  %2298 = vmatpush1.bf16.msra.mxu0 %v2133
  %2299 = vmatprep.subr.bf16.mxu0 0
  %2300 = vmatpush2.bf16.msra.mxu0 0
  %2301 = vmatprep.subr.bf16.mxu0 0
  %2302 = vmatpush2.bf16.msra.mxu0 0
  %2303 = vmatprep.subr.bf16.mxu0 0
  %2304 = vmatpush2.bf16.msra.mxu0 0
  %2305 = vmatprep.subr.bf16.mxu0 0
  %2306 = vmatpush2.bf16.msra.mxu0 0
  %2307 = vmatprep.subr.bf16.mxu0 0
  %2308 = vmatpush2.bf16.msra.mxu0 0
  %2309 = vmatprep.subr.bf16.mxu0 0
  %2310 = vmatpush2.bf16.msra.mxu0 0
  %2311 = vmatprep.subr.bf16.mxu0 0
  %2312 = vmatpush2.bf16.msra.mxu0 0
  %2313 = vmatprep.subr.bf16.mxu0 0
  %2314 = vmatpush2.bf16.msra.mxu0 0
  %2315 = vmatprep.mubr.bf16.mxu0 0
  %2316 = vmatmul.mubr.bf16.gmra.mxu0 %v2281
  %v2317 = vpop.f32.mrf.mxu0
  %v2318 = vadd.f32 %v88, %v2317
  %v2319 = vpop.f32.mrf.mxu0
  %v2320 = vpop.f32.mrf.mxu0
  %v2321 = vpop.f32.mrf.mxu0
  %2322 = vdwg.mxu0
  %v2323 = vsel %vm231, %v2318, -inf
  %2324 = vmax.xlane.f32.xlu0 %v2323
  %v2325 = vpop.xlane.xlu0 %2324
  %vm2326 = vcmp.eq.f32.partialorder %v2318, %v2325
  %v2327 = vsel %vm2326, %v2020, 32
  %v2328 = vsel %vm231, %v2327, 2147483647
  %v2329 = vand.u32 %v2328, 65535
  %v2330 = vshra.s32 %v2328, 16
  %v2331 = vcvt.s32.f32 %v2329
  %v2332 = vcvt.s32.f32 %v2330
  %2333 = vmin.xlane.f32.xlu0 %v2332
  %v2334 = vpop.xlane.xlu0 %2333
  %vm2335 = vcmp.eq.f32.partialorder %v2332, %v2334
  %v2336 = vsel %vm2335, %v2331, inf
  %2337 = vmin.xlane.f32.xlu0 %v2336
  %v2338 = vpop.xlane.xlu0 %2337
  %v2339 = vcvt.f32.s32 %v2338
  %v2340 = vcvt.f32.s32 %v2334
  %v2341 = vshll.u32 %v2340, 16
  %v2342 = vadd.s32 %v2341, %v2339
  %vm2343 = vcmp.eq.s32.totalorder %v2020, %v2342
  %v2344 = vsel %vm2343, 1, 0
  %v2345 = vcvt.s32.f32 %v2344
  %2347 = vrot.lane.b32.xlu0 %v2275, 64
  %v2348 = vpop.permute.xlu0 %2347
  %v2350 = vsel %vm231, %v2345, %v2348
  %v2351 = vpack.c.bf16 %v2350, %v2350
  %v2353 = vsel %vm141, %v2351, 0
  %2355 = vmatprep.subr.bf16.mxu0 0
  %2356 = vmatpush1.bf16.msra.mxu0 0
  %2357 = vmatprep.subr.bf16.mxu0 0
  %2358 = vmatpush1.bf16.msra.mxu0 0
  %2359 = vmatprep.subr.bf16.mxu0 0
  %2360 = vmatpush1.bf16.msra.mxu0 0
  %2361 = vmatprep.subr.bf16.mxu0 0
  %2362 = vmatpush1.bf16.msra.mxu0 0
  %2363 = vmatprep.subr.bf16.mxu0 0
  %2364 = vmatpush1.bf16.msra.mxu0 %v2049
  %2365 = vmatprep.subr.bf16.mxu0 0
  %2366 = vmatpush1.bf16.msra.mxu0 %v2048
  %2367 = vmatprep.subr.bf16.mxu0 0
  %2368 = vmatpush1.bf16.msra.mxu0 %v2047
  %2369 = vmatprep.subr.bf16.mxu0 0
  %2370 = vmatpush1.bf16.msra.mxu0 %v2046
  %2371 = vmatprep.subr.bf16.mxu0 0
  %2372 = vmatpush2.bf16.msra.mxu0 0
  %2373 = vmatprep.subr.bf16.mxu0 0
  %2374 = vmatpush2.bf16.msra.mxu0 0
  %2375 = vmatprep.subr.bf16.mxu0 0
  %2376 = vmatpush2.bf16.msra.mxu0 0
  %2377 = vmatprep.subr.bf16.mxu0 0
  %2378 = vmatpush2.bf16.msra.mxu0 0
  %2379 = vmatprep.subr.bf16.mxu0 0
  %2380 = vmatpush2.bf16.msra.mxu0 0
  %2381 = vmatprep.subr.bf16.mxu0 0
  %2382 = vmatpush2.bf16.msra.mxu0 0
  %2383 = vmatprep.subr.bf16.mxu0 0
  %2384 = vmatpush2.bf16.msra.mxu0 0
  %2385 = vmatprep.subr.bf16.mxu0 0
  %2386 = vmatpush2.bf16.msra.mxu0 0
  %2387 = vmatprep.mubr.bf16.mxu0 0
  %2388 = vmatmul.mubr.bf16.gmra.mxu0 %v2353
  %v2389 = vpop.f32.mrf.mxu0
  %v2390 = vadd.f32 %v1790, %v2389
  %v2391 = vpop.f32.mrf.mxu0
  %v2392 = vpop.f32.mrf.mxu0
  %v2393 = vpop.f32.mrf.mxu0
  %2394 = vdwg.mxu0
  %v2395 = vxor.u32 %v2390, 2147483648
  %v2396 = vmul.f32 %v2395, 1.442695
  %v2397 = vpow.pop %v2396
  %v2398 = vadd.f32 %v2397, 1.0
  %v2399 = vrcp.pop %v2398
  %v2400 = vmul.f32 1.0, %v2399
  %v2401 = vtanh.pop %v2390
  %v2402 = vmul.f32 %v2400, %v2269
  %2404 = vrot.lane.b32.xlu0 %v2401, 64
  %v2405 = vpop.permute.xlu0 %2404
  %v2407 = vmul.f32 %v2400, %v2405
  %2409 = vrot.lane.b32.xlu0 %v2407, 32
  %v2410 = vpop.permute.xlu0 %2409
  %v2412 = vadd.f32 %v2402, %v2410
  %v2413 = vtanh.pop %v2412
  %2415 = vrot.lane.b32.xlu0 %v2413, 64
  %v2416 = vpop.permute.xlu0 %2415
  %v2418 = vmul.f32 %v2400, %v2416
  %v2419 = vpack.c.bf16 %v2418, %v2418
  %2421 = vrot.lane.b32.xlu0 %v2419, 32
  %v2422 = vpop.permute.xlu0 %2421
  %v2424 = vsel %vm231, %v2422, 0
  %2426 = vmatprep.subr.bf16.mxu0 0
  %2427 = vmatpush1.bf16.msra.mxu0 0
  %2428 = vmatprep.subr.bf16.mxu0 0
  %2429 = vmatpush1.bf16.msra.mxu0 0
  %2430 = vmatprep.subr.bf16.mxu0 0
  %2431 = vmatpush1.bf16.msra.mxu0 0
  %2432 = vmatprep.subr.bf16.mxu0 0
  %2433 = vmatpush1.bf16.msra.mxu0 0
  %2434 = vmatprep.subr.bf16.mxu0 0
  %2435 = vmatpush1.bf16.msra.mxu0 0
  %2436 = vmatprep.subr.bf16.mxu0 0
  %2437 = vmatpush1.bf16.msra.mxu0 0
  %2438 = vmatprep.subr.bf16.mxu0 0
  %2439 = vmatpush1.bf16.msra.mxu0 %v2134
  %2440 = vmatprep.subr.bf16.mxu0 0
  %2441 = vmatpush1.bf16.msra.mxu0 %v2133
  %2442 = vmatprep.subr.bf16.mxu0 0
  %2443 = vmatpush2.bf16.msra.mxu0 0
  %2444 = vmatprep.subr.bf16.mxu0 0
  %2445 = vmatpush2.bf16.msra.mxu0 0
  %2446 = vmatprep.subr.bf16.mxu0 0
  %2447 = vmatpush2.bf16.msra.mxu0 0
  %2448 = vmatprep.subr.bf16.mxu0 0
  %2449 = vmatpush2.bf16.msra.mxu0 0
  %2450 = vmatprep.subr.bf16.mxu0 0
  %2451 = vmatpush2.bf16.msra.mxu0 0
  %2452 = vmatprep.subr.bf16.mxu0 0
  %2453 = vmatpush2.bf16.msra.mxu0 0
  %2454 = vmatprep.subr.bf16.mxu0 0
  %2455 = vmatpush2.bf16.msra.mxu0 0
  %2456 = vmatprep.subr.bf16.mxu0 0
  %2457 = vmatpush2.bf16.msra.mxu0 0
  %2458 = vmatprep.mubr.bf16.mxu0 0
  %2459 = vmatmul.mubr.bf16.gmra.mxu0 %v2424
  %v2460 = vpop.f32.mrf.mxu0
  %v2461 = vadd.f32 %v88, %v2460
  %v2462 = vpop.f32.mrf.mxu0
  %v2463 = vpop.f32.mrf.mxu0
  %v2464 = vpop.f32.mrf.mxu0
  %2465 = vdwg.mxu0
  %v2466 = vsel %vm231, %v2461, -inf
  %2467 = vmax.xlane.f32.xlu0 %v2466
  %v2468 = vpop.xlane.xlu0 %2467
  %vm2469 = vcmp.eq.f32.partialorder %v2461, %v2468
  %v2470 = vsel %vm2469, %v2020, 32
  %v2471 = vsel %vm231, %v2470, 2147483647
  %v2472 = vand.u32 %v2471, 65535
  %v2473 = vshra.s32 %v2471, 16
  %v2474 = vcvt.s32.f32 %v2472
  %v2475 = vcvt.s32.f32 %v2473
  %2476 = vmin.xlane.f32.xlu0 %v2475
  %v2477 = vpop.xlane.xlu0 %2476
  %vm2478 = vcmp.eq.f32.partialorder %v2475, %v2477
  %v2479 = vsel %vm2478, %v2474, inf
  %2480 = vmin.xlane.f32.xlu0 %v2479
  %v2481 = vpop.xlane.xlu0 %2480
  %v2482 = vcvt.f32.s32 %v2481
  %v2483 = vcvt.f32.s32 %v2477
  %v2484 = vshll.u32 %v2483, 16
  %v2485 = vadd.s32 %v2484, %v2482
  %vm2486 = vcmp.eq.s32.totalorder %v2020, %v2485
  %v2487 = vsel %vm2486, 1, 0
  %v2488 = vcvt.s32.f32 %v2487
  %2490 = vrot.lane.b32.xlu0 %v2418, 64
  %v2491 = vpop.permute.xlu0 %2490
  %v2493 = vsel %vm231, %v2488, %v2491
  %v2494 = vpack.c.bf16 %v2493, %v2493
  %v2496 = vsel %vm141, %v2494, 0
  %2498 = vmatprep.subr.bf16.mxu0 0
  %2499 = vmatpush1.bf16.msra.mxu0 0
  %2500 = vmatprep.subr.bf16.mxu0 0
  %2501 = vmatpush1.bf16.msra.mxu0 0
  %2502 = vmatprep.subr.bf16.mxu0 0
  %2503 = vmatpush1.bf16.msra.mxu0 0
  %2504 = vmatprep.subr.bf16.mxu0 0
  %2505 = vmatpush1.bf16.msra.mxu0 0
  %2506 = vmatprep.subr.bf16.mxu0 0
  %2507 = vmatpush1.bf16.msra.mxu0 %v2049
  %2508 = vmatprep.subr.bf16.mxu0 0
  %2509 = vmatpush1.bf16.msra.mxu0 %v2048
  %2510 = vmatprep.subr.bf16.mxu0 0
  %2511 = vmatpush1.bf16.msra.mxu0 %v2047
  %2512 = vmatprep.subr.bf16.mxu0 0
  %2513 = vmatpush1.bf16.msra.mxu0 %v2046
  %2514 = vmatprep.subr.bf16.mxu0 0
  %2515 = vmatpush2.bf16.msra.mxu0 0
  %2516 = vmatprep.subr.bf16.mxu0 0
  %2517 = vmatpush2.bf16.msra.mxu0 0
  %2518 = vmatprep.subr.bf16.mxu0 0
  %2519 = vmatpush2.bf16.msra.mxu0 0
  %2520 = vmatprep.subr.bf16.mxu0 0
  %2521 = vmatpush2.bf16.msra.mxu0 0
  %2522 = vmatprep.subr.bf16.mxu0 0
  %2523 = vmatpush2.bf16.msra.mxu0 0
  %2524 = vmatprep.subr.bf16.mxu0 0
  %2525 = vmatpush2.bf16.msra.mxu0 0
  %2526 = vmatprep.subr.bf16.mxu0 0
  %2527 = vmatpush2.bf16.msra.mxu0 0
  %2528 = vmatprep.subr.bf16.mxu0 0
  %2529 = vmatpush2.bf16.msra.mxu0 0
  %2530 = vmatprep.mubr.bf16.mxu0 0
  %2531 = vmatmul.mubr.bf16.gmra.mxu0 %v2496
  %v2532 = vpop.f32.mrf.mxu0
  %v2533 = vadd.f32 %v1902, %v2532
  %v2534 = vpop.f32.mrf.mxu0
  %v2535 = vpop.f32.mrf.mxu0
  %v2536 = vpop.f32.mrf.mxu0
  %2537 = vdwg.mxu0
  %v2538 = vxor.u32 %v2533, 2147483648
  %v2539 = vmul.f32 %v2538, 1.442695
  %v2540 = vpow.pop %v2539
  %v2541 = vadd.f32 %v2540, 1.0
  %v2542 = vrcp.pop %v2541
  %v2543 = vmul.f32 1.0, %v2542
  %v2544 = vtanh.pop %v2533
  %v2545 = vmul.f32 %v2543, %v2412
  %2547 = vrot.lane.b32.xlu0 %v2544, 64
  %v2548 = vpop.permute.xlu0 %2547
  %v2550 = vmul.f32 %v2543, %v2548
  %2552 = vrot.lane.b32.xlu0 %v2550, 32
  %v2553 = vpop.permute.xlu0 %2552
  %v2555 = vadd.f32 %v2545, %v2553
  %v2556 = vtanh.pop %v2555
  %2558 = vrot.lane.b32.xlu0 %v2556, 64
  %v2559 = vpop.permute.xlu0 %2558
  %v2561 = vmul.f32 %v2543, %v2559
  %v2562 = vpack.c.bf16 %v2561, %v2561
  %2564 = vrot.lane.b32.xlu0 %v2562, 32
  %v2565 = vpop.permute.xlu0 %2564
  %v2567 = vsel %vm231, %v2565, 0
  %2569 = vmatprep.subr.bf16.mxu0 0
  %2570 = vmatpush1.bf16.msra.mxu0 0
  %2571 = vmatprep.subr.bf16.mxu0 0
  %2572 = vmatpush1.bf16.msra.mxu0 0
  %2573 = vmatprep.subr.bf16.mxu0 0
  %2574 = vmatpush1.bf16.msra.mxu0 0
  %2575 = vmatprep.subr.bf16.mxu0 0
  %2576 = vmatpush1.bf16.msra.mxu0 0
  %2577 = vmatprep.subr.bf16.mxu0 0
  %2578 = vmatpush1.bf16.msra.mxu0 0
  %2579 = vmatprep.subr.bf16.mxu0 0
  %2580 = vmatpush1.bf16.msra.mxu0 0
  %2581 = vmatprep.subr.bf16.mxu0 0
  %2582 = vmatpush1.bf16.msra.mxu0 %v2134
  %2583 = vmatprep.subr.bf16.mxu0 0
  %2584 = vmatpush1.bf16.msra.mxu0 %v2133
  %2585 = vmatprep.subr.bf16.mxu0 0
  %2586 = vmatpush2.bf16.msra.mxu0 0
  %2587 = vmatprep.subr.bf16.mxu0 0
  %2588 = vmatpush2.bf16.msra.mxu0 0
  %2589 = vmatprep.subr.bf16.mxu0 0
  %2590 = vmatpush2.bf16.msra.mxu0 0
  %2591 = vmatprep.subr.bf16.mxu0 0
  %2592 = vmatpush2.bf16.msra.mxu0 0
  %2593 = vmatprep.subr.bf16.mxu0 0
  %2594 = vmatpush2.bf16.msra.mxu0 0
  %2595 = vmatprep.subr.bf16.mxu0 0
  %2596 = vmatpush2.bf16.msra.mxu0 0
  %2597 = vmatprep.subr.bf16.mxu0 0
  %2598 = vmatpush2.bf16.msra.mxu0 0
  %2599 = vmatprep.subr.bf16.mxu0 0
  %2600 = vmatpush2.bf16.msra.mxu0 0
  %2601 = vmatprep.mubr.bf16.mxu0 0
  %2602 = vmatmul.mubr.bf16.gmra.mxu0 %v2567
  %v2603 = vpop.f32.mrf.mxu0
  %v2604 = vadd.f32 %v88, %v2603
  %v2605 = vpop.f32.mrf.mxu0
  %v2606 = vpop.f32.mrf.mxu0
  %v2607 = vpop.f32.mrf.mxu0
  %2608 = vdwg.mxu0
  %v2609 = vsel %vm231, %v2604, -inf
  %2610 = vmax.xlane.f32.xlu0 %v2609
  %v2611 = vpop.xlane.xlu0 %2610
  %vm2612 = vcmp.eq.f32.partialorder %v2604, %v2611
  %v2613 = vsel %vm2612, %v2020, 32
  %v2614 = vsel %vm231, %v2613, 2147483647
  %v2615 = vand.u32 %v2614, 65535
  %v2616 = vshra.s32 %v2614, 16
  %v2617 = vcvt.s32.f32 %v2615
  %v2618 = vcvt.s32.f32 %v2616
  %2619 = vmin.xlane.f32.xlu0 %v2618
  %v2620 = vpop.xlane.xlu0 %2619
  %vm2621 = vcmp.eq.f32.partialorder %v2618, %v2620
  %v2622 = vsel %vm2621, %v2617, inf
  %2623 = vmin.xlane.f32.xlu0 %v2622
  %v2624 = vpop.xlane.xlu0 %2623
  %v2625 = vcvt.f32.s32 %v2624
  %v2626 = vcvt.f32.s32 %v2620
  %v2627 = vshll.u32 %v2626, 16
  %v2628 = vadd.s32 %v2627, %v2625
  %vm2629 = vcmp.eq.s32.totalorder %v2020, %v2628
  %v2630 = vsel %vm2629, 1, 0
  %v2631 = vcvt.s32.f32 %v2630
  %2633 = vrot.lane.b32.xlu0 %v2561, 64
  %v2634 = vpop.permute.xlu0 %2633
  %v2636 = vsel %vm231, %v2631, %v2634
  %v2637 = vpack.c.bf16 %v2636, %v2636
  %v2639 = vsel %vm141, %v2637, 0
  %2641 = vmatprep.subr.bf16.mxu0 0
  %2642 = vmatpush1.bf16.msra.mxu0 0
  %2643 = vmatprep.subr.bf16.mxu0 0
  %2644 = vmatpush1.bf16.msra.mxu0 0
  %2645 = vmatprep.subr.bf16.mxu0 0
  %2646 = vmatpush1.bf16.msra.mxu0 0
  %2647 = vmatprep.subr.bf16.mxu0 0
  %2648 = vmatpush1.bf16.msra.mxu0 0
  %2649 = vmatprep.subr.bf16.mxu0 0
  %2650 = vmatpush1.bf16.msra.mxu0 %v2049
  %2651 = vmatprep.subr.bf16.mxu0 0
  %2652 = vmatpush1.bf16.msra.mxu0 %v2048
  %2653 = vmatprep.subr.bf16.mxu0 0
  %2654 = vmatpush1.bf16.msra.mxu0 %v2047
  %2655 = vmatprep.subr.bf16.mxu0 0
  %2656 = vmatpush1.bf16.msra.mxu0 %v2046
  %2657 = vmatprep.subr.bf16.mxu0 0
  %2658 = vmatpush2.bf16.msra.mxu0 0
  %2659 = vmatprep.subr.bf16.mxu0 0
  %2660 = vmatpush2.bf16.msra.mxu0 0
  %2661 = vmatprep.subr.bf16.mxu0 0
  %2662 = vmatpush2.bf16.msra.mxu0 0
  %2663 = vmatprep.subr.bf16.mxu0 0
  %2664 = vmatpush2.bf16.msra.mxu0 0
  %2665 = vmatprep.subr.bf16.mxu0 0
  %2666 = vmatpush2.bf16.msra.mxu0 0
  %2667 = vmatprep.subr.bf16.mxu0 0
  %2668 = vmatpush2.bf16.msra.mxu0 0
  %2669 = vmatprep.subr.bf16.mxu0 0
  %2670 = vmatpush2.bf16.msra.mxu0 0
  %2671 = vmatprep.subr.bf16.mxu0 0
  %2672 = vmatpush2.bf16.msra.mxu0 0
  %2673 = vmatprep.mubr.bf16.mxu0 0
  %2674 = vmatmul.mubr.bf16.gmra.mxu0 %v2639
  %v2675 = vpop.f32.mrf.mxu0
  %v2676 = vadd.f32 %v2014, %v2675
  %v2677 = vpop.f32.mrf.mxu0
  %v2678 = vpop.f32.mrf.mxu0
  %v2679 = vpop.f32.mrf.mxu0
  %2680 = vdwg.mxu0
  %v2681 = vxor.u32 %v2676, 2147483648
  %v2682 = vmul.f32 %v2681, 1.442695
  %v2683 = vpow.pop %v2682
  %v2684 = vadd.f32 %v2683, 1.0
  %v2685 = vrcp.pop %v2684
  %v2686 = vmul.f32 1.0, %v2685
  %v2687 = vtanh.pop %v2676
  %v2688 = vmul.f32 %v2686, %v2555
  %2690 = vrot.lane.b32.xlu0 %v2687, 64
  %v2691 = vpop.permute.xlu0 %2690
  %v2693 = vmul.f32 %v2686, %v2691
  %2695 = vrot.lane.b32.xlu0 %v2693, 32
  %v2696 = vpop.permute.xlu0 %2695
  %v2698 = vadd.f32 %v2688, %v2696
  %v2699 = vtanh.pop %v2698
  %2701 = vrot.lane.b32.xlu0 %v2699, 64
  %v2702 = vpop.permute.xlu0 %2701
  %v2704 = vmul.f32 %v2686, %v2702
  %v2705 = vpack.c.bf16 %v2704, %v2704
  %2707 = vrot.lane.b32.xlu0 %v2705, 32
  %v2708 = vpop.permute.xlu0 %2707
  %v2710 = vsel %vm231, %v2708, 0
  %2712 = vmatprep.subr.bf16.mxu0 0
  %2713 = vmatpush1.bf16.msra.mxu0 0
  %2714 = vmatprep.subr.bf16.mxu0 0
  %2715 = vmatpush1.bf16.msra.mxu0 0
  %2716 = vmatprep.subr.bf16.mxu0 0
  %2717 = vmatpush1.bf16.msra.mxu0 0
  %2718 = vmatprep.subr.bf16.mxu0 0
  %2719 = vmatpush1.bf16.msra.mxu0 0
  %2720 = vmatprep.subr.bf16.mxu0 0
  %2721 = vmatpush1.bf16.msra.mxu0 0
  %2722 = vmatprep.subr.bf16.mxu0 0
  %2723 = vmatpush1.bf16.msra.mxu0 0
  %2724 = vmatprep.subr.bf16.mxu0 0
  %2725 = vmatpush1.bf16.msra.mxu0 %v2134
  %2726 = vmatprep.subr.bf16.mxu0 0
  %2727 = vmatpush1.bf16.msra.mxu0 %v2133
  %2728 = vmatprep.subr.bf16.mxu0 0
  %2729 = vmatpush2.bf16.msra.mxu0 0
  %2730 = vmatprep.subr.bf16.mxu0 0
  %2731 = vmatpush2.bf16.msra.mxu0 0
  %2732 = vmatprep.subr.bf16.mxu0 0
  %2733 = vmatpush2.bf16.msra.mxu0 0
  %2734 = vmatprep.subr.bf16.mxu0 0
  %2735 = vmatpush2.bf16.msra.mxu0 0
  %2736 = vmatprep.subr.bf16.mxu0 0
  %2737 = vmatpush2.bf16.msra.mxu0 0
  %2738 = vmatprep.subr.bf16.mxu0 0
  %2739 = vmatpush2.bf16.msra.mxu0 0
  %2740 = vmatprep.subr.bf16.mxu0 0
  %2741 = vmatpush2.bf16.msra.mxu0 0
  %2742 = vmatprep.subr.bf16.mxu0 0
  %2743 = vmatpush2.bf16.msra.mxu0 0
  %2744 = vmatprep.mubr.bf16.mxu0 0
  %2745 = vmatmul.mubr.bf16.gmra.mxu0 %v2710
  %v2746 = vpop.f32.mrf.mxu0
  %v2747 = vadd.f32 %v88, %v2746
  %v2748 = vpop.f32.mrf.mxu0
  %v2749 = vpop.f32.mrf.mxu0
  %v2750 = vpop.f32.mrf.mxu0
  %2751 = vdwg.mxu0
  %v2752 = vsel %vm231, %v2747, -inf
  %2753 = vmax.xlane.f32.xlu0 %v2752
  %v2754 = vpop.xlane.xlu0 %2753
  %vm2755 = vcmp.eq.f32.partialorder %v2747, %v2754
  %v2756 = vsel %vm2755, %v2020, 32
  %v2757 = vsel %vm231, %v2756, 2147483647
  %v2758 = vand.u32 %v2757, 65535
  %v2759 = vshra.s32 %v2757, 16
  %v2760 = vcvt.s32.f32 %v2758
  %v2761 = vcvt.s32.f32 %v2759
  %2762 = vmin.xlane.f32.xlu0 %v2761
  %v2763 = vpop.xlane.xlu0 %2762
  %vm2764 = vcmp.eq.f32.partialorder %v2761, %v2763
  %v2765 = vsel %vm2764, %v2760, inf
  %2766 = vmin.xlane.f32.xlu0 %v2765
  %v2767 = vpop.xlane.xlu0 %2766
  %v2768 = vcvt.f32.s32 %v2767
  %v2769 = vcvt.f32.s32 %v2763
  %v2770 = vshll.u32 %v2769, 16
  %v2771 = vadd.s32 %v2770, %v2768
  %2772 = vst.msk [vmem:[%s12] sm:$0xff] %vm231, %v2175
  %2773 = vst.msk [vmem:[%s12 + $0x8] sm:$0xff] %vm231, %v2318
  %2774 = vst.msk [vmem:[%s12 + $0x10] sm:$0xff] %vm231, %v2461
  %2775 = vst.msk [vmem:[%s12 + $0x18] sm:$0xff] %vm231, %v2604
  %2776 = vst.msk [vmem:[%s12 + $0x20] sm:$0xff] %vm231, %v2747
  %v2777 = vlaneseq
  %v2778 = vshrl.u32 %v2777, 7
  %v2779 = vsub.s32 %v2020, %v2778
  %v2780 = vrot.slane %v2199, %v2779
  %v2781 = vlaneseq
  %v2782 = vshrl.u32 %v2781, 7
  %v2783 = vsub.s32 %v2020, %v2782
  %v2784 = vrot.slane %v2342, %v2783
  %v2785 = vlaneseq
  %v2786 = vshrl.u32 %v2785, 7
  %v2787 = vsub.s32 %v2020, %v2786
  %v2788 = vrot.slane %v2485, %v2787
  %v2789 = vlaneseq
  %v2790 = vshrl.u32 %v2789, 7
  %v2791 = vsub.s32 %v2020, %v2790
  %v2792 = vrot.slane %v2628, %v2791
  %v2793 = vlaneseq
  %v2794 = vshrl.u32 %v2793, 7
  %v2795 = vsub.s32 %v2020, %v2794
  %v2796 = vrot.slane %v2771, %v2795
  %vm2797 = vcmask 1040384
  %v2798 = vsel %vm2797, %v2780, %v2784
  %vm2799 = vcmask 1041408
  %v2800 = vsel %vm2799, %v2798, %v2788
  %vm2801 = vcmask 1042432
  %v2802 = vsel %vm2801, %v2800, %v2792
  %vm2803 = vcmask 1043456
  %v2804 = vsel %vm2803, %v2802, %v2796
  %vm2805 = vcmask 61440
  %2806 = vst.msk [vmem:[%s11] sm:$0x1f] %vm2805, %v2804
  // Predicated region
  $region46: #{seq2seq_forward.1} parent=0 // pred_check
    _
  $region47: #{seq2seq_forward.1} parent=0 // pred_check_branch
    %2808 = sbr.rel (0) target = $region49
  $region48: #{seq2seq_forward.1} parent=0 // pred_region
    _
  $region49: #{seq2seq_forward.1} parent=0 // pred_fallthru
    _
  // Predicated region
  $region50: #{seq2seq_forward.1} parent=0 // pred_check
    _
  $region51: #{seq2seq_forward.1} parent=0 // pred_check_branch
    %2810 = sbr.rel (0) target = $region53
  $region52: #{seq2seq_forward.1} parent=0 // pred_region
    _
  $region53: #{seq2seq_forward.1} parent=0 // pred_fallthru
    _
  // Predicated region
  $region54: #{seq2seq_forward.1} parent=0 // pred_check
    _
  $region55: #{seq2seq_forward.1} parent=0 // pred_check_branch
    %2812 = sbr.rel (0) target = $region57
  $region56: #{seq2seq_forward.1} parent=0 // pred_region
    _
  $region57: #{seq2seq_forward.1} parent=0 // pred_fallthru
    _
  // Predicated region
  $region58: #{seq2seq_forward.1} parent=0 // pred_check
    _
  $region59: #{seq2seq_forward.1} parent=0 // pred_check_branch
    %2814 = sbr.rel (0) target = $region61
  $region60: #{seq2seq_forward.1} parent=0 // pred_region
    _
  $region61: #{seq2seq_forward.1} parent=0 // pred_fallthru
    _

</llo_original>
